<compile_context>
chip_gen: v7x
topology: tpu7x:2x2x1
jax: 0.10.0
libtpu: 0.0.40
codegen_flags: <defaults>
</compile_context>

<pallas_src>
import jax
import jax.numpy as jnp
from jax.experimental import pallas as pl
from jax.experimental.pallas import tpu as pltpu


def _round_up(x, m):
    return (x + m - 1) // m * m


# ----------------------------------------------------------------------------
# Pallas kernel 1: conv-as-matmul, lane-dense orientation.
#   out(OC, TM) = relu( W(OC, K) @ X(K, TM) + b(OC, 1) )
# Grid iterates over M tiles; W / b blocks keep the same index (no re-DMA).
# ----------------------------------------------------------------------------
def _conv_mm_kernel(w_ref, x_ref, b_ref, o_ref):
    acc = jnp.dot(w_ref[...], x_ref[...], preferred_element_type=jnp.float32)
    acc = jnp.maximum(acc + b_ref[...], 0.0)          # bias + ReLU in f32
    o_ref[...] = acc.astype(o_ref.dtype)


def conv_matmul(w2d, x2d, bias, *, tile_m=256):
    """w2d: (OC, Kp) bf16, x2d: (Kp, Mp) bf16, bias: (OC, 1) f32 -> (OC, Mp) bf16."""
    oc, kp = w2d.shape
    kp2, mp = x2d.shape
    assert kp == kp2 and mp % tile_m == 0 and kp % 128 == 0
    return pl.pallas_call(
        _conv_mm_kernel,
        out_shape=jax.ShapeDtypeStruct((oc, mp), jnp.bfloat16),
        grid=(mp // tile_m,),
        in_specs=[
            pl.BlockSpec((oc, kp), lambda m: (0, 0)),
            pl.BlockSpec((kp, tile_m), lambda m: (0, m)),
            pl.BlockSpec((oc, 1), lambda m: (0, 0)),
        ],
        out_specs=pl.BlockSpec((oc, tile_m), lambda m: (0, m)),
        compiler_params=pltpu.CompilerParams(
            dimension_semantics=("parallel",),
            vmem_limit_bytes=32 * 1024 * 1024,
        ),
    )(w2d, x2d, bias)


# ----------------------------------------------------------------------------
# Pallas kernel 2: fused fc1 + fc2.
#   out = relu(x @ w4 + b4) @ w5 + b5
# Grid reduces over fc1's K axis with an f32 VMEM accumulator; fc2 is applied
# as an epilogue on the last step (output block resident across the grid).
# ----------------------------------------------------------------------------
def _fc_fused_kernel(x_ref, w4_ref, b4_ref, w5_ref, b5_ref, o_ref, acc_ref):
    k = pl.program_id(0)

    @pl.when(k == 0)
    def _():
        acc_ref[...] = jnp.zeros_like(acc_ref)

    acc_ref[...] += jnp.dot(x_ref[...], w4_ref[...],
                            preferred_element_type=jnp.float32)

    @pl.when(k == pl.num_programs(0) - 1)
    def _():
        h = jnp.maximum(acc_ref[...] + b4_ref[...], 0.0)          # (B, H) f32
        out = jnp.dot(h.astype(jnp.bfloat16), w5_ref[...],
                      preferred_element_type=jnp.float32) + b5_ref[...]
        o_ref[...] = out.astype(o_ref.dtype)


def fc_fused(x, w4, b4, w5, b5, *, tile_k=640):
    """x:(B,Kp) bf16, w4:(Kp,H) bf16, b4:(1,H) f32, w5:(H,Np) bf16, b5:(1,Np) f32
    -> (B, Np) f32."""
    bsz, kp = x.shape
    kp2, hidden = w4.shape
    h2, np_ = w5.shape
    assert kp == kp2 and hidden == h2
    assert kp % tile_k == 0 and tile_k % 128 == 0 and hidden % 128 == 0 and np_ % 128 == 0
    return pl.pallas_call(
        _fc_fused_kernel,
        out_shape=jax.ShapeDtypeStruct((bsz, np_), jnp.float32),
        grid=(kp // tile_k,),
        in_specs=[
            pl.BlockSpec((bsz, tile_k), lambda k: (0, k)),
            pl.BlockSpec((tile_k, hidden), lambda k: (k, 0)),
            pl.BlockSpec((1, hidden), lambda k: (0, 0)),
            pl.BlockSpec((hidden, np_), lambda k: (0, 0)),
            pl.BlockSpec((1, np_), lambda k: (0, 0)),
        ],
        out_specs=pl.BlockSpec((bsz, np_), lambda k: (0, 0)),
        scratch_shapes=[pltpu.VMEM((bsz, hidden), jnp.float32)],
        compiler_params=pltpu.CompilerParams(
            dimension_semantics=("arbitrary",),
            vmem_limit_bytes=32 * 1024 * 1024,
        ),
    )(x, w4, b4, w5, b5)


# ----------------------------------------------------------------------------
# XLA glue: im2col in (K, M) orientation on channels-leading activations.
# Only strided slices + concat on leading dims (no relayout transposes).
# ----------------------------------------------------------------------------
def _im2col_cbhw(a, kh, kw, stride, *, tile_m=256):
    """a: (C, B, H, W) -> patches (Kp, Mp) with K = C*KH*KW (c-major, then kh, kw),
    M = B*OH*OW; zero-padded to Kp % 128 == 0, Mp % tile_m == 0."""
    c, b, h, w = a.shape
    oh = (h - kh) // stride + 1
    ow = (w - kw) // stride + 1
    taps = []
    for i in range(kh):
        for j in range(kw):
            taps.append(a[:, :, i:i + stride * oh:stride, j:j + stride * ow:stride])
    p = jnp.stack(taps, axis=1)                          # (C, KH*KW, B, OH, OW)
    p = p.reshape(c * kh * kw, b * oh * ow)              # row-major merge (free)
    k_dim, m_dim = p.shape
    kp = _round_up(k_dim, 128)
    mp = _round_up(m_dim, tile_m)
    p = jnp.pad(p, ((0, kp - k_dim), (0, mp - m_dim)))
    return p, oh, ow


def conv2d_cbhw(a, weight, bias, stride, *, tile_m=256):
    """Conv2d (valid padding, PyTorch semantics) on a channels-leading activation.
    a: (C_in, B, H, W) bf16, weight: (OC, IC, KH, KW) f32, bias: (OC,) f32
    -> (OC, B, OH, OW) bf16."""
    c, b, _, _ = a.shape
    oc, ic, kh, kw = weight.shape
    assert ic == c
    x2d, oh, ow = _im2col_cbhw(a, kh, kw, stride, tile_m=tile_m)
    k_dim = ic * kh * kw
    kp = x2d.shape[0]
    w2d = weight.reshape(oc, k_dim).astype(jnp.bfloat16)
    w2d = jnp.pad(w2d, ((0, 0), (0, kp - k_dim)))
    out = conv_matmul(w2d, x2d, bias.reshape(oc, 1).astype(jnp.float32),
                      tile_m=tile_m)                     # (OC, Mp) bf16
    return out[:, :b * oh * ow].reshape(oc, b, oh, ow)


# ----------------------------------------------------------------------------
# Parameter init (deterministic, PyTorch-like U(-1/sqrt(fan_in), 1/sqrt(fan_in)))
# ----------------------------------------------------------------------------
def init_params(key, in_channels, num_actions):
    def uniform(k, shape, fan_in):
        bound = 1.0 / jnp.sqrt(jnp.float32(fan_in))
        return jax.random.uniform(k, shape, jnp.float32, -bound, bound)

    ks = jax.random.split(key, 10)
    p = {}
    p["w1"] = uniform(ks[0], (32, in_channels, 8, 8), in_channels * 8 * 8)
    p["b1"] = uniform(ks[1], (32,), in_channels * 8 * 8)
    p["w2"] = uniform(ks[2], (64, 32, 4, 4), 32 * 4 * 4)
    p["b2"] = uniform(ks[3], (64,), 32 * 4 * 4)
    p["w3"] = uniform(ks[4], (64, 64, 3, 3), 64 * 3 * 3)
    p["b3"] = uniform(ks[5], (64,), 64 * 3 * 3)
    p["w4"] = uniform(ks[6], (64 * 7 * 7, 512), 64 * 7 * 7)
    p["b4"] = uniform(ks[7], (512,), 64 * 7 * 7)
    p["w5"] = uniform(ks[8], (512, num_actions), 512)
    p["b5"] = uniform(ks[9], (num_actions,), 512)
    return p


# ----------------------------------------------------------------------------
# Forward pass (mirrors DQNetwork.forward)
# ----------------------------------------------------------------------------
def dq_network_forward(params, x):
    """x: (B, C, 84, 84) f32 NCHW (PyTorch layout) -> (B, num_actions) f32."""
    bsz = x.shape[0]
    num_actions = params["w5"].shape[1]

    # channels-leading bf16 activations through the conv trunk
    a = x.transpose(1, 0, 2, 3).astype(jnp.bfloat16)             # (C, B, 84, 84)
    a = conv2d_cbhw(a, params["w1"], params["b1"], stride=4)     # (32, B, 20, 20)
    a = conv2d_cbhw(a, params["w2"], params["b2"], stride=2)     # (64, B,  9,  9)
    a = conv2d_cbhw(a, params["w3"], params["b3"], stride=1)     # (64, B,  7,  7)

    # nn.Flatten over NCHW: single cheap permute restores PyTorch C-order (c, h, w)
    feat = a.transpose(1, 0, 2, 3).reshape(bsz, -1)              # (B, 3136) bf16
    k_dim = feat.shape[1]
    tile_k = 640
    kp = _round_up(k_dim, tile_k)
    feat = jnp.pad(feat, ((0, 0), (0, kp - k_dim)))

    npad = _round_up(num_actions, 128)
    w4 = jnp.pad(params["w4"], ((0, kp - k_dim), (0, 0))).astype(jnp.bfloat16)
    b4 = params["b4"].reshape(1, -1).astype(jnp.float32)
    w5 = jnp.pad(params["w5"], ((0, 0), (0, npad - num_actions))).astype(jnp.bfloat16)
    b5 = jnp.pad(params["b5"], (0, npad - num_actions)).reshape(1, npad).astype(jnp.float32)

    q = fc_fused(feat, w4, b4, w5, b5, tile_k=tile_k)            # (B, npad) f32
    return q[:, :num_actions]


if __name__ == "__main__":
    key = jax.random.PRNGKey(0)
    k_x, k_p = jax.random.split(key)

    batch, in_channels, num_actions = 2, 4, 6
    # 84x84 is forced by the module's hard-coded 64*7*7 fc feature count.
    x = jax.random.normal(k_x, (batch, in_channels, 84, 84), dtype=jnp.float32)
    params = init_params(k_p, in_channels, num_actions)

    forward = jax.jit(dq_network_forward)
    q_values = forward(params, x)
    q_values = jax.block_until_ready(q_values)

    assert q_values.shape == (batch, num_actions), q_values.shape
    assert q_values.dtype == jnp.float32
    print("KERNEL_OK")
</pallas_src>

<mosaic_0001>
module attributes {stable_mosaic.version = 11 : i64} {
  func.func @_conv_mm_kernel(%arg0: i32, %arg1: memref<32x256xbf16, #tpu.memory_space<vmem>>, %arg2: memref<256x256xbf16, #tpu.memory_space<vmem>>, %arg3: memref<32x1xf32, #tpu.memory_space<vmem>>, %arg4: memref<32x256xbf16, #tpu.memory_space<vmem>>) attributes {dimension_semantics = [#tpu.dimension_semantics<parallel>], iteration_bounds = array<i64: 4>, scalar_prefetch = 0 : i64, scratch_operands = 0 : i64, tpu.core_type = #tpu.core_type<tc>, window_params = [{pipeline_mode = #tpu.pipeline_mode<synchronous>, transform_indices = @transform_0, window_bounds = array<i64: 32, 256>}, {transform_indices = @transform_1, window_bounds = array<i64: 256, 256>}, {pipeline_mode = #tpu.pipeline_mode<synchronous>, transform_indices = @transform_2, window_bounds = array<i64: 32, 1>}, {transform_indices = @transform_3, window_bounds = array<i64: 32, 256>}]} {
    %c0 = arith.constant 0 : index
    %c0_0 = arith.constant 0 : index
    %0 = vector.load %arg1[%c0, %c0_0] : memref<32x256xbf16, #tpu.memory_space<vmem>>, vector<32x256xbf16>
    %c0_1 = arith.constant 0 : index
    %c0_2 = arith.constant 0 : index
    %1 = vector.load %arg2[%c0_1, %c0_2] : memref<256x256xbf16, #tpu.memory_space<vmem>>, vector<256x256xbf16>
    %cst = arith.constant dense<0.000000e+00> : vector<32x256xf32>
    %2 = tpu.matmul %0, %1, %cst {dimension_numbers = #tpu.dot_dimension_numbers<[1], [0], [0], [1], [0, 0, 1, 1], [], []>} : vector<32x256xbf16>, vector<256x256xbf16>, vector<32x256xf32> -> vector<32x256xf32>
    %c0_3 = arith.constant 0 : index
    %c0_4 = arith.constant 0 : index
    %3 = vector.load %arg3[%c0_3, %c0_4] : memref<32x1xf32, #tpu.memory_space<vmem>>, vector<32x1xf32>
    %4 = vector.broadcast %3 : vector<32x1xf32> to vector<32x256xf32>
    %5 = arith.addf %2, %4 : vector<32x256xf32>
    %cst_5 = arith.constant 0.000000e+00 : f32
    %6 = vector.broadcast %cst_5 : f32 to vector<32x256xf32>
    %7 = arith.maximumf %5, %6 : vector<32x256xf32>
    %8 = arith.truncf %7 : vector<32x256xf32> to vector<32x256xbf16>
    %c0_6 = arith.constant 0 : index
    %c0_7 = arith.constant 0 : index
    %9 = vector.load %arg4[%c0_6, %c0_7] : memref<32x256xbf16, #tpu.memory_space<vmem>>, vector<32x256xbf16>
    tpu.vector_store %arg4[%c0_6, %c0_7], %8 {strides = array<i32>} : memref<32x256xbf16, #tpu.memory_space<vmem>>, vector<32x256xbf16>,
    return
  }
  func.func @transform_0(%arg0: i32) -> (i32, i32) {
    %c0_i32 = arith.constant 0 : i32
    %c0_i32_0 = arith.constant 0 : i32
    %c0_i32_1 = arith.constant 0 : i32
    return %c0_i32, %c0_i32_0 : i32, i32
  }
  func.func @transform_1(%arg0: i32) -> (i32, i32) {
    %c0_i32 = arith.constant 0 : i32
    %c0_i32_0 = arith.constant 0 : i32
    return %c0_i32, %arg0 : i32, i32
  }
  func.func @transform_2(%arg0: i32) -> (i32, i32) {
    %c0_i32 = arith.constant 0 : i32
    %c0_i32_0 = arith.constant 0 : i32
    %c0_i32_1 = arith.constant 0 : i32
    return %c0_i32, %c0_i32_0 : i32, i32
  }
  func.func @transform_3(%arg0: i32) -> (i32, i32) {
    %c0_i32 = arith.constant 0 : i32
    %c0_i32_0 = arith.constant 0 : i32
    return %c0_i32, %arg0 : i32, i32
  }
}

module attributes {stable_mosaic.version = 11 : i64} {
  func.func @_conv_mm_kernel(%arg0: i32, %arg1: memref<64x512xbf16, #tpu.memory_space<vmem>>, %arg2: memref<512x256xbf16, #tpu.memory_space<vmem>>, %arg3: memref<64x1xf32, #tpu.memory_space<vmem>>, %arg4: memref<64x256xbf16, #tpu.memory_space<vmem>>) attributes {dimension_semantics = [#tpu.dimension_semantics<parallel>], iteration_bounds = array<i64: 1>, scalar_prefetch = 0 : i64, scratch_operands = 0 : i64, tpu.core_type = #tpu.core_type<tc>, window_params = [{pipeline_mode = #tpu.pipeline_mode<synchronous>, transform_indices = @transform_0, window_bounds = array<i64: 64, 512>}, {transform_indices = @transform_1, window_bounds = array<i64: 512, 256>}, {pipeline_mode = #tpu.pipeline_mode<synchronous>, transform_indices = @transform_2, window_bounds = array<i64: 64, 1>}, {transform_indices = @transform_3, window_bounds = array<i64: 64, 256>}]} {
    %c0 = arith.constant 0 : index
    %c0_0 = arith.constant 0 : index
    %0 = vector.load %arg1[%c0, %c0_0] : memref<64x512xbf16, #tpu.memory_space<vmem>>, vector<64x512xbf16>
    %c0_1 = arith.constant 0 : index
    %c0_2 = arith.constant 0 : index
    %1 = vector.load %arg2[%c0_1, %c0_2] : memref<512x256xbf16, #tpu.memory_space<vmem>>, vector<512x256xbf16>
    %cst = arith.constant dense<0.000000e+00> : vector<64x256xf32>
    %2 = tpu.matmul %0, %1, %cst {dimension_numbers = #tpu.dot_dimension_numbers<[1], [0], [0], [1], [0, 0, 1, 1], [], []>} : vector<64x512xbf16>, vector<512x256xbf16>, vector<64x256xf32> -> vector<64x256xf32>
    %c0_3 = arith.constant 0 : index
    %c0_4 = arith.constant 0 : index
    %3 = vector.load %arg3[%c0_3, %c0_4] : memref<64x1xf32, #tpu.memory_space<vmem>>, vector<64x1xf32>
    %4 = vector.broadcast %3 : vector<64x1xf32> to vector<64x256xf32>
    %5 = arith.addf %2, %4 : vector<64x256xf32>
    %cst_5 = arith.constant 0.000000e+00 : f32
    %6 = vector.broadcast %cst_5 : f32 to vector<64x256xf32>
    %7 = arith.maximumf %5, %6 : vector<64x256xf32>
    %8 = arith.truncf %7 : vector<64x256xf32> to vector<64x256xbf16>
    %c0_6 = arith.constant 0 : index
    %c0_7 = arith.constant 0 : index
    %9 = vector.load %arg4[%c0_6, %c0_7] : memref<64x256xbf16, #tpu.memory_space<vmem>>, vector<64x256xbf16>
    tpu.vector_store %arg4[%c0_6, %c0_7], %8 {strides = array<i32>} : memref<64x256xbf16, #tpu.memory_space<vmem>>, vector<64x256xbf16>,
    return
  }
  func.func @transform_0(%arg0: i32) -> (i32, i32) {
    %c0_i32 = arith.constant 0 : i32
    %c0_i32_0 = arith.constant 0 : i32
    %c0_i32_1 = arith.constant 0 : i32
    return %c0_i32, %c0_i32_0 : i32, i32
  }
  func.func @transform_1(%arg0: i32) -> (i32, i32) {
    %c0_i32 = arith.constant 0 : i32
    %c0_i32_0 = arith.constant 0 : i32
    return %c0_i32, %arg0 : i32, i32
  }
  func.func @transform_2(%arg0: i32) -> (i32, i32) {
    %c0_i32 = arith.constant 0 : i32
    %c0_i32_0 = arith.constant 0 : i32
    %c0_i32_1 = arith.constant 0 : i32
    return %c0_i32, %c0_i32_0 : i32, i32
  }
  func.func @transform_3(%arg0: i32) -> (i32, i32) {
    %c0_i32 = arith.constant 0 : i32
    %c0_i32_0 = arith.constant 0 : i32
    return %c0_i32, %arg0 : i32, i32
  }
}

module attributes {stable_mosaic.version = 11 : i64} {
  func.func @_conv_mm_kernel(%arg0: i32, %arg1: memref<64x640xbf16, #tpu.memory_space<vmem>>, %arg2: memref<640x256xbf16, #tpu.memory_space<vmem>>, %arg3: memref<64x1xf32, #tpu.memory_space<vmem>>, %arg4: memref<64x256xbf16, #tpu.memory_space<vmem>>) attributes {dimension_semantics = [#tpu.dimension_semantics<parallel>], iteration_bounds = array<i64: 1>, scalar_prefetch = 0 : i64, scratch_operands = 0 : i64, tpu.core_type = #tpu.core_type<tc>, window_params = [{pipeline_mode = #tpu.pipeline_mode<synchronous>, transform_indices = @transform_0, window_bounds = array<i64: 64, 640>}, {transform_indices = @transform_1, window_bounds = array<i64: 640, 256>}, {pipeline_mode = #tpu.pipeline_mode<synchronous>, transform_indices = @transform_2, window_bounds = array<i64: 64, 1>}, {transform_indices = @transform_3, window_bounds = array<i64: 64, 256>}]} {
    %c0 = arith.constant 0 : index
    %c0_0 = arith.constant 0 : index
    %0 = vector.load %arg1[%c0, %c0_0] : memref<64x640xbf16, #tpu.memory_space<vmem>>, vector<64x640xbf16>
    %c0_1 = arith.constant 0 : index
    %c0_2 = arith.constant 0 : index
    %1 = vector.load %arg2[%c0_1, %c0_2] : memref<640x256xbf16, #tpu.memory_space<vmem>>, vector<640x256xbf16>
    %cst = arith.constant dense<0.000000e+00> : vector<64x256xf32>
    %2 = tpu.matmul %0, %1, %cst {dimension_numbers = #tpu.dot_dimension_numbers<[1], [0], [0], [1], [0, 0, 1, 1], [], []>} : vector<64x640xbf16>, vector<640x256xbf16>, vector<64x256xf32> -> vector<64x256xf32>
    %c0_3 = arith.constant 0 : index
    %c0_4 = arith.constant 0 : index
    %3 = vector.load %arg3[%c0_3, %c0_4] : memref<64x1xf32, #tpu.memory_space<vmem>>, vector<64x1xf32>
    %4 = vector.broadcast %3 : vector<64x1xf32> to vector<64x256xf32>
    %5 = arith.addf %2, %4 : vector<64x256xf32>
    %cst_5 = arith.constant 0.000000e+00 : f32
    %6 = vector.broadcast %cst_5 : f32 to vector<64x256xf32>
    %7 = arith.maximumf %5, %6 : vector<64x256xf32>
    %8 = arith.truncf %7 : vector<64x256xf32> to vector<64x256xbf16>
    %c0_6 = arith.constant 0 : index
    %c0_7 = arith.constant 0 : index
    %9 = vector.load %arg4[%c0_6, %c0_7] : memref<64x256xbf16, #tpu.memory_space<vmem>>, vector<64x256xbf16>
    tpu.vector_store %arg4[%c0_6, %c0_7], %8 {strides = array<i32>} : memref<64x256xbf16, #tpu.memory_space<vmem>>, vector<64x256xbf16>,
    return
  }
  func.func @transform_0(%arg0: i32) -> (i32, i32) {
    %c0_i32 = arith.constant 0 : i32
    %c0_i32_0 = arith.constant 0 : i32
    %c0_i32_1 = arith.constant 0 : i32
    return %c0_i32, %c0_i32_0 : i32, i32
  }
  func.func @transform_1(%arg0: i32) -> (i32, i32) {
    %c0_i32 = arith.constant 0 : i32
    %c0_i32_0 = arith.constant 0 : i32
    return %c0_i32, %arg0 : i32, i32
  }
  func.func @transform_2(%arg0: i32) -> (i32, i32) {
    %c0_i32 = arith.constant 0 : i32
    %c0_i32_0 = arith.constant 0 : i32
    %c0_i32_1 = arith.constant 0 : i32
    return %c0_i32, %c0_i32_0 : i32, i32
  }
  func.func @transform_3(%arg0: i32) -> (i32, i32) {
    %c0_i32 = arith.constant 0 : i32
    %c0_i32_0 = arith.constant 0 : i32
    return %c0_i32, %arg0 : i32, i32
  }
}

module attributes {stable_mosaic.version = 11 : i64} {
  func.func @_fc_fused_kernel(%arg0: i32, %arg1: memref<2x640xbf16, #tpu.memory_space<vmem>>, %arg2: memref<640x512xbf16, #tpu.memory_space<vmem>>, %arg3: memref<1x512xf32, #tpu.memory_space<vmem>>, %arg4: memref<512x128xbf16, #tpu.memory_space<vmem>>, %arg5: memref<1x128xf32, #tpu.memory_space<vmem>>, %arg6: memref<2x128xf32, #tpu.memory_space<vmem>>, %arg7: memref<2x512xf32, #tpu.memory_space<vmem>>) attributes {dimension_semantics = [#tpu.dimension_semantics<arbitrary>], iteration_bounds = array<i64: 5>, scalar_prefetch = 0 : i64, scratch_operands = 1 : i64, tpu.core_type = #tpu.core_type<tc>, window_params = [{transform_indices = @transform_0, window_bounds = array<i64: 2, 640>}, {transform_indices = @transform_1, window_bounds = array<i64: 640, 512>}, {pipeline_mode = #tpu.pipeline_mode<synchronous>, transform_indices = @transform_2, window_bounds = array<i64: 1, 512>}, {pipeline_mode = #tpu.pipeline_mode<synchronous>, transform_indices = @transform_3, window_bounds = array<i64: 512, 128>}, {pipeline_mode = #tpu.pipeline_mode<synchronous>, transform_indices = @transform_4, window_bounds = array<i64: 1, 128>}, {pipeline_mode = #tpu.pipeline_mode<synchronous>, transform_indices = @transform_5, window_bounds = array<i64: 2, 128>}]} {
    %c0_i32 = arith.constant 0 : i32
    %0 = arith.cmpi eq, %arg0, %c0_i32 : i32
    %1 = arith.extui %0 : i1 to i32
    %c0_i32_0 = arith.constant 0 : i32
    %2 = arith.cmpi ne, %1, %c0_i32_0 : i32
    scf.if %2 {
      %cst_9 = arith.constant 0.000000e+00 : f32
      %12 = vector.broadcast %cst_9 : f32 to vector<2x512xf32>
      %c0_10 = arith.constant 0 : index
      %c0_11 = arith.constant 0 : index
      %13 = vector.load %arg7[%c0_10, %c0_11] : memref<2x512xf32, #tpu.memory_space<vmem>>, vector<2x512xf32>
      tpu.vector_store %arg7[%c0_10, %c0_11], %12 {strides = array<i32>} : memref<2x512xf32, #tpu.memory_space<vmem>>, vector<2x512xf32>,
    } else {
    }
    %c0 = arith.constant 0 : index
    %c0_1 = arith.constant 0 : index
    %3 = vector.load %arg7[%c0, %c0_1] : memref<2x512xf32, #tpu.memory_space<vmem>>, vector<2x512xf32>
    %c0_2 = arith.constant 0 : index
    %c0_3 = arith.constant 0 : index
    %4 = vector.load %arg1[%c0_2, %c0_3] : memref<2x640xbf16, #tpu.memory_space<vmem>>, vector<2x640xbf16>
    %c0_4 = arith.constant 0 : index
    %c0_5 = arith.constant 0 : index
    %5 = vector.load %arg2[%c0_4, %c0_5] : memref<640x512xbf16, #tpu.memory_space<vmem>>, vector<640x512xbf16>
    %cst = arith.constant dense<0.000000e+00> : vector<2x512xf32>
    %6 = tpu.matmul %4, %5, %cst {dimension_numbers = #tpu.dot_dimension_numbers<[1], [0], [0], [1], [0, 0, 1, 1], [], []>} : vector<2x640xbf16>, vector<640x512xbf16>, vector<2x512xf32> -> vector<2x512xf32>
    %7 = arith.addf %3, %6 : vector<2x512xf32>
    %c0_6 = arith.constant 0 : index
    %c0_7 = arith.constant 0 : index
    %8 = vector.load %arg7[%c0_6, %c0_7] : memref<2x512xf32, #tpu.memory_space<vmem>>, vector<2x512xf32>
    tpu.vector_store %arg7[%c0_6, %c0_7], %7 {strides = array<i32>} : memref<2x512xf32, #tpu.memory_space<vmem>>, vector<2x512xf32>,
    %c4_i32 = arith.constant 4 : i32
    %9 = arith.cmpi eq, %arg0, %c4_i32 : i32
    %10 = arith.extui %9 : i1 to i32
    %c0_i32_8 = arith.constant 0 : i32
    %11 = arith.cmpi ne, %10, %c0_i32_8 : i32
    scf.if %11 {
      %c0_9 = arith.constant 0 : index
      %c0_10 = arith.constant 0 : index
      %12 = vector.load %arg7[%c0_9, %c0_10] : memref<2x512xf32, #tpu.memory_space<vmem>>, vector<2x512xf32>
      %c0_11 = arith.constant 0 : index
      %c0_12 = arith.constant 0 : index
      %13 = vector.load %arg3[%c0_11, %c0_12] : memref<1x512xf32, #tpu.memory_space<vmem>>, vector<1x512xf32>
      %14 = vector.broadcast %13 : vector<1x512xf32> to vector<2x512xf32>
      %15 = arith.addf %12, %14 : vector<2x512xf32>
      %cst_13 = arith.constant 0.000000e+00 : f32
      %16 = vector.broadcast %cst_13 : f32 to vector<2x512xf32>
      %17 = arith.maximumf %15, %16 : vector<2x512xf32>
      %18 = arith.truncf %17 : vector<2x512xf32> to vector<2x512xbf16>
      %c0_14 = arith.constant 0 : index
      %c0_15 = arith.constant 0 : index
      %19 = vector.load %arg4[%c0_14, %c0_15] : memref<512x128xbf16, #tpu.memory_space<vmem>>, vector<512x128xbf16>
      %cst_16 = arith.constant dense<0.000000e+00> : vector<2x128xf32>
      %20 = tpu.matmul %18, %19, %cst_16 {dimension_numbers = #tpu.dot_dimension_numbers<[1], [0], [0], [1], [0, 0, 1, 1], [], []>} : vector<2x512xbf16>, vector<512x128xbf16>, vector<2x128xf32> -> vector<2x128xf32>
      %c0_17 = arith.constant 0 : index
      %c0_18 = arith.constant 0 : index
      %21 = vector.load %arg5[%c0_17, %c0_18] : memref<1x128xf32, #tpu.memory_space<vmem>>, vector<1x128xf32>
      %22 = vector.broadcast %21 : vector<1x128xf32> to vector<2x128xf32>
      %23 = arith.addf %20, %22 : vector<2x128xf32>
      %c0_19 = arith.constant 0 : index
      %c0_20 = arith.constant 0 : index
      %24 = vector.load %arg6[%c0_19, %c0_20] : memref<2x128xf32, #tpu.memory_space<vmem>>, vector<2x128xf32>
      tpu.vector_store %arg6[%c0_19, %c0_20], %23 {strides = array<i32>} : memref<2x128xf32, #tpu.memory_space<vmem>>, vector<2x128xf32>,
    } else {
    }
    return
  }
  func.func @transform_0(%arg0: i32) -> (i32, i32) {
    %c0_i32 = arith.constant 0 : i32
    %c0_i32_0 = arith.constant 0 : i32
    return %c0_i32, %arg0 : i32, i32
  }
  func.func @transform_1(%arg0: i32) -> (i32, i32) {
    %c0_i32 = arith.constant 0 : i32
    %c0_i32_0 = arith.constant 0 : i32
    return %arg0, %c0_i32 : i32, i32
  }
  func.func @transform_2(%arg0: i32) -> (i32, i32) {
    %c0_i32 = arith.constant 0 : i32
    %c0_i32_0 = arith.constant 0 : i32
    %c0_i32_1 = arith.constant 0 : i32
    return %c0_i32, %c0_i32_0 : i32, i32
  }
  func.func @transform_3(%arg0: i32) -> (i32, i32) {
    %c0_i32 = arith.constant 0 : i32
    %c0_i32_0 = arith.constant 0 : i32
    %c0_i32_1 = arith.constant 0 : i32
    return %c0_i32, %c0_i32_0 : i32, i32
  }
  func.func @transform_4(%arg0: i32) -> (i32, i32) {
    %c0_i32 = arith.constant 0 : i32
    %c0_i32_0 = arith.constant 0 : i32
    %c0_i32_1 = arith.constant 0 : i32
    return %c0_i32, %c0_i32_0 : i32, i32
  }
  func.func @transform_5(%arg0: i32) -> (i32, i32) {
    %c0_i32 = arith.constant 0 : i32
    %c0_i32_0 = arith.constant 0 : i32
    %c0_i32_1 = arith.constant 0 : i32
    return %c0_i32, %c0_i32_0 : i32, i32
  }
}

</mosaic_0001>

<llo_original>
// kernel: dq_network_forward.4
$region0: #{dq_network_forward.4}
  #allocation0 [shape = 'u32[]', space=smem, size = 0x4, offset = 0x4, fixed_abs, tag = 'smem constant byte address 0x4 - core index']
  #allocation1 [shape = 'u32[144,128]{1,0:T(1,128)}', space=vmem, size = 0x12000, scoped, tag = 'internal scratch']
  %s0 = inlined_call_operand.vmem [shape: bf16[32,256], index: 0, kind: input, shape index: {}]
  %s1 = inlined_call_operand.vmem [shape: bf16[256,1024], index: 1, kind: input, shape index: {}]
  %s2 = inlined_call_operand.vmem [shape: f32[32,1], index: 2, kind: input, shape index: {}]
  %s3 = inlined_call_operand.vmem [shape: bf16[32,1024], index: 3, kind: output, shape index: {}]
  %s4 = sld [smem:[#allocation0]]
  $region117: #{dq_network_forward.4} parent=0
    _
  %s6 = ssub.s32 1, %s4
  %s7 = scalar_select 0, %s6, %s4
  $region1: #{dq_network_forward.4} parent=0
    #allocation2 [shape = 'u8[262144]{0}', space=vmem, size = 0x40000, scoped, tag = 'input window, operand 1']
    #allocation3 [shape = 'u8[32768]{0}', space=vmem, size = 0x8000, scoped, tag = 'output window, operand 0']
    loop: start=0, step=1, limit=6
    $region2: #{dq_network_forward.4} parent=1 // loop_pre_header
      _
    $region3: #{dq_network_forward.4} parent=1 // loop_header
      %s9 = sphi 0, %s13
      %p10 = scmp.ge.s32.totalorder %s9, 6
      %s17 = sphi 0, %s17
      %s19 = sphi 0, %s17
      %s20 = sphi 0, %s19
      %s34 = sphi 0, %s20
      %s40 = sphi 0, %s42
      %s43 = sphi 0, %s40
      %s44 = sphi 0, %s43
      %s60 = sphi 0, %s44
      %s64 = sphi 0, %s64
      %s66 = sphi 0, %s64
      %s67 = sphi 0, %s66
      %s81 = sphi 0, %s67
      %s87 = sphi 0, %s89
      %s90 = sphi 0, %s87
      %s91 = sphi 0, %s90
      %s107 = sphi 0, %s91
    $region4: #{dq_network_forward.4} parent=1 // loop_header_branch
      %12 = sbr.rel (%p10) target = $region8
    $region5: #{dq_network_forward.4} parent=1 // loop_body
      %s14 = ssub.s32 %s9, 1
      %s15 = ssub.s32 %s9, 2
      %s16 = sadd.s32 %s9, 1
      %s18 = sadd.s32 %s17, 1
      %p21 = scmp.eq.s32.totalorder %s9, 3
      %p22 = scmp.ne.s32.totalorder %s17, %s19
      %p23 = scmp.eq.s32.totalorder %s9, 0
      %p24 = por %p22, %p23
      %p25 = scmp.ne.s32.totalorder %s17, %s19
      %p26 = scmp.eq.s32.totalorder %s14, 3
      %p27 = por %p25, %p26
      %p28 = scmp.ne.s32.totalorder %s19, %s20
      %p29 = scmp.eq.s32.totalorder %s14, 0
      %p30 = por %p28, %p29
      %p31 = scmp.ne.s32.totalorder %s19, %s20
      %p32 = scmp.eq.s32.totalorder %s15, 3
      %p33 = por %p31, %p32
      %p35 = scmp.ne.s32.totalorder %s20, %s34
      %p36 = scmp.eq.s32.totalorder %s15, 0
      %p37 = por %p35, %p36
      %s38 = ssub.s32 %s9, %s16
      %p39 = scmp.eq.s32.totalorder %s38, 0
      %s41 = sadd.s32 %s40, 1
      %s42 = scalar_select %p39, %s40, %s41
      %p45 = pneg %p39
      %p46 = scmp.eq.s32.totalorder %s9, 3
      %p47 = por %p45, %p46
      %p48 = scmp.ne.s32.totalorder %s40, %s43
      %p49 = scmp.eq.s32.totalorder %s9, 0
      %p50 = por %p48, %p49
      %p51 = scmp.ne.s32.totalorder %s40, %s43
      %p52 = scmp.eq.s32.totalorder %s14, 3
      %p53 = por %p51, %p52
      %p54 = scmp.ne.s32.totalorder %s43, %s44
      %p55 = scmp.eq.s32.totalorder %s14, 0
      %p56 = por %p54, %p55
      %p57 = scmp.ne.s32.totalorder %s43, %s44
      %p58 = scmp.eq.s32.totalorder %s15, 3
      %p59 = por %p57, %p58
      %p61 = scmp.ne.s32.totalorder %s44, %s60
      %p62 = scmp.eq.s32.totalorder %s15, 0
      %p63 = por %p61, %p62
      %s65 = sadd.s32 %s64, 1
      %p68 = scmp.eq.s32.totalorder %s9, 3
      %p69 = scmp.ne.s32.totalorder %s64, %s66
      %p70 = scmp.eq.s32.totalorder %s9, 0
      %p71 = por %p69, %p70
      %p72 = scmp.ne.s32.totalorder %s64, %s66
      %p73 = scmp.eq.s32.totalorder %s14, 3
      %p74 = por %p72, %p73
      %p75 = scmp.ne.s32.totalorder %s66, %s67
      %p76 = scmp.eq.s32.totalorder %s14, 0
      %p77 = por %p75, %p76
      %p78 = scmp.ne.s32.totalorder %s66, %s67
      %p79 = scmp.eq.s32.totalorder %s15, 3
      %p80 = por %p78, %p79
      %p82 = scmp.ne.s32.totalorder %s67, %s81
      %p83 = scmp.eq.s32.totalorder %s15, 0
      %p84 = por %p82, %p83
      %s85 = ssub.s32 %s9, %s16
      %p86 = scmp.eq.s32.totalorder %s85, 0
      %s88 = sadd.s32 %s87, 1
      %s89 = scalar_select %p86, %s87, %s88
      %p92 = pneg %p86
      %p93 = scmp.eq.s32.totalorder %s9, 3
      %p94 = por %p92, %p93
      %p95 = scmp.ne.s32.totalorder %s87, %s90
      %p96 = scmp.eq.s32.totalorder %s9, 0
      %p97 = por %p95, %p96
      %p98 = scmp.ne.s32.totalorder %s87, %s90
      %p99 = scmp.eq.s32.totalorder %s14, 3
      %p100 = por %p98, %p99
      %p101 = scmp.ne.s32.totalorder %s90, %s91
      %p102 = scmp.eq.s32.totalorder %s14, 0
      %p103 = por %p101, %p102
      %p104 = scmp.ne.s32.totalorder %s90, %s91
      %p105 = scmp.eq.s32.totalorder %s15, 3
      %p106 = por %p104, %p105
      %p108 = scmp.ne.s32.totalorder %s91, %s107
      %p109 = scmp.eq.s32.totalorder %s15, 0
      %p110 = por %p108, %p109
      %p111 = scmp.le.s32.totalorder 1, %s9
      %p112 = scmp.lt.s32.totalorder %s9, 5
      %p113 = pnand %p111, %p112
      %p114 = pneg %p113
      // Predicated region
      $region9: #{dq_network_forward.4} parent=5 // pred_check
        _
      $region10: #{dq_network_forward.4} parent=5 // pred_check_branch
        %116 = sbr.rel (%p113) target = $region12
      $region11: #{dq_network_forward.4} parent=5 // pred_region
        %s117 = ssub.s32 %s9, 1
        // Predicated region
        $region13: #{dq_network_forward.4} parent=11 // pred_check
          %p118 = pneg %p30
        $region14: #{dq_network_forward.4} parent=11 // pred_check_branch
          %120 = sbr.rel (%p118) target = $region16
        $region15: #{dq_network_forward.4} parent=11 // pred_region
          _
        $region16: #{dq_network_forward.4} parent=11 // pred_fallthru
          _
        // Predicated region
        $region17: #{dq_network_forward.4} parent=11 // pred_check
          %p121 = pneg %p77
        $region18: #{dq_network_forward.4} parent=11 // pred_check_branch
          %123 = sbr.rel (%p121) target = $region20
        $region19: #{dq_network_forward.4} parent=11 // pred_region
          _
        $region20: #{dq_network_forward.4} parent=11 // pred_fallthru
          _
      $region12: #{dq_network_forward.4} parent=5 // pred_fallthru
        _
      %p124 = scmp.lt.s32.totalorder %s9, 4
      // Predicated region
      $region21: #{dq_network_forward.4} parent=5 // pred_check
        %p125 = pneg %p124
      $region22: #{dq_network_forward.4} parent=5 // pred_check_branch
        %127 = sbr.rel (%p125) target = $region24
      $region23: #{dq_network_forward.4} parent=5 // pred_region
        // Predicated region
        $region25: #{dq_network_forward.4} parent=23 // pred_check
          %p128 = pneg %p50
        $region26: #{dq_network_forward.4} parent=23 // pred_check_branch
          %130 = sbr.rel (%p128) target = $region28
        $region27: #{dq_network_forward.4} parent=23 // pred_region
          %s131 = sand.u32 %s40, 1
          %s132 = sand.u32 %s40, 1
          %s133 = smul.addr %s132, 256
          %s134 = scalar_lea.vmem [#allocation2], %s133
          %s135 = smul.u32 2, %s9
          %s136 = smul.addr %s135, 4
          %s137 = scalar_lea.vmem %s1, %s136
          // Predicated region
          $region29: #{dq_network_forward.4} parent=27 // pred_check
            _
          $region30: #{dq_network_forward.4} parent=27 // pred_check_branch
            %139 = sbr.rel (0) target = $region32
          $region31: #{dq_network_forward.4} parent=27 // pred_region
            // Predicated region
            $region33: #{dq_network_forward.4} parent=31 // pred_check
              _
            $region34: #{dq_network_forward.4} parent=31 // pred_check_branch
              %141 = sbr.rel (0) target = $region36
            $region35: #{dq_network_forward.4} parent=31 // pred_region
              // Predicated region
              $region48: #{dq_network_forward.4} parent=35 // pred_check
                _
              $region49: #{dq_network_forward.4} parent=35 // pred_check_branch
                %218 = sbr.rel (0) target = $region51
              $region50: #{dq_network_forward.4} parent=35 // pred_region
                loop: start=0, step=1, limit=1
                $region52: #{dq_network_forward.4} parent=50 // loop_pre_header
                  _
                $region53: #{dq_network_forward.4} parent=50 // loop_header
                  %s220 = sphi 0, %s224
                  %p221 = scmp.ge.s32.totalorder %s220, 1
                  %s225 = sphi %s137, %s137
                  %s226 = sphi %s134, %s134
                $region54: #{dq_network_forward.4} parent=50 // loop_header_branch
                  %223 = sbr.rel (%p221) target = $region58
                $region55: #{dq_network_forward.4} parent=50 // loop_body
                  %v227 = vld [vmem:[%s225] sm:$0xff]
                  %228 = vst [vmem:[%s226] sm:$0xff] %v227
                  %v229 = vld [vmem:[%s225 + $0x20] sm:$0xff]
                  %230 = vst [vmem:[%s226 + $0x8] sm:$0xff] %v229
                  %v231 = vld [vmem:[%s225 + $0x40] sm:$0xff]
                  %232 = vst [vmem:[%s226 + $0x10] sm:$0xff] %v231
                  %v233 = vld [vmem:[%s225 + $0x60] sm:$0xff]
                  %234 = vst [vmem:[%s226 + $0x18] sm:$0xff] %v233
                  %v235 = vld [vmem:[%s225 + $0x80] sm:$0xff]
                  %236 = vst [vmem:[%s226 + $0x20] sm:$0xff] %v235
                  %v237 = vld [vmem:[%s225 + $0xa0] sm:$0xff]
                  %238 = vst [vmem:[%s226 + $0x28] sm:$0xff] %v237
                  %v239 = vld [vmem:[%s225 + $0xc0] sm:$0xff]
                  %240 = vst [vmem:[%s226 + $0x30] sm:$0xff] %v239
                  %v241 = vld [vmem:[%s225 + $0xe0] sm:$0xff]
                  %242 = vst [vmem:[%s226 + $0x38] sm:$0xff] %v241
                  %v243 = vld [vmem:[%s225 + $0x100] sm:$0xff]
                  %244 = vst [vmem:[%s226 + $0x40] sm:$0xff] %v243
                  %v245 = vld [vmem:[%s225 + $0x120] sm:$0xff]
                  %246 = vst [vmem:[%s226 + $0x48] sm:$0xff] %v245
                  %v247 = vld [vmem:[%s225 + $0x140] sm:$0xff]
                  %248 = vst [vmem:[%s226 + $0x50] sm:$0xff] %v247
                  %v249 = vld [vmem:[%s225 + $0x160] sm:$0xff]
                  %250 = vst [vmem:[%s226 + $0x58] sm:$0xff] %v249
                  %v251 = vld [vmem:[%s225 + $0x180] sm:$0xff]
                  %252 = vst [vmem:[%s226 + $0x60] sm:$0xff] %v251
                  %v253 = vld [vmem:[%s225 + $0x1a0] sm:$0xff]
                  %254 = vst [vmem:[%s226 + $0x68] sm:$0xff] %v253
                  %v255 = vld [vmem:[%s225 + $0x1c0] sm:$0xff]
                  %256 = vst [vmem:[%s226 + $0x70] sm:$0xff] %v255
                  %v257 = vld [vmem:[%s225 + $0x1e0] sm:$0xff]
                  %258 = vst [vmem:[%s226 + $0x78] sm:$0xff] %v257
                  %v259 = vld [vmem:[%s225 + $0x200] sm:$0xff]
                  %260 = vst [vmem:[%s226 + $0x80] sm:$0xff] %v259
                  %v261 = vld [vmem:[%s225 + $0x220] sm:$0xff]
                  %262 = vst [vmem:[%s226 + $0x88] sm:$0xff] %v261
                  %v263 = vld [vmem:[%s225 + $0x240] sm:$0xff]
                  %264 = vst [vmem:[%s226 + $0x90] sm:$0xff] %v263
                  %v265 = vld [vmem:[%s225 + $0x260] sm:$0xff]
                  %266 = vst [vmem:[%s226 + $0x98] sm:$0xff] %v265
                  %v267 = vld [vmem:[%s225 + $0x280] sm:$0xff]
                  %268 = vst [vmem:[%s226 + $0xa0] sm:$0xff] %v267
                  %v269 = vld [vmem:[%s225 + $0x2a0] sm:$0xff]
                  %270 = vst [vmem:[%s226 + $0xa8] sm:$0xff] %v269
                  %v271 = vld [vmem:[%s225 + $0x2c0] sm:$0xff]
                  %272 = vst [vmem:[%s226 + $0xb0] sm:$0xff] %v271
                  %v273 = vld [vmem:[%s225 + $0x2e0] sm:$0xff]
                  %274 = vst [vmem:[%s226 + $0xb8] sm:$0xff] %v273
                  %v275 = vld [vmem:[%s225 + $0x300] sm:$0xff]
                  %276 = vst [vmem:[%s226 + $0xc0] sm:$0xff] %v275
                  %v277 = vld [vmem:[%s225 + $0x320] sm:$0xff]
                  %278 = vst [vmem:[%s226 + $0xc8] sm:$0xff] %v277
                  %v279 = vld [vmem:[%s225 + $0x340] sm:$0xff]
                  %280 = vst [vmem:[%s226 + $0xd0] sm:$0xff] %v279
                  %v281 = vld [vmem:[%s225 + $0x360] sm:$0xff]
                  %282 = vst [vmem:[%s226 + $0xd8] sm:$0xff] %v281
                  %v283 = vld [vmem:[%s225 + $0x380] sm:$0xff]
                  %284 = vst [vmem:[%s226 + $0xe0] sm:$0xff] %v283
                  %v285 = vld [vmem:[%s225 + $0x3a0] sm:$0xff]
                  %286 = vst [vmem:[%s226 + $0xe8] sm:$0xff] %v285
                  %v287 = vld [vmem:[%s225 + $0x3c0] sm:$0xff]
                  %288 = vst [vmem:[%s226 + $0xf0] sm:$0xff] %v287
                  %v289 = vld [vmem:[%s225 + $0x3e0] sm:$0xff]
                  %290 = vst [vmem:[%s226 + $0xf8] sm:$0xff] %v289
                $region56: #{dq_network_forward.4} parent=50 // loop_footer
                  %s224 = sadd.s32 1, %s220
                $region57: #{dq_network_forward.4} parent=50 // loop_footer_branch
                  %219 = sbr.rel target = $region53
                $region58: #{dq_network_forward.4} parent=50 // loop_exit
                  _
              $region51: #{dq_network_forward.4} parent=35 // pred_fallthru
                _
              // Predicated region
              $region59: #{dq_network_forward.4} parent=35 // pred_check
                _
              $region60: #{dq_network_forward.4} parent=35 // pred_check_branch
                %292 = sbr.rel target = $region62
              $region61: #{dq_network_forward.4} parent=35 // pred_region
                _
              $region62: #{dq_network_forward.4} parent=35 // pred_fallthru
                _
            $region36: #{dq_network_forward.4} parent=31 // pred_fallthru
              _
            // Predicated region
            $region37: #{dq_network_forward.4} parent=31 // pred_check
              _
            $region38: #{dq_network_forward.4} parent=31 // pred_check_branch
              %143 = sbr.rel target = $region40
            $region39: #{dq_network_forward.4} parent=31 // pred_region
              loop: start=0, step=1, limit=1
              $region41: #{dq_network_forward.4} parent=39 // loop_pre_header
                _
              $region42: #{dq_network_forward.4} parent=39 // loop_header
                %s146 = sphi 0, %s150
                %p147 = scmp.ge.s32.totalorder %s146, 1
                %s151 = sphi %s137, %s137
                %s152 = sphi %s134, %s134
              $region43: #{dq_network_forward.4} parent=39 // loop_header_branch
                %149 = sbr.rel (%p147) target = $region47
              $region44: #{dq_network_forward.4} parent=39 // loop_body
                %v153 = vld [vmem:[%s151] sm:$0xff]
                %154 = vst [vmem:[%s152] sm:$0xff] %v153
                %v155 = vld [vmem:[%s151 + $0x20] sm:$0xff]
                %156 = vst [vmem:[%s152 + $0x8] sm:$0xff] %v155
                %v157 = vld [vmem:[%s151 + $0x40] sm:$0xff]
                %158 = vst [vmem:[%s152 + $0x10] sm:$0xff] %v157
                %v159 = vld [vmem:[%s151 + $0x60] sm:$0xff]
                %160 = vst [vmem:[%s152 + $0x18] sm:$0xff] %v159
                %v161 = vld [vmem:[%s151 + $0x80] sm:$0xff]
                %162 = vst [vmem:[%s152 + $0x20] sm:$0xff] %v161
                %v163 = vld [vmem:[%s151 + $0xa0] sm:$0xff]
                %164 = vst [vmem:[%s152 + $0x28] sm:$0xff] %v163
                %v165 = vld [vmem:[%s151 + $0xc0] sm:$0xff]
                %166 = vst [vmem:[%s152 + $0x30] sm:$0xff] %v165
                %v167 = vld [vmem:[%s151 + $0xe0] sm:$0xff]
                %168 = vst [vmem:[%s152 + $0x38] sm:$0xff] %v167
                %v169 = vld [vmem:[%s151 + $0x100] sm:$0xff]
                %170 = vst [vmem:[%s152 + $0x40] sm:$0xff] %v169
                %v171 = vld [vmem:[%s151 + $0x120] sm:$0xff]
                %172 = vst [vmem:[%s152 + $0x48] sm:$0xff] %v171
                %v173 = vld [vmem:[%s151 + $0x140] sm:$0xff]
                %174 = vst [vmem:[%s152 + $0x50] sm:$0xff] %v173
                %v175 = vld [vmem:[%s151 + $0x160] sm:$0xff]
                %176 = vst [vmem:[%s152 + $0x58] sm:$0xff] %v175
                %v177 = vld [vmem:[%s151 + $0x180] sm:$0xff]
                %178 = vst [vmem:[%s152 + $0x60] sm:$0xff] %v177
                %v179 = vld [vmem:[%s151 + $0x1a0] sm:$0xff]
                %180 = vst [vmem:[%s152 + $0x68] sm:$0xff] %v179
                %v181 = vld [vmem:[%s151 + $0x1c0] sm:$0xff]
                %182 = vst [vmem:[%s152 + $0x70] sm:$0xff] %v181
                %v183 = vld [vmem:[%s151 + $0x1e0] sm:$0xff]
                %184 = vst [vmem:[%s152 + $0x78] sm:$0xff] %v183
                %v185 = vld [vmem:[%s151 + $0x200] sm:$0xff]
                %186 = vst [vmem:[%s152 + $0x80] sm:$0xff] %v185
                %v187 = vld [vmem:[%s151 + $0x220] sm:$0xff]
                %188 = vst [vmem:[%s152 + $0x88] sm:$0xff] %v187
                %v189 = vld [vmem:[%s151 + $0x240] sm:$0xff]
                %190 = vst [vmem:[%s152 + $0x90] sm:$0xff] %v189
                %v191 = vld [vmem:[%s151 + $0x260] sm:$0xff]
                %192 = vst [vmem:[%s152 + $0x98] sm:$0xff] %v191
                %v193 = vld [vmem:[%s151 + $0x280] sm:$0xff]
                %194 = vst [vmem:[%s152 + $0xa0] sm:$0xff] %v193
                %v195 = vld [vmem:[%s151 + $0x2a0] sm:$0xff]
                %196 = vst [vmem:[%s152 + $0xa8] sm:$0xff] %v195
                %v197 = vld [vmem:[%s151 + $0x2c0] sm:$0xff]
                %198 = vst [vmem:[%s152 + $0xb0] sm:$0xff] %v197
                %v199 = vld [vmem:[%s151 + $0x2e0] sm:$0xff]
                %200 = vst [vmem:[%s152 + $0xb8] sm:$0xff] %v199
                %v201 = vld [vmem:[%s151 + $0x300] sm:$0xff]
                %202 = vst [vmem:[%s152 + $0xc0] sm:$0xff] %v201
                %v203 = vld [vmem:[%s151 + $0x320] sm:$0xff]
                %204 = vst [vmem:[%s152 + $0xc8] sm:$0xff] %v203
                %v205 = vld [vmem:[%s151 + $0x340] sm:$0xff]
                %206 = vst [vmem:[%s152 + $0xd0] sm:$0xff] %v205
                %v207 = vld [vmem:[%s151 + $0x360] sm:$0xff]
                %208 = vst [vmem:[%s152 + $0xd8] sm:$0xff] %v207
                %v209 = vld [vmem:[%s151 + $0x380] sm:$0xff]
                %210 = vst [vmem:[%s152 + $0xe0] sm:$0xff] %v209
                %v211 = vld [vmem:[%s151 + $0x3a0] sm:$0xff]
                %212 = vst [vmem:[%s152 + $0xe8] sm:$0xff] %v211
                %v213 = vld [vmem:[%s151 + $0x3c0] sm:$0xff]
                %214 = vst [vmem:[%s152 + $0xf0] sm:$0xff] %v213
                %v215 = vld [vmem:[%s151 + $0x3e0] sm:$0xff]
                %216 = vst [vmem:[%s152 + $0xf8] sm:$0xff] %v215
              $region45: #{dq_network_forward.4} parent=39 // loop_footer
                %s150 = sadd.s32 1, %s146
              $region46: #{dq_network_forward.4} parent=39 // loop_footer_branch
                %145 = sbr.rel target = $region42
              $region47: #{dq_network_forward.4} parent=39 // loop_exit
                _
            $region40: #{dq_network_forward.4} parent=31 // pred_fallthru
              _
          $region32: #{dq_network_forward.4} parent=27 // pred_fallthru
            _
          %293 = vnop
        $region28: #{dq_network_forward.4} parent=23 // pred_fallthru
          _
      $region24: #{dq_network_forward.4} parent=5 // pred_fallthru
        _
      %p294 = scmp.le.s32.totalorder 1, %s9
      %p295 = scmp.lt.s32.totalorder %s9, 5
      %p296 = pnand %p294, %p295
      %p297 = pneg %p296
      // Predicated region
      $region63: #{dq_network_forward.4} parent=5 // pred_check
        _
      $region64: #{dq_network_forward.4} parent=5 // pred_check_branch
        %299 = sbr.rel (%p296) target = $region66
      $region65: #{dq_network_forward.4} parent=5 // pred_region
        %s300 = ssub.s32 %s9, 1
        %s301 = sand.u32 %s43, 1
        %s302 = sand.u32 %s43, 1
        %s303 = smul.addr %s302, 256
        %s304 = scalar_lea.vmem [#allocation2], %s303
        // Predicated region
        $region67: #{dq_network_forward.4} parent=65 // pred_check
          %p305 = pneg %p56
        $region68: #{dq_network_forward.4} parent=65 // pred_check_branch
          %307 = sbr.rel (%p305) target = $region70
        $region69: #{dq_network_forward.4} parent=65 // pred_region
          _
        $region70: #{dq_network_forward.4} parent=65 // pred_fallthru
          _
        %p308 = pneg %p30
        %p309 = pneg %p27
        %s310 = sand.u32 %s43, 1
        %s311 = sand.u32 %s43, 1
        %s312 = smul.addr %s311, 256
        %s313 = scalar_lea.vmem [#allocation2], %s312
        %p314 = pneg %p56
        %p315 = pneg %p53
        %p316 = pneg %p77
        %p317 = pneg %p74
        %p318 = pneg %p103
        %p319 = pneg %p100
        %s320 = sand.u32 %s90, 1
        %s321 = sand.u32 %s90, 1
        %s322 = smul.addr %s321, 32
        %s323 = scalar_lea.vmem [#allocation3], %s322
        %s324 = smul.u32 2, %s14
        %s325 = smul.u32 2, %s14
        %v326 = vld [vmem:[%s0] sm:$0xff]
        %v327 = vld [vmem:[%s0 + $0x8] sm:$0xff]
        %v328 = vld [vmem:[%s0 + $0x10] sm:$0xff]
        %v329 = vld [vmem:[%s0 + $0x18] sm:$0xff]
        %v330 = vld [vmem:[%s304] sm:$0xff]
        %v331 = vld [vmem:[%s304 + $0x8] sm:$0xff]
        %v332 = vld [vmem:[%s304 + $0x10] sm:$0xff]
        %v333 = vld [vmem:[%s304 + $0x18] sm:$0xff]
        %v334 = vld [vmem:[%s304 + $0x20] sm:$0xff]
        %v335 = vld [vmem:[%s304 + $0x28] sm:$0xff]
        %v336 = vld [vmem:[%s304 + $0x30] sm:$0xff]
        %v337 = vld [vmem:[%s304 + $0x38] sm:$0xff]
        %v338 = vld [vmem:[%s304 + $0x40] sm:$0xff]
        %v339 = vld [vmem:[%s304 + $0x48] sm:$0xff]
        %v340 = vld [vmem:[%s304 + $0x50] sm:$0xff]
        %v341 = vld [vmem:[%s304 + $0x58] sm:$0xff]
        %v342 = vld [vmem:[%s304 + $0x60] sm:$0xff]
        %v343 = vld [vmem:[%s304 + $0x68] sm:$0xff]
        %v344 = vld [vmem:[%s304 + $0x70] sm:$0xff]
        %v345 = vld [vmem:[%s304 + $0x78] sm:$0xff]
        %v346 = vld [vmem:[%s304 + $0x80] sm:$0xff]
        %v347 = vld [vmem:[%s304 + $0x88] sm:$0xff]
        %v348 = vld [vmem:[%s304 + $0x90] sm:$0xff]
        %v349 = vld [vmem:[%s304 + $0x98] sm:$0xff]
        %v350 = vld [vmem:[%s304 + $0xa0] sm:$0xff]
        %v351 = vld [vmem:[%s304 + $0xa8] sm:$0xff]
        %v352 = vld [vmem:[%s304 + $0xb0] sm:$0xff]
        %v353 = vld [vmem:[%s304 + $0xb8] sm:$0xff]
        %v354 = vld [vmem:[%s304 + $0xc0] sm:$0xff]
        %v355 = vld [vmem:[%s304 + $0xc8] sm:$0xff]
        %v356 = vld [vmem:[%s304 + $0xd0] sm:$0xff]
        %v357 = vld [vmem:[%s304 + $0xd8] sm:$0xff]
        %v358 = vld [vmem:[%s304 + $0xe0] sm:$0xff]
        %v359 = vld [vmem:[%s304 + $0xe8] sm:$0xff]
        %v360 = vld [vmem:[%s304 + $0xf0] sm:$0xff]
        %v361 = vld [vmem:[%s304 + $0xf8] sm:$0xff]
        %v362 = vld [vmem:[%s2] sm:$0xff]
        %v363 = vld [vmem:[%s2 + $0x8] sm:$0xff]
        %v364 = vld [vmem:[%s2 + $0x10] sm:$0xff]
        %v365 = vld [vmem:[%s2 + $0x18] sm:$0xff]
        %367 = vset.pattern.permute.xlu0 0
        %368 = vperm.xlu0 %367, %v362
        %v369 = vpop.permute.xlu0 %368
        %372 = vset.pattern.permute.xlu0 0
        %373 = vperm.xlu0 %372, %v363
        %v374 = vpop.permute.xlu0 %373
        %377 = vset.pattern.permute.xlu0 0
        %378 = vperm.xlu0 %377, %v364
        %v379 = vpop.permute.xlu0 %378
        %382 = vset.pattern.permute.xlu0 0
        %383 = vperm.xlu0 %382, %v365
        %v384 = vpop.permute.xlu0 %383
        %v390 = vunpack.c.l.b16 %v326
        %v391 = vunpack.c.h.b16 %v326
        %v392 = vunpack.c.l.b16 %v327
        %v393 = vunpack.c.h.b16 %v327
        %v394 = vunpack.c.l.b16 %v328
        %v395 = vunpack.c.h.b16 %v328
        %v396 = vunpack.c.l.b16 %v329
        %v397 = vunpack.c.h.b16 %v329
        %v398 = vpack.c.b16 %v392, %v390
        %v399 = vpack.c.b16 %v393, %v391
        %v400 = vpack.c.b16 %v396, %v394
        %v401 = vpack.c.b16 %v397, %v395
        %v438 = vunpack.c.l.b16 %v330
        %v439 = vunpack.c.h.b16 %v330
        %v440 = vunpack.c.l.b16 %v331
        %v441 = vunpack.c.h.b16 %v331
        %v442 = vunpack.c.l.b16 %v332
        %v443 = vunpack.c.h.b16 %v332
        %v444 = vunpack.c.l.b16 %v333
        %v445 = vunpack.c.h.b16 %v333
        %v446 = vunpack.c.l.b16 %v334
        %v447 = vunpack.c.h.b16 %v334
        %v448 = vunpack.c.l.b16 %v335
        %v449 = vunpack.c.h.b16 %v335
        %v450 = vunpack.c.l.b16 %v336
        %v451 = vunpack.c.h.b16 %v336
        %v452 = vunpack.c.l.b16 %v337
        %v453 = vunpack.c.h.b16 %v337
        %v454 = vunpack.c.l.b16 %v338
        %v455 = vunpack.c.h.b16 %v338
        %v456 = vunpack.c.l.b16 %v339
        %v457 = vunpack.c.h.b16 %v339
        %v458 = vunpack.c.l.b16 %v340
        %v459 = vunpack.c.h.b16 %v340
        %v460 = vunpack.c.l.b16 %v341
        %v461 = vunpack.c.h.b16 %v341
        %v462 = vunpack.c.l.b16 %v342
        %v463 = vunpack.c.h.b16 %v342
        %v464 = vunpack.c.l.b16 %v343
        %v465 = vunpack.c.h.b16 %v343
        %v466 = vunpack.c.l.b16 %v344
        %v467 = vunpack.c.h.b16 %v344
        %v468 = vunpack.c.l.b16 %v345
        %v469 = vunpack.c.h.b16 %v345
        %v470 = vunpack.c.l.b16 %v346
        %v471 = vunpack.c.h.b16 %v346
        %v472 = vunpack.c.l.b16 %v347
        %v473 = vunpack.c.h.b16 %v347
        %v474 = vunpack.c.l.b16 %v348
        %v475 = vunpack.c.h.b16 %v348
        %v476 = vunpack.c.l.b16 %v349
        %v477 = vunpack.c.h.b16 %v349
        %v478 = vunpack.c.l.b16 %v350
        %v479 = vunpack.c.h.b16 %v350
        %v480 = vunpack.c.l.b16 %v351
        %v481 = vunpack.c.h.b16 %v351
        %v482 = vunpack.c.l.b16 %v352
        %v483 = vunpack.c.h.b16 %v352
        %v484 = vunpack.c.l.b16 %v353
        %v485 = vunpack.c.h.b16 %v353
        %v486 = vunpack.c.l.b16 %v354
        %v487 = vunpack.c.h.b16 %v354
        %v488 = vunpack.c.l.b16 %v355
        %v489 = vunpack.c.h.b16 %v355
        %v490 = vunpack.c.l.b16 %v356
        %v491 = vunpack.c.h.b16 %v356
        %v492 = vunpack.c.l.b16 %v357
        %v493 = vunpack.c.h.b16 %v357
        %v494 = vunpack.c.l.b16 %v358
        %v495 = vunpack.c.h.b16 %v358
        %v496 = vunpack.c.l.b16 %v359
        %v497 = vunpack.c.h.b16 %v359
        %v498 = vunpack.c.l.b16 %v360
        %v499 = vunpack.c.h.b16 %v360
        %v500 = vunpack.c.l.b16 %v361
        %v501 = vunpack.c.h.b16 %v361
        %v502 = vpack.c.b16 %v440, %v438
        %v503 = vpack.c.b16 %v441, %v439
        %v504 = vpack.c.b16 %v444, %v442
        %v505 = vpack.c.b16 %v445, %v443
        %v506 = vpack.c.b16 %v448, %v446
        %v507 = vpack.c.b16 %v449, %v447
        %v508 = vpack.c.b16 %v452, %v450
        %v509 = vpack.c.b16 %v453, %v451
        %v510 = vpack.c.b16 %v456, %v454
        %v511 = vpack.c.b16 %v457, %v455
        %v512 = vpack.c.b16 %v460, %v458
        %v513 = vpack.c.b16 %v461, %v459
        %v514 = vpack.c.b16 %v464, %v462
        %v515 = vpack.c.b16 %v465, %v463
        %v516 = vpack.c.b16 %v468, %v466
        %v517 = vpack.c.b16 %v469, %v467
        %v518 = vpack.c.b16 %v472, %v470
        %v519 = vpack.c.b16 %v473, %v471
        %v520 = vpack.c.b16 %v476, %v474
        %v521 = vpack.c.b16 %v477, %v475
        %v522 = vpack.c.b16 %v480, %v478
        %v523 = vpack.c.b16 %v481, %v479
        %v524 = vpack.c.b16 %v484, %v482
        %v525 = vpack.c.b16 %v485, %v483
        %v526 = vpack.c.b16 %v488, %v486
        %v527 = vpack.c.b16 %v489, %v487
        %v528 = vpack.c.b16 %v492, %v490
        %v529 = vpack.c.b16 %v493, %v491
        %v530 = vpack.c.b16 %v496, %v494
        %v531 = vpack.c.b16 %v497, %v495
        %v532 = vpack.c.b16 %v500, %v498
        %v533 = vpack.c.b16 %v501, %v499
        %566 = vmatprep.subr.bf16.mxu0 %v503
        %567 = vmatpush1.bf16.msra.mxu0 %v502
        %568 = vmatprep.subr.bf16.mxu0 %v505
        %569 = vmatpush1.bf16.msra.mxu0 %v504
        %570 = vmatprep.subr.bf16.mxu0 %v507
        %571 = vmatpush1.bf16.msra.mxu0 %v506
        %572 = vmatprep.subr.bf16.mxu0 %v509
        %573 = vmatpush1.bf16.msra.mxu0 %v508
        %574 = vmatprep.subr.bf16.mxu0 %v511
        %575 = vmatpush1.bf16.msra.mxu0 %v510
        %576 = vmatprep.subr.bf16.mxu0 %v513
        %577 = vmatpush1.bf16.msra.mxu0 %v512
        %578 = vmatprep.subr.bf16.mxu0 %v515
        %579 = vmatpush1.bf16.msra.mxu0 %v514
        %580 = vmatprep.subr.bf16.mxu0 %v517
        %581 = vmatpush1.bf16.msra.mxu0 %v516
        %582 = vmatprep.subr.bf16.mxu0 %v519
        %583 = vmatpush1.bf16.msra.mxu0 %v518
        %584 = vmatprep.subr.bf16.mxu0 %v521
        %585 = vmatpush1.bf16.msra.mxu0 %v520
        %586 = vmatprep.subr.bf16.mxu0 %v523
        %587 = vmatpush1.bf16.msra.mxu0 %v522
        %588 = vmatprep.subr.bf16.mxu0 %v525
        %589 = vmatpush1.bf16.msra.mxu0 %v524
        %590 = vmatprep.subr.bf16.mxu0 %v527
        %591 = vmatpush1.bf16.msra.mxu0 %v526
        %592 = vmatprep.subr.bf16.mxu0 %v529
        %593 = vmatpush1.bf16.msra.mxu0 %v528
        %594 = vmatprep.subr.bf16.mxu0 %v531
        %595 = vmatpush1.bf16.msra.mxu0 %v530
        %596 = vmatprep.subr.bf16.mxu0 %v533
        %597 = vmatpush1.bf16.msra.mxu0 %v532
        %598 = vmatprep.mubr.bf16.mxu0 %v399
        %599 = vmatmul.mubr.bf16.gmra.mrb[0].mxu0 %v398
        %v600 = vpop.f32.mrb[0].mxu0
        %v601 = vadd.f32 %v369, %v600
        %v602 = vpop.f32.mrb[0].mxu0
        %v603 = vadd.f32 %v369, %v602
        %v604 = vpop.f32.mrb[0].mxu0
        %v605 = vadd.f32 %v374, %v604
        %v606 = vpop.f32.mrb[0].mxu0
        %v607 = vadd.f32 %v374, %v606
        %608 = vmatprep.mubr.bf16.mxu0 %v401
        %609 = vmatmul.mubr.bf16.gmra.mrb[0].mxu0 %v400
        %v610 = vpop.f32.mrb[0].mxu0
        %v611 = vadd.f32 %v379, %v610
        %v612 = vpop.f32.mrb[0].mxu0
        %v613 = vadd.f32 %v379, %v612
        %v614 = vpop.f32.mrb[0].mxu0
        %v615 = vadd.f32 %v384, %v614
        %v616 = vpop.f32.mrb[0].mxu0
        %v617 = vadd.f32 %v384, %v616
        %618 = vdwg.mxu0
        %v619 = vmax.f32 %v601, 0.0
        %v620 = vmax.f32 %v603, 0.0
        %v621 = vmax.f32 %v605, 0.0
        %v622 = vmax.f32 %v607, 0.0
        %v623 = vmax.f32 %v611, 0.0
        %v624 = vmax.f32 %v613, 0.0
        %v625 = vmax.f32 %v615, 0.0
        %v626 = vmax.f32 %v617, 0.0
        %v627 = vpack.c.bf16 %v621, %v619
        %v628 = vpack.c.bf16 %v622, %v620
        %v629 = vpack.c.bf16 %v625, %v623
        %v630 = vpack.c.bf16 %v626, %v624
        %v635 = vunpack.c.l.b16 %v627
        %v636 = vunpack.c.l.b16 %v628
        %v637 = vunpack.c.h.b16 %v627
        %v638 = vunpack.c.h.b16 %v628
        %v639 = vunpack.c.l.b16 %v629
        %v640 = vunpack.c.l.b16 %v630
        %v641 = vunpack.c.h.b16 %v629
        %v642 = vunpack.c.h.b16 %v630
        %v643 = vpack.c.b16 %v636, %v635
        %v644 = vpack.c.b16 %v638, %v637
        %v645 = vpack.c.b16 %v640, %v639
        %v646 = vpack.c.b16 %v642, %v641
        %651 = vst [vmem:[%s323] sm:$0xff] %v643
        %652 = vst [vmem:[%s323 + $0x8] sm:$0xff] %v644
        %653 = vst [vmem:[%s323 + $0x10] sm:$0xff] %v645
        %654 = vst [vmem:[%s323 + $0x18] sm:$0xff] %v646
        %s655 = sand.u32 %s90, 1
        %s656 = sand.u32 %s90, 1
        %s657 = smul.addr %s656, 32
        %s658 = scalar_lea.vmem [#allocation3], %s657
        // Predicated region
        $region71: #{dq_network_forward.4} parent=65 // pred_check
          %p659 = pneg %p100
        $region72: #{dq_network_forward.4} parent=65 // pred_check_branch
          %661 = sbr.rel (%p659) target = $region74
        $region73: #{dq_network_forward.4} parent=65 // pred_region
          %s662 = smul.u32 2, %s14
          %s663 = smul.addr %s662, 4
          %s664 = scalar_lea.vmem %s3, %s663
          // Predicated region
          $region75: #{dq_network_forward.4} parent=73 // pred_check
            _
          $region76: #{dq_network_forward.4} parent=73 // pred_check_branch
            %666 = sbr.rel (0) target = $region78
          $region77: #{dq_network_forward.4} parent=73 // pred_region
            // Predicated region
            $region79: #{dq_network_forward.4} parent=77 // pred_check
              _
            $region80: #{dq_network_forward.4} parent=77 // pred_check_branch
              %668 = sbr.rel (0) target = $region82
            $region81: #{dq_network_forward.4} parent=77 // pred_region
              // Predicated region
              $region94: #{dq_network_forward.4} parent=81 // pred_check
                _
              $region95: #{dq_network_forward.4} parent=81 // pred_check_branch
                %689 = sbr.rel (0) target = $region97
              $region96: #{dq_network_forward.4} parent=81 // pred_region
                loop: start=0, step=1, limit=1
                $region98: #{dq_network_forward.4} parent=96 // loop_pre_header
                  _
                $region99: #{dq_network_forward.4} parent=96 // loop_header
                  %s691 = sphi 0, %s695
                  %p692 = scmp.ge.s32.totalorder %s691, 1
                  %s696 = sphi %s658, %s658
                  %s697 = sphi %s664, %s664
                $region100: #{dq_network_forward.4} parent=96 // loop_header_branch
                  %694 = sbr.rel (%p692) target = $region104
                $region101: #{dq_network_forward.4} parent=96 // loop_body
                  %v698 = vld [vmem:[%s696] sm:$0xff]
                  %699 = vst [vmem:[%s697] sm:$0xff] %v698
                  %v700 = vld [vmem:[%s696 + $0x8] sm:$0xff]
                  %701 = vst [vmem:[%s697 + $0x20] sm:$0xff] %v700
                  %v702 = vld [vmem:[%s696 + $0x10] sm:$0xff]
                  %703 = vst [vmem:[%s697 + $0x40] sm:$0xff] %v702
                  %v704 = vld [vmem:[%s696 + $0x18] sm:$0xff]
                  %705 = vst [vmem:[%s697 + $0x60] sm:$0xff] %v704
                $region102: #{dq_network_forward.4} parent=96 // loop_footer
                  %s695 = sadd.s32 1, %s691
                $region103: #{dq_network_forward.4} parent=96 // loop_footer_branch
                  %690 = sbr.rel target = $region99
                $region104: #{dq_network_forward.4} parent=96 // loop_exit
                  _
              $region97: #{dq_network_forward.4} parent=81 // pred_fallthru
                _
              // Predicated region
              $region105: #{dq_network_forward.4} parent=81 // pred_check
                _
              $region106: #{dq_network_forward.4} parent=81 // pred_check_branch
                %707 = sbr.rel target = $region108
              $region107: #{dq_network_forward.4} parent=81 // pred_region
                _
              $region108: #{dq_network_forward.4} parent=81 // pred_fallthru
                _
            $region82: #{dq_network_forward.4} parent=77 // pred_fallthru
              _
            // Predicated region
            $region83: #{dq_network_forward.4} parent=77 // pred_check
              _
            $region84: #{dq_network_forward.4} parent=77 // pred_check_branch
              %670 = sbr.rel target = $region86
            $region85: #{dq_network_forward.4} parent=77 // pred_region
              loop: start=0, step=1, limit=1
              $region87: #{dq_network_forward.4} parent=85 // loop_pre_header
                _
              $region88: #{dq_network_forward.4} parent=85 // loop_header
                %s673 = sphi 0, %s677
                %p674 = scmp.ge.s32.totalorder %s673, 1
                %s678 = sphi %s658, %s658
                %s679 = sphi %s664, %s664
              $region89: #{dq_network_forward.4} parent=85 // loop_header_branch
                %676 = sbr.rel (%p674) target = $region93
              $region90: #{dq_network_forward.4} parent=85 // loop_body
                %v680 = vld [vmem:[%s678] sm:$0xff]
                %681 = vst [vmem:[%s679] sm:$0xff] %v680
                %v682 = vld [vmem:[%s678 + $0x8] sm:$0xff]
                %683 = vst [vmem:[%s679 + $0x20] sm:$0xff] %v682
                %v684 = vld [vmem:[%s678 + $0x10] sm:$0xff]
                %685 = vst [vmem:[%s679 + $0x40] sm:$0xff] %v684
                %v686 = vld [vmem:[%s678 + $0x18] sm:$0xff]
                %687 = vst [vmem:[%s679 + $0x60] sm:$0xff] %v686
              $region91: #{dq_network_forward.4} parent=85 // loop_footer
                %s677 = sadd.s32 1, %s673
              $region92: #{dq_network_forward.4} parent=85 // loop_footer_branch
                %672 = sbr.rel target = $region88
              $region93: #{dq_network_forward.4} parent=85 // loop_exit
                _
            $region86: #{dq_network_forward.4} parent=77 // pred_fallthru
              _
          $region78: #{dq_network_forward.4} parent=73 // pred_fallthru
            _
          %708 = vnop
        $region74: #{dq_network_forward.4} parent=65 // pred_fallthru
          _
      $region66: #{dq_network_forward.4} parent=5 // pred_fallthru
        _
      %p709 = scmp.le.s32.totalorder 2, %s9
      // Predicated region
      $region109: #{dq_network_forward.4} parent=5 // pred_check
        %p710 = pneg %p709
      $region110: #{dq_network_forward.4} parent=5 // pred_check_branch
        %712 = sbr.rel (%p710) target = $region112
      $region111: #{dq_network_forward.4} parent=5 // pred_region
        %s713 = ssub.s32 %s9, 2
        // Predicated region
        $region113: #{dq_network_forward.4} parent=111 // pred_check
          %p714 = pneg %p106
        $region114: #{dq_network_forward.4} parent=111 // pred_check_branch
          %716 = sbr.rel (%p714) target = $region116
        $region115: #{dq_network_forward.4} parent=111 // pred_region
          %s717 = sand.u32 %s91, 1
          %s718 = sand.u32 %s91, 1
          %s719 = smul.addr %s718, 32
          %s720 = scalar_lea.vmem [#allocation3], %s719
        $region116: #{dq_network_forward.4} parent=111 // pred_fallthru
          _
      $region112: #{dq_network_forward.4} parent=5 // pred_fallthru
        _
    $region6: #{dq_network_forward.4} parent=1 // loop_footer
      %s13 = sadd.s32 1, %s9
    $region7: #{dq_network_forward.4} parent=1 // loop_footer_branch
      %8 = sbr.rel target = $region3
    $region8: #{dq_network_forward.4} parent=1 // loop_exit
      _

// kernel: dq_network_forward.5
$region0: #{dq_network_forward.5}
  #allocation0 [shape = 'u32[]', space=smem, size = 0x4, offset = 0x4, fixed_abs, tag = 'smem constant byte address 0x4 - core index']
  #allocation1 [shape = 'u32[144,128]{1,0:T(1,128)}', space=vmem, size = 0x12000, scoped, tag = 'internal scratch']
  %s0 = inlined_call_operand.vmem [shape: bf16[64,512], index: 0, kind: input, shape index: {}]
  %s1 = inlined_call_operand.vmem [shape: bf16[512,256], index: 1, kind: input, shape index: {}]
  %s2 = inlined_call_operand.vmem [shape: f32[64,1], index: 2, kind: input, shape index: {}]
  %s3 = inlined_call_operand.vmem [shape: bf16[64,256], index: 3, kind: output, shape index: {}]
  %s4 = sld [smem:[#allocation0]]
  $region22: #{dq_network_forward.5} parent=0
    _
  %s6 = ssub.s32 1, %s4
  %s7 = scalar_select 0, %s6, %s4
  // Predicated region
  $region2: #{dq_network_forward.5} parent=0 // pred_check
    _
  $region3: #{dq_network_forward.5} parent=0 // pred_check_branch
    %9 = sbr.rel (0) target = $region5
  $region4: #{dq_network_forward.5} parent=0 // pred_region
    _
  $region5: #{dq_network_forward.5} parent=0 // pred_fallthru
    _
  // Predicated region
  $region6: #{dq_network_forward.5} parent=0 // pred_check
    _
  $region7: #{dq_network_forward.5} parent=0 // pred_check_branch
    %11 = sbr.rel (0) target = $region9
  $region8: #{dq_network_forward.5} parent=0 // pred_region
    _
  $region9: #{dq_network_forward.5} parent=0 // pred_fallthru
    _
  // Predicated region
  $region10: #{dq_network_forward.5} parent=0 // pred_check
    _
  $region11: #{dq_network_forward.5} parent=0 // pred_check_branch
    %13 = sbr.rel (0) target = $region13
  $region12: #{dq_network_forward.5} parent=0 // pred_region
    _
  $region13: #{dq_network_forward.5} parent=0 // pred_fallthru
    _
  %v14 = vld [vmem:[%s0] sm:$0xff]
  %v15 = vld [vmem:[%s0 + $0x8] sm:$0xff]
  %v16 = vld [vmem:[%s0 + $0x10] sm:$0xff]
  %v17 = vld [vmem:[%s0 + $0x18] sm:$0xff]
  %v18 = vld [vmem:[%s0 + $0x20] sm:$0xff]
  %v19 = vld [vmem:[%s0 + $0x28] sm:$0xff]
  %v20 = vld [vmem:[%s0 + $0x30] sm:$0xff]
  %v21 = vld [vmem:[%s0 + $0x38] sm:$0xff]
  %v22 = vld [vmem:[%s0 + $0x40] sm:$0xff]
  %v23 = vld [vmem:[%s0 + $0x48] sm:$0xff]
  %v24 = vld [vmem:[%s0 + $0x50] sm:$0xff]
  %v25 = vld [vmem:[%s0 + $0x58] sm:$0xff]
  %v26 = vld [vmem:[%s0 + $0x60] sm:$0xff]
  %v27 = vld [vmem:[%s0 + $0x68] sm:$0xff]
  %v28 = vld [vmem:[%s0 + $0x70] sm:$0xff]
  %v29 = vld [vmem:[%s0 + $0x78] sm:$0xff]
  %v30 = vld [vmem:[%s1] sm:$0xff]
  %v31 = vld [vmem:[%s1 + $0x8] sm:$0xff]
  %v32 = vld [vmem:[%s1 + $0x10] sm:$0xff]
  %v33 = vld [vmem:[%s1 + $0x18] sm:$0xff]
  %v34 = vld [vmem:[%s1 + $0x20] sm:$0xff]
  %v35 = vld [vmem:[%s1 + $0x28] sm:$0xff]
  %v36 = vld [vmem:[%s1 + $0x30] sm:$0xff]
  %v37 = vld [vmem:[%s1 + $0x38] sm:$0xff]
  %v38 = vld [vmem:[%s1 + $0x40] sm:$0xff]
  %v39 = vld [vmem:[%s1 + $0x48] sm:$0xff]
  %v40 = vld [vmem:[%s1 + $0x50] sm:$0xff]
  %v41 = vld [vmem:[%s1 + $0x58] sm:$0xff]
  %v42 = vld [vmem:[%s1 + $0x60] sm:$0xff]
  %v43 = vld [vmem:[%s1 + $0x68] sm:$0xff]
  %v44 = vld [vmem:[%s1 + $0x70] sm:$0xff]
  %v45 = vld [vmem:[%s1 + $0x78] sm:$0xff]
  %v46 = vld [vmem:[%s1 + $0x80] sm:$0xff]
  %v47 = vld [vmem:[%s1 + $0x88] sm:$0xff]
  %v48 = vld [vmem:[%s1 + $0x90] sm:$0xff]
  %v49 = vld [vmem:[%s1 + $0x98] sm:$0xff]
  %v50 = vld [vmem:[%s1 + $0xa0] sm:$0xff]
  %v51 = vld [vmem:[%s1 + $0xa8] sm:$0xff]
  %v52 = vld [vmem:[%s1 + $0xb0] sm:$0xff]
  %v53 = vld [vmem:[%s1 + $0xb8] sm:$0xff]
  %v54 = vld [vmem:[%s1 + $0xc0] sm:$0xff]
  %v55 = vld [vmem:[%s1 + $0xc8] sm:$0xff]
  %v56 = vld [vmem:[%s1 + $0xd0] sm:$0xff]
  %v57 = vld [vmem:[%s1 + $0xd8] sm:$0xff]
  %v58 = vld [vmem:[%s1 + $0xe0] sm:$0xff]
  %v59 = vld [vmem:[%s1 + $0xe8] sm:$0xff]
  %v60 = vld [vmem:[%s1 + $0xf0] sm:$0xff]
  %v61 = vld [vmem:[%s1 + $0xf8] sm:$0xff]
  %v62 = vld [vmem:[%s1 + $0x100] sm:$0xff]
  %v63 = vld [vmem:[%s1 + $0x108] sm:$0xff]
  %v64 = vld [vmem:[%s1 + $0x110] sm:$0xff]
  %v65 = vld [vmem:[%s1 + $0x118] sm:$0xff]
  %v66 = vld [vmem:[%s1 + $0x120] sm:$0xff]
  %v67 = vld [vmem:[%s1 + $0x128] sm:$0xff]
  %v68 = vld [vmem:[%s1 + $0x130] sm:$0xff]
  %v69 = vld [vmem:[%s1 + $0x138] sm:$0xff]
  %v70 = vld [vmem:[%s1 + $0x140] sm:$0xff]
  %v71 = vld [vmem:[%s1 + $0x148] sm:$0xff]
  %v72 = vld [vmem:[%s1 + $0x150] sm:$0xff]
  %v73 = vld [vmem:[%s1 + $0x158] sm:$0xff]
  %v74 = vld [vmem:[%s1 + $0x160] sm:$0xff]
  %v75 = vld [vmem:[%s1 + $0x168] sm:$0xff]
  %v76 = vld [vmem:[%s1 + $0x170] sm:$0xff]
  %v77 = vld [vmem:[%s1 + $0x178] sm:$0xff]
  %v78 = vld [vmem:[%s1 + $0x180] sm:$0xff]
  %v79 = vld [vmem:[%s1 + $0x188] sm:$0xff]
  %v80 = vld [vmem:[%s1 + $0x190] sm:$0xff]
  %v81 = vld [vmem:[%s1 + $0x198] sm:$0xff]
  %v82 = vld [vmem:[%s1 + $0x1a0] sm:$0xff]
  %v83 = vld [vmem:[%s1 + $0x1a8] sm:$0xff]
  %v84 = vld [vmem:[%s1 + $0x1b0] sm:$0xff]
  %v85 = vld [vmem:[%s1 + $0x1b8] sm:$0xff]
  %v86 = vld [vmem:[%s1 + $0x1c0] sm:$0xff]
  %v87 = vld [vmem:[%s1 + $0x1c8] sm:$0xff]
  %v88 = vld [vmem:[%s1 + $0x1d0] sm:$0xff]
  %v89 = vld [vmem:[%s1 + $0x1d8] sm:$0xff]
  %v90 = vld [vmem:[%s1 + $0x1e0] sm:$0xff]
  %v91 = vld [vmem:[%s1 + $0x1e8] sm:$0xff]
  %v92 = vld [vmem:[%s1 + $0x1f0] sm:$0xff]
  %v93 = vld [vmem:[%s1 + $0x1f8] sm:$0xff]
  %v94 = vld [vmem:[%s2] sm:$0xff]
  %v95 = vld [vmem:[%s2 + $0x8] sm:$0xff]
  %v96 = vld [vmem:[%s2 + $0x10] sm:$0xff]
  %v97 = vld [vmem:[%s2 + $0x18] sm:$0xff]
  %v98 = vld [vmem:[%s2 + $0x20] sm:$0xff]
  %v99 = vld [vmem:[%s2 + $0x28] sm:$0xff]
  %v100 = vld [vmem:[%s2 + $0x30] sm:$0xff]
  %v101 = vld [vmem:[%s2 + $0x38] sm:$0xff]
  %103 = vset.pattern.permute.xlu0 0
  %104 = vperm.xlu0 %103, %v94
  %v105 = vpop.permute.xlu0 %104
  %108 = vset.pattern.permute.xlu0 0
  %109 = vperm.xlu0 %108, %v95
  %v110 = vpop.permute.xlu0 %109
  %113 = vset.pattern.permute.xlu0 0
  %114 = vperm.xlu0 %113, %v96
  %v115 = vpop.permute.xlu0 %114
  %118 = vset.pattern.permute.xlu0 0
  %119 = vperm.xlu0 %118, %v97
  %v120 = vpop.permute.xlu0 %119
  %123 = vset.pattern.permute.xlu0 0
  %124 = vperm.xlu0 %123, %v98
  %v125 = vpop.permute.xlu0 %124
  %128 = vset.pattern.permute.xlu0 0
  %129 = vperm.xlu0 %128, %v99
  %v130 = vpop.permute.xlu0 %129
  %133 = vset.pattern.permute.xlu0 0
  %134 = vperm.xlu0 %133, %v100
  %v135 = vpop.permute.xlu0 %134
  %138 = vset.pattern.permute.xlu0 0
  %139 = vperm.xlu0 %138, %v101
  %v140 = vpop.permute.xlu0 %139
  %v158 = vunpack.c.l.b16 %v14
  %v159 = vunpack.c.h.b16 %v14
  %v160 = vunpack.c.l.b16 %v15
  %v161 = vunpack.c.h.b16 %v15
  %v162 = vunpack.c.l.b16 %v16
  %v163 = vunpack.c.h.b16 %v16
  %v164 = vunpack.c.l.b16 %v17
  %v165 = vunpack.c.h.b16 %v17
  %v166 = vunpack.c.l.b16 %v18
  %v167 = vunpack.c.h.b16 %v18
  %v168 = vunpack.c.l.b16 %v19
  %v169 = vunpack.c.h.b16 %v19
  %v170 = vunpack.c.l.b16 %v20
  %v171 = vunpack.c.h.b16 %v20
  %v172 = vunpack.c.l.b16 %v21
  %v173 = vunpack.c.h.b16 %v21
  %v174 = vunpack.c.l.b16 %v22
  %v175 = vunpack.c.h.b16 %v22
  %v176 = vunpack.c.l.b16 %v23
  %v177 = vunpack.c.h.b16 %v23
  %v178 = vunpack.c.l.b16 %v24
  %v179 = vunpack.c.h.b16 %v24
  %v180 = vunpack.c.l.b16 %v25
  %v181 = vunpack.c.h.b16 %v25
  %v182 = vunpack.c.l.b16 %v26
  %v183 = vunpack.c.h.b16 %v26
  %v184 = vunpack.c.l.b16 %v27
  %v185 = vunpack.c.h.b16 %v27
  %v186 = vunpack.c.l.b16 %v28
  %v187 = vunpack.c.h.b16 %v28
  %v188 = vunpack.c.l.b16 %v29
  %v189 = vunpack.c.h.b16 %v29
  %v190 = vpack.c.b16 %v162, %v158
  %v191 = vpack.c.b16 %v163, %v159
  %v192 = vpack.c.b16 %v164, %v160
  %v193 = vpack.c.b16 %v165, %v161
  %v194 = vpack.c.b16 %v170, %v166
  %v195 = vpack.c.b16 %v171, %v167
  %v196 = vpack.c.b16 %v172, %v168
  %v197 = vpack.c.b16 %v173, %v169
  %v198 = vpack.c.b16 %v178, %v174
  %v199 = vpack.c.b16 %v179, %v175
  %v200 = vpack.c.b16 %v180, %v176
  %v201 = vpack.c.b16 %v181, %v177
  %v202 = vpack.c.b16 %v186, %v182
  %v203 = vpack.c.b16 %v187, %v183
  %v204 = vpack.c.b16 %v188, %v184
  %v205 = vpack.c.b16 %v189, %v185
  %v286 = vunpack.c.l.b16 %v30
  %v287 = vunpack.c.h.b16 %v30
  %v288 = vunpack.c.l.b16 %v31
  %v289 = vunpack.c.h.b16 %v31
  %v290 = vunpack.c.l.b16 %v32
  %v291 = vunpack.c.h.b16 %v32
  %v292 = vunpack.c.l.b16 %v33
  %v293 = vunpack.c.h.b16 %v33
  %v294 = vunpack.c.l.b16 %v34
  %v295 = vunpack.c.h.b16 %v34
  %v296 = vunpack.c.l.b16 %v35
  %v297 = vunpack.c.h.b16 %v35
  %v298 = vunpack.c.l.b16 %v36
  %v299 = vunpack.c.h.b16 %v36
  %v300 = vunpack.c.l.b16 %v37
  %v301 = vunpack.c.h.b16 %v37
  %v302 = vunpack.c.l.b16 %v38
  %v303 = vunpack.c.h.b16 %v38
  %v304 = vunpack.c.l.b16 %v39
  %v305 = vunpack.c.h.b16 %v39
  %v306 = vunpack.c.l.b16 %v40
  %v307 = vunpack.c.h.b16 %v40
  %v308 = vunpack.c.l.b16 %v41
  %v309 = vunpack.c.h.b16 %v41
  %v310 = vunpack.c.l.b16 %v42
  %v311 = vunpack.c.h.b16 %v42
  %v312 = vunpack.c.l.b16 %v43
  %v313 = vunpack.c.h.b16 %v43
  %v314 = vunpack.c.l.b16 %v44
  %v315 = vunpack.c.h.b16 %v44
  %v316 = vunpack.c.l.b16 %v45
  %v317 = vunpack.c.h.b16 %v45
  %v318 = vunpack.c.l.b16 %v46
  %v319 = vunpack.c.h.b16 %v46
  %v320 = vunpack.c.l.b16 %v47
  %v321 = vunpack.c.h.b16 %v47
  %v322 = vunpack.c.l.b16 %v48
  %v323 = vunpack.c.h.b16 %v48
  %v324 = vunpack.c.l.b16 %v49
  %v325 = vunpack.c.h.b16 %v49
  %v326 = vunpack.c.l.b16 %v50
  %v327 = vunpack.c.h.b16 %v50
  %v328 = vunpack.c.l.b16 %v51
  %v329 = vunpack.c.h.b16 %v51
  %v330 = vunpack.c.l.b16 %v52
  %v331 = vunpack.c.h.b16 %v52
  %v332 = vunpack.c.l.b16 %v53
  %v333 = vunpack.c.h.b16 %v53
  %v334 = vunpack.c.l.b16 %v54
  %v335 = vunpack.c.h.b16 %v54
  %v336 = vunpack.c.l.b16 %v55
  %v337 = vunpack.c.h.b16 %v55
  %v338 = vunpack.c.l.b16 %v56
  %v339 = vunpack.c.h.b16 %v56
  %v340 = vunpack.c.l.b16 %v57
  %v341 = vunpack.c.h.b16 %v57
  %v342 = vunpack.c.l.b16 %v58
  %v343 = vunpack.c.h.b16 %v58
  %v344 = vunpack.c.l.b16 %v59
  %v345 = vunpack.c.h.b16 %v59
  %v346 = vunpack.c.l.b16 %v60
  %v347 = vunpack.c.h.b16 %v60
  %v348 = vunpack.c.l.b16 %v61
  %v349 = vunpack.c.h.b16 %v61
  %v350 = vunpack.c.l.b16 %v62
  %v351 = vunpack.c.h.b16 %v62
  %v352 = vunpack.c.l.b16 %v63
  %v353 = vunpack.c.h.b16 %v63
  %v354 = vunpack.c.l.b16 %v64
  %v355 = vunpack.c.h.b16 %v64
  %v356 = vunpack.c.l.b16 %v65
  %v357 = vunpack.c.h.b16 %v65
  %v358 = vunpack.c.l.b16 %v66
  %v359 = vunpack.c.h.b16 %v66
  %v360 = vunpack.c.l.b16 %v67
  %v361 = vunpack.c.h.b16 %v67
  %v362 = vunpack.c.l.b16 %v68
  %v363 = vunpack.c.h.b16 %v68
  %v364 = vunpack.c.l.b16 %v69
  %v365 = vunpack.c.h.b16 %v69
  %v366 = vunpack.c.l.b16 %v70
  %v367 = vunpack.c.h.b16 %v70
  %v368 = vunpack.c.l.b16 %v71
  %v369 = vunpack.c.h.b16 %v71
  %v370 = vunpack.c.l.b16 %v72
  %v371 = vunpack.c.h.b16 %v72
  %v372 = vunpack.c.l.b16 %v73
  %v373 = vunpack.c.h.b16 %v73
  %v374 = vunpack.c.l.b16 %v74
  %v375 = vunpack.c.h.b16 %v74
  %v376 = vunpack.c.l.b16 %v75
  %v377 = vunpack.c.h.b16 %v75
  %v378 = vunpack.c.l.b16 %v76
  %v379 = vunpack.c.h.b16 %v76
  %v380 = vunpack.c.l.b16 %v77
  %v381 = vunpack.c.h.b16 %v77
  %v382 = vunpack.c.l.b16 %v78
  %v383 = vunpack.c.h.b16 %v78
  %v384 = vunpack.c.l.b16 %v79
  %v385 = vunpack.c.h.b16 %v79
  %v386 = vunpack.c.l.b16 %v80
  %v387 = vunpack.c.h.b16 %v80
  %v388 = vunpack.c.l.b16 %v81
  %v389 = vunpack.c.h.b16 %v81
  %v390 = vunpack.c.l.b16 %v82
  %v391 = vunpack.c.h.b16 %v82
  %v392 = vunpack.c.l.b16 %v83
  %v393 = vunpack.c.h.b16 %v83
  %v394 = vunpack.c.l.b16 %v84
  %v395 = vunpack.c.h.b16 %v84
  %v396 = vunpack.c.l.b16 %v85
  %v397 = vunpack.c.h.b16 %v85
  %v398 = vunpack.c.l.b16 %v86
  %v399 = vunpack.c.h.b16 %v86
  %v400 = vunpack.c.l.b16 %v87
  %v401 = vunpack.c.h.b16 %v87
  %v402 = vunpack.c.l.b16 %v88
  %v403 = vunpack.c.h.b16 %v88
  %v404 = vunpack.c.l.b16 %v89
  %v405 = vunpack.c.h.b16 %v89
  %v406 = vunpack.c.l.b16 %v90
  %v407 = vunpack.c.h.b16 %v90
  %v408 = vunpack.c.l.b16 %v91
  %v409 = vunpack.c.h.b16 %v91
  %v410 = vunpack.c.l.b16 %v92
  %v411 = vunpack.c.h.b16 %v92
  %v412 = vunpack.c.l.b16 %v93
  %v413 = vunpack.c.h.b16 %v93
  %v414 = vpack.c.b16 %v288, %v286
  %v415 = vpack.c.b16 %v289, %v287
  %v416 = vpack.c.b16 %v292, %v290
  %v417 = vpack.c.b16 %v293, %v291
  %v418 = vpack.c.b16 %v296, %v294
  %v419 = vpack.c.b16 %v297, %v295
  %v420 = vpack.c.b16 %v300, %v298
  %v421 = vpack.c.b16 %v301, %v299
  %v422 = vpack.c.b16 %v304, %v302
  %v423 = vpack.c.b16 %v305, %v303
  %v424 = vpack.c.b16 %v308, %v306
  %v425 = vpack.c.b16 %v309, %v307
  %v426 = vpack.c.b16 %v312, %v310
  %v427 = vpack.c.b16 %v313, %v311
  %v428 = vpack.c.b16 %v316, %v314
  %v429 = vpack.c.b16 %v317, %v315
  %v430 = vpack.c.b16 %v320, %v318
  %v431 = vpack.c.b16 %v321, %v319
  %v432 = vpack.c.b16 %v324, %v322
  %v433 = vpack.c.b16 %v325, %v323
  %v434 = vpack.c.b16 %v328, %v326
  %v435 = vpack.c.b16 %v329, %v327
  %v436 = vpack.c.b16 %v332, %v330
  %v437 = vpack.c.b16 %v333, %v331
  %v438 = vpack.c.b16 %v336, %v334
  %v439 = vpack.c.b16 %v337, %v335
  %v440 = vpack.c.b16 %v340, %v338
  %v441 = vpack.c.b16 %v341, %v339
  %v442 = vpack.c.b16 %v344, %v342
  %v443 = vpack.c.b16 %v345, %v343
  %v444 = vpack.c.b16 %v348, %v346
  %v445 = vpack.c.b16 %v349, %v347
  %v446 = vpack.c.b16 %v352, %v350
  %v447 = vpack.c.b16 %v353, %v351
  %v448 = vpack.c.b16 %v356, %v354
  %v449 = vpack.c.b16 %v357, %v355
  %v450 = vpack.c.b16 %v360, %v358
  %v451 = vpack.c.b16 %v361, %v359
  %v452 = vpack.c.b16 %v364, %v362
  %v453 = vpack.c.b16 %v365, %v363
  %v454 = vpack.c.b16 %v368, %v366
  %v455 = vpack.c.b16 %v369, %v367
  %v456 = vpack.c.b16 %v372, %v370
  %v457 = vpack.c.b16 %v373, %v371
  %v458 = vpack.c.b16 %v376, %v374
  %v459 = vpack.c.b16 %v377, %v375
  %v460 = vpack.c.b16 %v380, %v378
  %v461 = vpack.c.b16 %v381, %v379
  %v462 = vpack.c.b16 %v384, %v382
  %v463 = vpack.c.b16 %v385, %v383
  %v464 = vpack.c.b16 %v388, %v386
  %v465 = vpack.c.b16 %v389, %v387
  %v466 = vpack.c.b16 %v392, %v390
  %v467 = vpack.c.b16 %v393, %v391
  %v468 = vpack.c.b16 %v396, %v394
  %v469 = vpack.c.b16 %v397, %v395
  %v470 = vpack.c.b16 %v400, %v398
  %v471 = vpack.c.b16 %v401, %v399
  %v472 = vpack.c.b16 %v404, %v402
  %v473 = vpack.c.b16 %v405, %v403
  %v474 = vpack.c.b16 %v408, %v406
  %v475 = vpack.c.b16 %v409, %v407
  %v476 = vpack.c.b16 %v412, %v410
  %v477 = vpack.c.b16 %v413, %v411
  %542 = vmatprep.subr.bf16.mxu0 %v415
  %543 = vmatpush1.bf16.msra.mxu0 %v414
  %544 = vmatprep.subr.bf16.mxu0 %v417
  %545 = vmatpush1.bf16.msra.mxu0 %v416
  %546 = vmatprep.subr.bf16.mxu0 %v419
  %547 = vmatpush1.bf16.msra.mxu0 %v418
  %548 = vmatprep.subr.bf16.mxu0 %v421
  %549 = vmatpush1.bf16.msra.mxu0 %v420
  %550 = vmatprep.subr.bf16.mxu0 %v423
  %551 = vmatpush1.bf16.msra.mxu0 %v422
  %552 = vmatprep.subr.bf16.mxu0 %v425
  %553 = vmatpush1.bf16.msra.mxu0 %v424
  %554 = vmatprep.subr.bf16.mxu0 %v427
  %555 = vmatpush1.bf16.msra.mxu0 %v426
  %556 = vmatprep.subr.bf16.mxu0 %v429
  %557 = vmatpush1.bf16.msra.mxu0 %v428
  %558 = vmatprep.subr.bf16.mxu0 %v431
  %559 = vmatpush1.bf16.msra.mxu0 %v430
  %560 = vmatprep.subr.bf16.mxu0 %v433
  %561 = vmatpush1.bf16.msra.mxu0 %v432
  %562 = vmatprep.subr.bf16.mxu0 %v435
  %563 = vmatpush1.bf16.msra.mxu0 %v434
  %564 = vmatprep.subr.bf16.mxu0 %v437
  %565 = vmatpush1.bf16.msra.mxu0 %v436
  %566 = vmatprep.subr.bf16.mxu0 %v439
  %567 = vmatpush1.bf16.msra.mxu0 %v438
  %568 = vmatprep.subr.bf16.mxu0 %v441
  %569 = vmatpush1.bf16.msra.mxu0 %v440
  %570 = vmatprep.subr.bf16.mxu0 %v443
  %571 = vmatpush1.bf16.msra.mxu0 %v442
  %572 = vmatprep.subr.bf16.mxu0 %v445
  %573 = vmatpush1.bf16.msra.mxu0 %v444
  %574 = vmatprep.mubr.bf16.mxu0 %v191
  %575 = vmatmul.mubr.bf16.gmra.mrb[0].mxu0 %v190
  %v576 = vpop.f32.mrb[0].mxu0
  %v577 = vadd.f32 %v105, %v576
  %v578 = vpop.f32.mrb[0].mxu0
  %v579 = vadd.f32 %v105, %v578
  %v580 = vpop.f32.mrb[0].mxu0
  %v581 = vadd.f32 %v110, %v580
  %v582 = vpop.f32.mrb[0].mxu0
  %v583 = vadd.f32 %v110, %v582
  %584 = vmatprep.mubr.bf16.mxu0 %v195
  %585 = vmatmul.mubr.bf16.gmra.mrb[0].mxu0 %v194
  %v586 = vpop.f32.mrb[0].mxu0
  %v587 = vadd.f32 %v115, %v586
  %v588 = vpop.f32.mrb[0].mxu0
  %v589 = vadd.f32 %v115, %v588
  %v590 = vpop.f32.mrb[0].mxu0
  %v591 = vadd.f32 %v120, %v590
  %v592 = vpop.f32.mrb[0].mxu0
  %v593 = vadd.f32 %v120, %v592
  %594 = vmatprep.mubr.bf16.mxu0 %v199
  %595 = vmatmul.mubr.bf16.gmra.mrb[0].mxu0 %v198
  %v596 = vpop.f32.mrb[0].mxu0
  %v597 = vadd.f32 %v125, %v596
  %v598 = vpop.f32.mrb[0].mxu0
  %v599 = vadd.f32 %v125, %v598
  %v600 = vpop.f32.mrb[0].mxu0
  %v601 = vadd.f32 %v130, %v600
  %v602 = vpop.f32.mrb[0].mxu0
  %v603 = vadd.f32 %v130, %v602
  %604 = vmatprep.mubr.bf16.mxu0 %v203
  %605 = vmatmul.mubr.bf16.gmra.mrb[0].mxu0 %v202
  %v606 = vpop.f32.mrb[0].mxu0
  %v607 = vadd.f32 %v135, %v606
  %v608 = vpop.f32.mrb[0].mxu0
  %v609 = vadd.f32 %v135, %v608
  %v610 = vpop.f32.mrb[0].mxu0
  %v611 = vadd.f32 %v140, %v610
  %v612 = vpop.f32.mrb[0].mxu0
  %v613 = vadd.f32 %v140, %v612
  %614 = vdwg.mxu0
  %615 = vmatprep.subr.bf16.mxu0 %v447
  %616 = vmatpush1.bf16.msra.mxu0 %v446
  %617 = vmatprep.subr.bf16.mxu0 %v449
  %618 = vmatpush1.bf16.msra.mxu0 %v448
  %619 = vmatprep.subr.bf16.mxu0 %v451
  %620 = vmatpush1.bf16.msra.mxu0 %v450
  %621 = vmatprep.subr.bf16.mxu0 %v453
  %622 = vmatpush1.bf16.msra.mxu0 %v452
  %623 = vmatprep.subr.bf16.mxu0 %v455
  %624 = vmatpush1.bf16.msra.mxu0 %v454
  %625 = vmatprep.subr.bf16.mxu0 %v457
  %626 = vmatpush1.bf16.msra.mxu0 %v456
  %627 = vmatprep.subr.bf16.mxu0 %v459
  %628 = vmatpush1.bf16.msra.mxu0 %v458
  %629 = vmatprep.subr.bf16.mxu0 %v461
  %630 = vmatpush1.bf16.msra.mxu0 %v460
  %631 = vmatprep.subr.bf16.mxu0 %v463
  %632 = vmatpush1.bf16.msra.mxu0 %v462
  %633 = vmatprep.subr.bf16.mxu0 %v465
  %634 = vmatpush1.bf16.msra.mxu0 %v464
  %635 = vmatprep.subr.bf16.mxu0 %v467
  %636 = vmatpush1.bf16.msra.mxu0 %v466
  %637 = vmatprep.subr.bf16.mxu0 %v469
  %638 = vmatpush1.bf16.msra.mxu0 %v468
  %639 = vmatprep.subr.bf16.mxu0 %v471
  %640 = vmatpush1.bf16.msra.mxu0 %v470
  %641 = vmatprep.subr.bf16.mxu0 %v473
  %642 = vmatpush1.bf16.msra.mxu0 %v472
  %643 = vmatprep.subr.bf16.mxu0 %v475
  %644 = vmatpush1.bf16.msra.mxu0 %v474
  %645 = vmatprep.subr.bf16.mxu0 %v477
  %646 = vmatpush1.bf16.msra.mxu0 %v476
  %647 = vmatprep.mubr.bf16.mxu0 %v193
  %648 = vmatmul.mubr.bf16.gmra.mrb[0].mxu0 %v192
  %v649 = vpop.f32.mrb[0].mxu0
  %v650 = vadd.f32 %v577, %v649
  %v651 = vpop.f32.mrb[0].mxu0
  %v652 = vadd.f32 %v579, %v651
  %v653 = vpop.f32.mrb[0].mxu0
  %v654 = vadd.f32 %v581, %v653
  %v655 = vpop.f32.mrb[0].mxu0
  %v656 = vadd.f32 %v583, %v655
  %657 = vmatprep.mubr.bf16.mxu0 %v197
  %658 = vmatmul.mubr.bf16.gmra.mrb[0].mxu0 %v196
  %v659 = vpop.f32.mrb[0].mxu0
  %v660 = vadd.f32 %v587, %v659
  %v661 = vpop.f32.mrb[0].mxu0
  %v662 = vadd.f32 %v589, %v661
  %v663 = vpop.f32.mrb[0].mxu0
  %v664 = vadd.f32 %v591, %v663
  %v665 = vpop.f32.mrb[0].mxu0
  %v666 = vadd.f32 %v593, %v665
  %667 = vmatprep.mubr.bf16.mxu0 %v201
  %668 = vmatmul.mubr.bf16.gmra.mrb[0].mxu0 %v200
  %v669 = vpop.f32.mrb[0].mxu0
  %v670 = vadd.f32 %v597, %v669
  %v671 = vpop.f32.mrb[0].mxu0
  %v672 = vadd.f32 %v599, %v671
  %v673 = vpop.f32.mrb[0].mxu0
  %v674 = vadd.f32 %v601, %v673
  %v675 = vpop.f32.mrb[0].mxu0
  %v676 = vadd.f32 %v603, %v675
  %677 = vmatprep.mubr.bf16.mxu0 %v205
  %678 = vmatmul.mubr.bf16.gmra.mrb[0].mxu0 %v204
  %v679 = vpop.f32.mrb[0].mxu0
  %v680 = vadd.f32 %v607, %v679
  %v681 = vpop.f32.mrb[0].mxu0
  %v682 = vadd.f32 %v609, %v681
  %v683 = vpop.f32.mrb[0].mxu0
  %v684 = vadd.f32 %v611, %v683
  %v685 = vpop.f32.mrb[0].mxu0
  %v686 = vadd.f32 %v613, %v685
  %687 = vdwg.mxu0
  %v688 = vmax.f32 %v650, 0.0
  %v689 = vmax.f32 %v652, 0.0
  %v690 = vmax.f32 %v654, 0.0
  %v691 = vmax.f32 %v656, 0.0
  %v692 = vmax.f32 %v660, 0.0
  %v693 = vmax.f32 %v662, 0.0
  %v694 = vmax.f32 %v664, 0.0
  %v695 = vmax.f32 %v666, 0.0
  %v696 = vmax.f32 %v670, 0.0
  %v697 = vmax.f32 %v672, 0.0
  %v698 = vmax.f32 %v674, 0.0
  %v699 = vmax.f32 %v676, 0.0
  %v700 = vmax.f32 %v680, 0.0
  %v701 = vmax.f32 %v682, 0.0
  %v702 = vmax.f32 %v684, 0.0
  %v703 = vmax.f32 %v686, 0.0
  %v704 = vpack.c.bf16 %v690, %v688
  %v705 = vpack.c.bf16 %v691, %v689
  %v706 = vpack.c.bf16 %v694, %v692
  %v707 = vpack.c.bf16 %v695, %v693
  %v708 = vpack.c.bf16 %v698, %v696
  %v709 = vpack.c.bf16 %v699, %v697
  %v710 = vpack.c.bf16 %v702, %v700
  %v711 = vpack.c.bf16 %v703, %v701
  %v720 = vunpack.c.l.b16 %v704
  %v721 = vunpack.c.l.b16 %v705
  %v722 = vunpack.c.h.b16 %v704
  %v723 = vunpack.c.h.b16 %v705
  %v724 = vunpack.c.l.b16 %v706
  %v725 = vunpack.c.l.b16 %v707
  %v726 = vunpack.c.h.b16 %v706
  %v727 = vunpack.c.h.b16 %v707
  %v728 = vunpack.c.l.b16 %v708
  %v729 = vunpack.c.l.b16 %v709
  %v730 = vunpack.c.h.b16 %v708
  %v731 = vunpack.c.h.b16 %v709
  %v732 = vunpack.c.l.b16 %v710
  %v733 = vunpack.c.l.b16 %v711
  %v734 = vunpack.c.h.b16 %v710
  %v735 = vunpack.c.h.b16 %v711
  %v736 = vpack.c.b16 %v721, %v720
  %v737 = vpack.c.b16 %v723, %v722
  %v738 = vpack.c.b16 %v725, %v724
  %v739 = vpack.c.b16 %v727, %v726
  %v740 = vpack.c.b16 %v729, %v728
  %v741 = vpack.c.b16 %v731, %v730
  %v742 = vpack.c.b16 %v733, %v732
  %v743 = vpack.c.b16 %v735, %v734
  %752 = vst [vmem:[%s3] sm:$0xff] %v736
  %753 = vst [vmem:[%s3 + $0x8] sm:$0xff] %v737
  %754 = vst [vmem:[%s3 + $0x10] sm:$0xff] %v738
  %755 = vst [vmem:[%s3 + $0x18] sm:$0xff] %v739
  %756 = vst [vmem:[%s3 + $0x20] sm:$0xff] %v740
  %757 = vst [vmem:[%s3 + $0x28] sm:$0xff] %v741
  %758 = vst [vmem:[%s3 + $0x30] sm:$0xff] %v742
  %759 = vst [vmem:[%s3 + $0x38] sm:$0xff] %v743
  // Predicated region
  $region14: #{dq_network_forward.5} parent=0 // pred_check
    _
  $region15: #{dq_network_forward.5} parent=0 // pred_check_branch
    %761 = sbr.rel (0) target = $region17
  $region16: #{dq_network_forward.5} parent=0 // pred_region
    _
  $region17: #{dq_network_forward.5} parent=0 // pred_fallthru
    _
  // Predicated region
  $region18: #{dq_network_forward.5} parent=0 // pred_check
    _
  $region19: #{dq_network_forward.5} parent=0 // pred_check_branch
    %763 = sbr.rel (0) target = $region21
  $region20: #{dq_network_forward.5} parent=0 // pred_region
    _
  $region21: #{dq_network_forward.5} parent=0 // pred_fallthru
    _

// kernel: dq_network_forward.6
$region0: #{dq_network_forward.6}
  #allocation0 [shape = 'u32[]', space=smem, size = 0x4, offset = 0x4, fixed_abs, tag = 'smem constant byte address 0x4 - core index']
  #allocation1 [shape = 'u32[144,128]{1,0:T(1,128)}', space=vmem, size = 0x12000, scoped, tag = 'internal scratch']
  %s0 = inlined_call_operand.vmem [shape: bf16[64,640], index: 0, kind: input, shape index: {}]
  %s1 = inlined_call_operand.vmem [shape: bf16[640,256], index: 1, kind: input, shape index: {}]
  %s2 = inlined_call_operand.vmem [shape: f32[64,1], index: 2, kind: input, shape index: {}]
  %s3 = inlined_call_operand.vmem [shape: bf16[64,256], index: 3, kind: output, shape index: {}]
  %s4 = sld [smem:[#allocation0]]
  $region22: #{dq_network_forward.6} parent=0
    _
  %s6 = ssub.s32 1, %s4
  %s7 = scalar_select 0, %s6, %s4
  // Predicated region
  $region2: #{dq_network_forward.6} parent=0 // pred_check
    _
  $region3: #{dq_network_forward.6} parent=0 // pred_check_branch
    %9 = sbr.rel (0) target = $region5
  $region4: #{dq_network_forward.6} parent=0 // pred_region
    _
  $region5: #{dq_network_forward.6} parent=0 // pred_fallthru
    _
  // Predicated region
  $region6: #{dq_network_forward.6} parent=0 // pred_check
    _
  $region7: #{dq_network_forward.6} parent=0 // pred_check_branch
    %11 = sbr.rel (0) target = $region9
  $region8: #{dq_network_forward.6} parent=0 // pred_region
    _
  $region9: #{dq_network_forward.6} parent=0 // pred_fallthru
    _
  // Predicated region
  $region10: #{dq_network_forward.6} parent=0 // pred_check
    _
  $region11: #{dq_network_forward.6} parent=0 // pred_check_branch
    %13 = sbr.rel (0) target = $region13
  $region12: #{dq_network_forward.6} parent=0 // pred_region
    _
  $region13: #{dq_network_forward.6} parent=0 // pred_fallthru
    _
  %v15 = vld [vmem:[%s0] sm:$0xff]
  %v16 = vld [vmem:[%s0 + $0x8] sm:$0xff]
  %v17 = vld [vmem:[%s0 + $0x10] sm:$0xf]
  %v18 = vld [vmem:[%s0 + $0x14] sm:$0xff]
  %v19 = vld [vmem:[%s0 + $0x1c] sm:$0xff]
  %v20 = vld [vmem:[%s0 + $0x24] sm:$0xf]
  %v21 = vld [vmem:[%s0 + $0x28] sm:$0xff]
  %v22 = vld [vmem:[%s0 + $0x30] sm:$0xff]
  %v23 = vld [vmem:[%s0 + $0x38] sm:$0xf]
  %v24 = vld [vmem:[%s0 + $0x3c] sm:$0xff]
  %v25 = vld [vmem:[%s0 + $0x44] sm:$0xff]
  %v26 = vld [vmem:[%s0 + $0x4c] sm:$0xf]
  %v27 = vld [vmem:[%s0 + $0x50] sm:$0xff]
  %v28 = vld [vmem:[%s0 + $0x58] sm:$0xff]
  %v29 = vld [vmem:[%s0 + $0x60] sm:$0xf]
  %v30 = vld [vmem:[%s0 + $0x64] sm:$0xff]
  %v31 = vld [vmem:[%s0 + $0x6c] sm:$0xff]
  %v32 = vld [vmem:[%s0 + $0x74] sm:$0xf]
  %v33 = vld [vmem:[%s0 + $0x78] sm:$0xff]
  %v34 = vld [vmem:[%s0 + $0x80] sm:$0xff]
  %v35 = vld [vmem:[%s0 + $0x88] sm:$0xf]
  %v36 = vld [vmem:[%s0 + $0x8c] sm:$0xff]
  %v37 = vld [vmem:[%s0 + $0x94] sm:$0xff]
  %v38 = vld [vmem:[%s0 + $0x9c] sm:$0xf]
  %v39 = vld [vmem:[%s1] sm:$0xff]
  %v40 = vld [vmem:[%s1 + $0x8] sm:$0xff]
  %v41 = vld [vmem:[%s1 + $0x10] sm:$0xff]
  %v42 = vld [vmem:[%s1 + $0x18] sm:$0xff]
  %v43 = vld [vmem:[%s1 + $0x20] sm:$0xff]
  %v44 = vld [vmem:[%s1 + $0x28] sm:$0xff]
  %v45 = vld [vmem:[%s1 + $0x30] sm:$0xff]
  %v46 = vld [vmem:[%s1 + $0x38] sm:$0xff]
  %v47 = vld [vmem:[%s1 + $0x40] sm:$0xff]
  %v48 = vld [vmem:[%s1 + $0x48] sm:$0xff]
  %v49 = vld [vmem:[%s1 + $0x50] sm:$0xff]
  %v50 = vld [vmem:[%s1 + $0x58] sm:$0xff]
  %v51 = vld [vmem:[%s1 + $0x60] sm:$0xff]
  %v52 = vld [vmem:[%s1 + $0x68] sm:$0xff]
  %v53 = vld [vmem:[%s1 + $0x70] sm:$0xff]
  %v54 = vld [vmem:[%s1 + $0x78] sm:$0xff]
  %v55 = vld [vmem:[%s1 + $0x80] sm:$0xff]
  %v56 = vld [vmem:[%s1 + $0x88] sm:$0xff]
  %v57 = vld [vmem:[%s1 + $0x90] sm:$0xff]
  %v58 = vld [vmem:[%s1 + $0x98] sm:$0xff]
  %v59 = vld [vmem:[%s1 + $0xa0] sm:$0xff]
  %v60 = vld [vmem:[%s1 + $0xa8] sm:$0xff]
  %v61 = vld [vmem:[%s1 + $0xb0] sm:$0xff]
  %v62 = vld [vmem:[%s1 + $0xb8] sm:$0xff]
  %v63 = vld [vmem:[%s1 + $0xc0] sm:$0xff]
  %v64 = vld [vmem:[%s1 + $0xc8] sm:$0xff]
  %v65 = vld [vmem:[%s1 + $0xd0] sm:$0xff]
  %v66 = vld [vmem:[%s1 + $0xd8] sm:$0xff]
  %v67 = vld [vmem:[%s1 + $0xe0] sm:$0xff]
  %v68 = vld [vmem:[%s1 + $0xe8] sm:$0xff]
  %v69 = vld [vmem:[%s1 + $0xf0] sm:$0xff]
  %v70 = vld [vmem:[%s1 + $0xf8] sm:$0xff]
  %v71 = vld [vmem:[%s1 + $0x100] sm:$0xff]
  %v72 = vld [vmem:[%s1 + $0x108] sm:$0xff]
  %v73 = vld [vmem:[%s1 + $0x110] sm:$0xff]
  %v74 = vld [vmem:[%s1 + $0x118] sm:$0xff]
  %v75 = vld [vmem:[%s1 + $0x120] sm:$0xff]
  %v76 = vld [vmem:[%s1 + $0x128] sm:$0xff]
  %v77 = vld [vmem:[%s1 + $0x130] sm:$0xff]
  %v78 = vld [vmem:[%s1 + $0x138] sm:$0xff]
  %v79 = vld [vmem:[%s1 + $0x140] sm:$0xff]
  %v80 = vld [vmem:[%s1 + $0x148] sm:$0xff]
  %v81 = vld [vmem:[%s1 + $0x150] sm:$0xff]
  %v82 = vld [vmem:[%s1 + $0x158] sm:$0xff]
  %v83 = vld [vmem:[%s1 + $0x160] sm:$0xff]
  %v84 = vld [vmem:[%s1 + $0x168] sm:$0xff]
  %v85 = vld [vmem:[%s1 + $0x170] sm:$0xff]
  %v86 = vld [vmem:[%s1 + $0x178] sm:$0xff]
  %v87 = vld [vmem:[%s1 + $0x180] sm:$0xff]
  %v88 = vld [vmem:[%s1 + $0x188] sm:$0xff]
  %v89 = vld [vmem:[%s1 + $0x190] sm:$0xff]
  %v90 = vld [vmem:[%s1 + $0x198] sm:$0xff]
  %v91 = vld [vmem:[%s1 + $0x1a0] sm:$0xff]
  %v92 = vld [vmem:[%s1 + $0x1a8] sm:$0xff]
  %v93 = vld [vmem:[%s1 + $0x1b0] sm:$0xff]
  %v94 = vld [vmem:[%s1 + $0x1b8] sm:$0xff]
  %v95 = vld [vmem:[%s1 + $0x1c0] sm:$0xff]
  %v96 = vld [vmem:[%s1 + $0x1c8] sm:$0xff]
  %v97 = vld [vmem:[%s1 + $0x1d0] sm:$0xff]
  %v98 = vld [vmem:[%s1 + $0x1d8] sm:$0xff]
  %v99 = vld [vmem:[%s1 + $0x1e0] sm:$0xff]
  %v100 = vld [vmem:[%s1 + $0x1e8] sm:$0xff]
  %v101 = vld [vmem:[%s1 + $0x1f0] sm:$0xff]
  %v102 = vld [vmem:[%s1 + $0x1f8] sm:$0xff]
  %v103 = vld [vmem:[%s1 + $0x200] sm:$0xff]
  %v104 = vld [vmem:[%s1 + $0x208] sm:$0xff]
  %v105 = vld [vmem:[%s1 + $0x210] sm:$0xff]
  %v106 = vld [vmem:[%s1 + $0x218] sm:$0xff]
  %v107 = vld [vmem:[%s1 + $0x220] sm:$0xff]
  %v108 = vld [vmem:[%s1 + $0x228] sm:$0xff]
  %v109 = vld [vmem:[%s1 + $0x230] sm:$0xff]
  %v110 = vld [vmem:[%s1 + $0x238] sm:$0xff]
  %v111 = vld [vmem:[%s1 + $0x240] sm:$0xff]
  %v112 = vld [vmem:[%s1 + $0x248] sm:$0xff]
  %v113 = vld [vmem:[%s1 + $0x250] sm:$0xff]
  %v114 = vld [vmem:[%s1 + $0x258] sm:$0xff]
  %v115 = vld [vmem:[%s1 + $0x260] sm:$0xff]
  %v116 = vld [vmem:[%s1 + $0x268] sm:$0xff]
  %v117 = vld [vmem:[%s1 + $0x270] sm:$0xff]
  %v118 = vld [vmem:[%s1 + $0x278] sm:$0xff]
  %v119 = vld [vmem:[%s2] sm:$0xff]
  %v120 = vld [vmem:[%s2 + $0x8] sm:$0xff]
  %v121 = vld [vmem:[%s2 + $0x10] sm:$0xff]
  %v122 = vld [vmem:[%s2 + $0x18] sm:$0xff]
  %v123 = vld [vmem:[%s2 + $0x20] sm:$0xff]
  %v124 = vld [vmem:[%s2 + $0x28] sm:$0xff]
  %v125 = vld [vmem:[%s2 + $0x30] sm:$0xff]
  %v126 = vld [vmem:[%s2 + $0x38] sm:$0xff]
  %128 = vset.pattern.permute.xlu0 0
  %129 = vperm.xlu0 %128, %v119
  %v130 = vpop.permute.xlu0 %129
  %133 = vset.pattern.permute.xlu0 0
  %134 = vperm.xlu0 %133, %v120
  %v135 = vpop.permute.xlu0 %134
  %138 = vset.pattern.permute.xlu0 0
  %139 = vperm.xlu0 %138, %v121
  %v140 = vpop.permute.xlu0 %139
  %143 = vset.pattern.permute.xlu0 0
  %144 = vperm.xlu0 %143, %v122
  %v145 = vpop.permute.xlu0 %144
  %148 = vset.pattern.permute.xlu0 0
  %149 = vperm.xlu0 %148, %v123
  %v150 = vpop.permute.xlu0 %149
  %153 = vset.pattern.permute.xlu0 0
  %154 = vperm.xlu0 %153, %v124
  %v155 = vpop.permute.xlu0 %154
  %158 = vset.pattern.permute.xlu0 0
  %159 = vperm.xlu0 %158, %v125
  %v160 = vpop.permute.xlu0 %159
  %163 = vset.pattern.permute.xlu0 0
  %164 = vperm.xlu0 %163, %v126
  %v165 = vpop.permute.xlu0 %164
  %v191 = vunpack.c.l.b16 %v15
  %v192 = vunpack.c.h.b16 %v15
  %v193 = vunpack.c.l.b16 %v16
  %v194 = vunpack.c.h.b16 %v16
  %v195 = vunpack.c.l.b16 %v17
  %v196 = vunpack.c.l.b16 %v18
  %v197 = vunpack.c.h.b16 %v18
  %v198 = vunpack.c.l.b16 %v19
  %v199 = vunpack.c.h.b16 %v19
  %v200 = vunpack.c.l.b16 %v20
  %v201 = vunpack.c.l.b16 %v21
  %v202 = vunpack.c.h.b16 %v21
  %v203 = vunpack.c.l.b16 %v22
  %v204 = vunpack.c.h.b16 %v22
  %v205 = vunpack.c.l.b16 %v23
  %v206 = vunpack.c.l.b16 %v24
  %v207 = vunpack.c.h.b16 %v24
  %v208 = vunpack.c.l.b16 %v25
  %v209 = vunpack.c.h.b16 %v25
  %v210 = vunpack.c.l.b16 %v26
  %v211 = vunpack.c.l.b16 %v27
  %v212 = vunpack.c.h.b16 %v27
  %v213 = vunpack.c.l.b16 %v28
  %v214 = vunpack.c.h.b16 %v28
  %v215 = vunpack.c.l.b16 %v29
  %v216 = vunpack.c.l.b16 %v30
  %v217 = vunpack.c.h.b16 %v30
  %v218 = vunpack.c.l.b16 %v31
  %v219 = vunpack.c.h.b16 %v31
  %v220 = vunpack.c.l.b16 %v32
  %v221 = vunpack.c.l.b16 %v33
  %v222 = vunpack.c.h.b16 %v33
  %v223 = vunpack.c.l.b16 %v34
  %v224 = vunpack.c.h.b16 %v34
  %v225 = vunpack.c.l.b16 %v35
  %v226 = vunpack.c.l.b16 %v36
  %v227 = vunpack.c.h.b16 %v36
  %v228 = vunpack.c.l.b16 %v37
  %v229 = vunpack.c.h.b16 %v37
  %v230 = vunpack.c.l.b16 %v38
  %v231 = vpack.c.b16 %v196, %v191
  %v232 = vpack.c.b16 %v197, %v192
  %v233 = vpack.c.b16 %v198, %v193
  %v234 = vpack.c.b16 %v199, %v194
  %v235 = vpack.c.b16 %v200, %v195
  %v236 = vpack.c.b16 %v206, %v201
  %v237 = vpack.c.b16 %v207, %v202
  %v238 = vpack.c.b16 %v208, %v203
  %v239 = vpack.c.b16 %v209, %v204
  %v240 = vpack.c.b16 %v210, %v205
  %v241 = vpack.c.b16 %v216, %v211
  %v242 = vpack.c.b16 %v217, %v212
  %v243 = vpack.c.b16 %v218, %v213
  %v244 = vpack.c.b16 %v219, %v214
  %v245 = vpack.c.b16 %v220, %v215
  %v246 = vpack.c.b16 %v226, %v221
  %v247 = vpack.c.b16 %v227, %v222
  %v248 = vpack.c.b16 %v228, %v223
  %v249 = vpack.c.b16 %v229, %v224
  %v250 = vpack.c.b16 %v230, %v225
  %v351 = vunpack.c.l.b16 %v39
  %v352 = vunpack.c.h.b16 %v39
  %v353 = vunpack.c.l.b16 %v40
  %v354 = vunpack.c.h.b16 %v40
  %v355 = vunpack.c.l.b16 %v41
  %v356 = vunpack.c.h.b16 %v41
  %v357 = vunpack.c.l.b16 %v42
  %v358 = vunpack.c.h.b16 %v42
  %v359 = vunpack.c.l.b16 %v43
  %v360 = vunpack.c.h.b16 %v43
  %v361 = vunpack.c.l.b16 %v44
  %v362 = vunpack.c.h.b16 %v44
  %v363 = vunpack.c.l.b16 %v45
  %v364 = vunpack.c.h.b16 %v45
  %v365 = vunpack.c.l.b16 %v46
  %v366 = vunpack.c.h.b16 %v46
  %v367 = vunpack.c.l.b16 %v47
  %v368 = vunpack.c.h.b16 %v47
  %v369 = vunpack.c.l.b16 %v48
  %v370 = vunpack.c.h.b16 %v48
  %v371 = vunpack.c.l.b16 %v49
  %v372 = vunpack.c.h.b16 %v49
  %v373 = vunpack.c.l.b16 %v50
  %v374 = vunpack.c.h.b16 %v50
  %v375 = vunpack.c.l.b16 %v51
  %v376 = vunpack.c.h.b16 %v51
  %v377 = vunpack.c.l.b16 %v52
  %v378 = vunpack.c.h.b16 %v52
  %v379 = vunpack.c.l.b16 %v53
  %v380 = vunpack.c.h.b16 %v53
  %v381 = vunpack.c.l.b16 %v54
  %v382 = vunpack.c.h.b16 %v54
  %v383 = vunpack.c.l.b16 %v55
  %v384 = vunpack.c.h.b16 %v55
  %v385 = vunpack.c.l.b16 %v56
  %v386 = vunpack.c.h.b16 %v56
  %v387 = vunpack.c.l.b16 %v57
  %v388 = vunpack.c.h.b16 %v57
  %v389 = vunpack.c.l.b16 %v58
  %v390 = vunpack.c.h.b16 %v58
  %v391 = vunpack.c.l.b16 %v59
  %v392 = vunpack.c.h.b16 %v59
  %v393 = vunpack.c.l.b16 %v60
  %v394 = vunpack.c.h.b16 %v60
  %v395 = vunpack.c.l.b16 %v61
  %v396 = vunpack.c.h.b16 %v61
  %v397 = vunpack.c.l.b16 %v62
  %v398 = vunpack.c.h.b16 %v62
  %v399 = vunpack.c.l.b16 %v63
  %v400 = vunpack.c.h.b16 %v63
  %v401 = vunpack.c.l.b16 %v64
  %v402 = vunpack.c.h.b16 %v64
  %v403 = vunpack.c.l.b16 %v65
  %v404 = vunpack.c.h.b16 %v65
  %v405 = vunpack.c.l.b16 %v66
  %v406 = vunpack.c.h.b16 %v66
  %v407 = vunpack.c.l.b16 %v67
  %v408 = vunpack.c.h.b16 %v67
  %v409 = vunpack.c.l.b16 %v68
  %v410 = vunpack.c.h.b16 %v68
  %v411 = vunpack.c.l.b16 %v69
  %v412 = vunpack.c.h.b16 %v69
  %v413 = vunpack.c.l.b16 %v70
  %v414 = vunpack.c.h.b16 %v70
  %v415 = vunpack.c.l.b16 %v71
  %v416 = vunpack.c.h.b16 %v71
  %v417 = vunpack.c.l.b16 %v72
  %v418 = vunpack.c.h.b16 %v72
  %v419 = vunpack.c.l.b16 %v73
  %v420 = vunpack.c.h.b16 %v73
  %v421 = vunpack.c.l.b16 %v74
  %v422 = vunpack.c.h.b16 %v74
  %v423 = vunpack.c.l.b16 %v75
  %v424 = vunpack.c.h.b16 %v75
  %v425 = vunpack.c.l.b16 %v76
  %v426 = vunpack.c.h.b16 %v76
  %v427 = vunpack.c.l.b16 %v77
  %v428 = vunpack.c.h.b16 %v77
  %v429 = vunpack.c.l.b16 %v78
  %v430 = vunpack.c.h.b16 %v78
  %v431 = vunpack.c.l.b16 %v79
  %v432 = vunpack.c.h.b16 %v79
  %v433 = vunpack.c.l.b16 %v80
  %v434 = vunpack.c.h.b16 %v80
  %v435 = vunpack.c.l.b16 %v81
  %v436 = vunpack.c.h.b16 %v81
  %v437 = vunpack.c.l.b16 %v82
  %v438 = vunpack.c.h.b16 %v82
  %v439 = vunpack.c.l.b16 %v83
  %v440 = vunpack.c.h.b16 %v83
  %v441 = vunpack.c.l.b16 %v84
  %v442 = vunpack.c.h.b16 %v84
  %v443 = vunpack.c.l.b16 %v85
  %v444 = vunpack.c.h.b16 %v85
  %v445 = vunpack.c.l.b16 %v86
  %v446 = vunpack.c.h.b16 %v86
  %v447 = vunpack.c.l.b16 %v87
  %v448 = vunpack.c.h.b16 %v87
  %v449 = vunpack.c.l.b16 %v88
  %v450 = vunpack.c.h.b16 %v88
  %v451 = vunpack.c.l.b16 %v89
  %v452 = vunpack.c.h.b16 %v89
  %v453 = vunpack.c.l.b16 %v90
  %v454 = vunpack.c.h.b16 %v90
  %v455 = vunpack.c.l.b16 %v91
  %v456 = vunpack.c.h.b16 %v91
  %v457 = vunpack.c.l.b16 %v92
  %v458 = vunpack.c.h.b16 %v92
  %v459 = vunpack.c.l.b16 %v93
  %v460 = vunpack.c.h.b16 %v93
  %v461 = vunpack.c.l.b16 %v94
  %v462 = vunpack.c.h.b16 %v94
  %v463 = vunpack.c.l.b16 %v95
  %v464 = vunpack.c.h.b16 %v95
  %v465 = vunpack.c.l.b16 %v96
  %v466 = vunpack.c.h.b16 %v96
  %v467 = vunpack.c.l.b16 %v97
  %v468 = vunpack.c.h.b16 %v97
  %v469 = vunpack.c.l.b16 %v98
  %v470 = vunpack.c.h.b16 %v98
  %v471 = vunpack.c.l.b16 %v99
  %v472 = vunpack.c.h.b16 %v99
  %v473 = vunpack.c.l.b16 %v100
  %v474 = vunpack.c.h.b16 %v100
  %v475 = vunpack.c.l.b16 %v101
  %v476 = vunpack.c.h.b16 %v101
  %v477 = vunpack.c.l.b16 %v102
  %v478 = vunpack.c.h.b16 %v102
  %v479 = vunpack.c.l.b16 %v103
  %v480 = vunpack.c.h.b16 %v103
  %v481 = vunpack.c.l.b16 %v104
  %v482 = vunpack.c.h.b16 %v104
  %v483 = vunpack.c.l.b16 %v105
  %v484 = vunpack.c.h.b16 %v105
  %v485 = vunpack.c.l.b16 %v106
  %v486 = vunpack.c.h.b16 %v106
  %v487 = vunpack.c.l.b16 %v107
  %v488 = vunpack.c.h.b16 %v107
  %v489 = vunpack.c.l.b16 %v108
  %v490 = vunpack.c.h.b16 %v108
  %v491 = vunpack.c.l.b16 %v109
  %v492 = vunpack.c.h.b16 %v109
  %v493 = vunpack.c.l.b16 %v110
  %v494 = vunpack.c.h.b16 %v110
  %v495 = vunpack.c.l.b16 %v111
  %v496 = vunpack.c.h.b16 %v111
  %v497 = vunpack.c.l.b16 %v112
  %v498 = vunpack.c.h.b16 %v112
  %v499 = vunpack.c.l.b16 %v113
  %v500 = vunpack.c.h.b16 %v113
  %v501 = vunpack.c.l.b16 %v114
  %v502 = vunpack.c.h.b16 %v114
  %v503 = vunpack.c.l.b16 %v115
  %v504 = vunpack.c.h.b16 %v115
  %v505 = vunpack.c.l.b16 %v116
  %v506 = vunpack.c.h.b16 %v116
  %v507 = vunpack.c.l.b16 %v117
  %v508 = vunpack.c.h.b16 %v117
  %v509 = vunpack.c.l.b16 %v118
  %v510 = vunpack.c.h.b16 %v118
  %v511 = vpack.c.b16 %v353, %v351
  %v512 = vpack.c.b16 %v354, %v352
  %v513 = vpack.c.b16 %v357, %v355
  %v514 = vpack.c.b16 %v358, %v356
  %v515 = vpack.c.b16 %v361, %v359
  %v516 = vpack.c.b16 %v362, %v360
  %v517 = vpack.c.b16 %v365, %v363
  %v518 = vpack.c.b16 %v366, %v364
  %v519 = vpack.c.b16 %v369, %v367
  %v520 = vpack.c.b16 %v370, %v368
  %v521 = vpack.c.b16 %v373, %v371
  %v522 = vpack.c.b16 %v374, %v372
  %v523 = vpack.c.b16 %v377, %v375
  %v524 = vpack.c.b16 %v378, %v376
  %v525 = vpack.c.b16 %v381, %v379
  %v526 = vpack.c.b16 %v382, %v380
  %v527 = vpack.c.b16 %v385, %v383
  %v528 = vpack.c.b16 %v386, %v384
  %v529 = vpack.c.b16 %v389, %v387
  %v530 = vpack.c.b16 %v390, %v388
  %v531 = vpack.c.b16 %v393, %v391
  %v532 = vpack.c.b16 %v394, %v392
  %v533 = vpack.c.b16 %v397, %v395
  %v534 = vpack.c.b16 %v398, %v396
  %v535 = vpack.c.b16 %v401, %v399
  %v536 = vpack.c.b16 %v402, %v400
  %v537 = vpack.c.b16 %v405, %v403
  %v538 = vpack.c.b16 %v406, %v404
  %v539 = vpack.c.b16 %v409, %v407
  %v540 = vpack.c.b16 %v410, %v408
  %v541 = vpack.c.b16 %v413, %v411
  %v542 = vpack.c.b16 %v414, %v412
  %v543 = vpack.c.b16 %v417, %v415
  %v544 = vpack.c.b16 %v418, %v416
  %v545 = vpack.c.b16 %v421, %v419
  %v546 = vpack.c.b16 %v422, %v420
  %v547 = vpack.c.b16 %v425, %v423
  %v548 = vpack.c.b16 %v426, %v424
  %v549 = vpack.c.b16 %v429, %v427
  %v550 = vpack.c.b16 %v430, %v428
  %v551 = vpack.c.b16 %v433, %v431
  %v552 = vpack.c.b16 %v434, %v432
  %v553 = vpack.c.b16 %v437, %v435
  %v554 = vpack.c.b16 %v438, %v436
  %v555 = vpack.c.b16 %v441, %v439
  %v556 = vpack.c.b16 %v442, %v440
  %v557 = vpack.c.b16 %v445, %v443
  %v558 = vpack.c.b16 %v446, %v444
  %v559 = vpack.c.b16 %v449, %v447
  %v560 = vpack.c.b16 %v450, %v448
  %v561 = vpack.c.b16 %v453, %v451
  %v562 = vpack.c.b16 %v454, %v452
  %v563 = vpack.c.b16 %v457, %v455
  %v564 = vpack.c.b16 %v458, %v456
  %v565 = vpack.c.b16 %v461, %v459
  %v566 = vpack.c.b16 %v462, %v460
  %v567 = vpack.c.b16 %v465, %v463
  %v568 = vpack.c.b16 %v466, %v464
  %v569 = vpack.c.b16 %v469, %v467
  %v570 = vpack.c.b16 %v470, %v468
  %v571 = vpack.c.b16 %v473, %v471
  %v572 = vpack.c.b16 %v474, %v472
  %v573 = vpack.c.b16 %v477, %v475
  %v574 = vpack.c.b16 %v478, %v476
  %v575 = vpack.c.b16 %v481, %v479
  %v576 = vpack.c.b16 %v482, %v480
  %v577 = vpack.c.b16 %v485, %v483
  %v578 = vpack.c.b16 %v486, %v484
  %v579 = vpack.c.b16 %v489, %v487
  %v580 = vpack.c.b16 %v490, %v488
  %v581 = vpack.c.b16 %v493, %v491
  %v582 = vpack.c.b16 %v494, %v492
  %v583 = vpack.c.b16 %v497, %v495
  %v584 = vpack.c.b16 %v498, %v496
  %v585 = vpack.c.b16 %v501, %v499
  %v586 = vpack.c.b16 %v502, %v500
  %v587 = vpack.c.b16 %v505, %v503
  %v588 = vpack.c.b16 %v506, %v504
  %v589 = vpack.c.b16 %v509, %v507
  %v590 = vpack.c.b16 %v510, %v508
  %671 = vmatprep.subr.bf16.mxu0 %v512
  %672 = vmatpush1.bf16.msra.mxu0 %v511
  %673 = vmatprep.subr.bf16.mxu0 %v514
  %674 = vmatpush1.bf16.msra.mxu0 %v513
  %675 = vmatprep.subr.bf16.mxu0 %v516
  %676 = vmatpush1.bf16.msra.mxu0 %v515
  %677 = vmatprep.subr.bf16.mxu0 %v518
  %678 = vmatpush1.bf16.msra.mxu0 %v517
  %679 = vmatprep.subr.bf16.mxu0 %v520
  %680 = vmatpush1.bf16.msra.mxu0 %v519
  %681 = vmatprep.subr.bf16.mxu0 %v522
  %682 = vmatpush1.bf16.msra.mxu0 %v521
  %683 = vmatprep.subr.bf16.mxu0 %v524
  %684 = vmatpush1.bf16.msra.mxu0 %v523
  %685 = vmatprep.subr.bf16.mxu0 %v526
  %686 = vmatpush1.bf16.msra.mxu0 %v525
  %687 = vmatprep.subr.bf16.mxu0 %v528
  %688 = vmatpush1.bf16.msra.mxu0 %v527
  %689 = vmatprep.subr.bf16.mxu0 %v530
  %690 = vmatpush1.bf16.msra.mxu0 %v529
  %691 = vmatprep.subr.bf16.mxu0 %v532
  %692 = vmatpush1.bf16.msra.mxu0 %v531
  %693 = vmatprep.subr.bf16.mxu0 %v534
  %694 = vmatpush1.bf16.msra.mxu0 %v533
  %695 = vmatprep.subr.bf16.mxu0 %v536
  %696 = vmatpush1.bf16.msra.mxu0 %v535
  %697 = vmatprep.subr.bf16.mxu0 %v538
  %698 = vmatpush1.bf16.msra.mxu0 %v537
  %699 = vmatprep.subr.bf16.mxu0 %v540
  %700 = vmatpush1.bf16.msra.mxu0 %v539
  %701 = vmatprep.subr.bf16.mxu0 %v542
  %702 = vmatpush1.bf16.msra.mxu0 %v541
  %703 = vmatprep.mubr.bf16.mxu0 %v232
  %704 = vmatmul.mubr.bf16.gmra.mrb[0].mxu0 %v231
  %v705 = vpop.f32.mrb[0].mxu0
  %v706 = vadd.f32 %v130, %v705
  %v707 = vpop.f32.mrb[0].mxu0
  %v708 = vadd.f32 %v130, %v707
  %v709 = vpop.f32.mrb[0].mxu0
  %v710 = vadd.f32 %v135, %v709
  %v711 = vpop.f32.mrb[0].mxu0
  %v712 = vadd.f32 %v135, %v711
  %713 = vmatprep.mubr.bf16.mxu0 %v237
  %714 = vmatmul.mubr.bf16.gmra.mrb[0].mxu0 %v236
  %v715 = vpop.f32.mrb[0].mxu0
  %v716 = vadd.f32 %v140, %v715
  %v717 = vpop.f32.mrb[0].mxu0
  %v718 = vadd.f32 %v140, %v717
  %v719 = vpop.f32.mrb[0].mxu0
  %v720 = vadd.f32 %v145, %v719
  %v721 = vpop.f32.mrb[0].mxu0
  %v722 = vadd.f32 %v145, %v721
  %723 = vmatprep.mubr.bf16.mxu0 %v242
  %724 = vmatmul.mubr.bf16.gmra.mrb[0].mxu0 %v241
  %v725 = vpop.f32.mrb[0].mxu0
  %v726 = vadd.f32 %v150, %v725
  %v727 = vpop.f32.mrb[0].mxu0
  %v728 = vadd.f32 %v150, %v727
  %v729 = vpop.f32.mrb[0].mxu0
  %v730 = vadd.f32 %v155, %v729
  %v731 = vpop.f32.mrb[0].mxu0
  %v732 = vadd.f32 %v155, %v731
  %733 = vmatprep.mubr.bf16.mxu0 %v247
  %734 = vmatmul.mubr.bf16.gmra.mrb[0].mxu0 %v246
  %v735 = vpop.f32.mrb[0].mxu0
  %v736 = vadd.f32 %v160, %v735
  %v737 = vpop.f32.mrb[0].mxu0
  %v738 = vadd.f32 %v160, %v737
  %v739 = vpop.f32.mrb[0].mxu0
  %v740 = vadd.f32 %v165, %v739
  %v741 = vpop.f32.mrb[0].mxu0
  %v742 = vadd.f32 %v165, %v741
  %743 = vdwg.mxu0
  %744 = vmatprep.subr.bf16.mxu0 %v544
  %745 = vmatpush1.bf16.msra.mxu0 %v543
  %746 = vmatprep.subr.bf16.mxu0 %v546
  %747 = vmatpush1.bf16.msra.mxu0 %v545
  %748 = vmatprep.subr.bf16.mxu0 %v548
  %749 = vmatpush1.bf16.msra.mxu0 %v547
  %750 = vmatprep.subr.bf16.mxu0 %v550
  %751 = vmatpush1.bf16.msra.mxu0 %v549
  %752 = vmatprep.subr.bf16.mxu0 %v552
  %753 = vmatpush1.bf16.msra.mxu0 %v551
  %754 = vmatprep.subr.bf16.mxu0 %v554
  %755 = vmatpush1.bf16.msra.mxu0 %v553
  %756 = vmatprep.subr.bf16.mxu0 %v556
  %757 = vmatpush1.bf16.msra.mxu0 %v555
  %758 = vmatprep.subr.bf16.mxu0 %v558
  %759 = vmatpush1.bf16.msra.mxu0 %v557
  %760 = vmatprep.subr.bf16.mxu0 %v560
  %761 = vmatpush1.bf16.msra.mxu0 %v559
  %762 = vmatprep.subr.bf16.mxu0 %v562
  %763 = vmatpush1.bf16.msra.mxu0 %v561
  %764 = vmatprep.subr.bf16.mxu0 %v564
  %765 = vmatpush1.bf16.msra.mxu0 %v563
  %766 = vmatprep.subr.bf16.mxu0 %v566
  %767 = vmatpush1.bf16.msra.mxu0 %v565
  %768 = vmatprep.subr.bf16.mxu0 %v568
  %769 = vmatpush1.bf16.msra.mxu0 %v567
  %770 = vmatprep.subr.bf16.mxu0 %v570
  %771 = vmatpush1.bf16.msra.mxu0 %v569
  %772 = vmatprep.subr.bf16.mxu0 %v572
  %773 = vmatpush1.bf16.msra.mxu0 %v571
  %774 = vmatprep.subr.bf16.mxu0 %v574
  %775 = vmatpush1.bf16.msra.mxu0 %v573
  %776 = vmatprep.mubr.bf16.mxu0 %v234
  %777 = vmatmul.mubr.bf16.gmra.mrb[0].mxu0 %v233
  %v778 = vpop.f32.mrb[0].mxu0
  %v779 = vadd.f32 %v706, %v778
  %v780 = vpop.f32.mrb[0].mxu0
  %v781 = vadd.f32 %v708, %v780
  %v782 = vpop.f32.mrb[0].mxu0
  %v783 = vadd.f32 %v710, %v782
  %v784 = vpop.f32.mrb[0].mxu0
  %v785 = vadd.f32 %v712, %v784
  %786 = vmatprep.mubr.bf16.mxu0 %v239
  %787 = vmatmul.mubr.bf16.gmra.mrb[0].mxu0 %v238
  %v788 = vpop.f32.mrb[0].mxu0
  %v789 = vadd.f32 %v716, %v788
  %v790 = vpop.f32.mrb[0].mxu0
  %v791 = vadd.f32 %v718, %v790
  %v792 = vpop.f32.mrb[0].mxu0
  %v793 = vadd.f32 %v720, %v792
  %v794 = vpop.f32.mrb[0].mxu0
  %v795 = vadd.f32 %v722, %v794
  %796 = vmatprep.mubr.bf16.mxu0 %v244
  %797 = vmatmul.mubr.bf16.gmra.mrb[0].mxu0 %v243
  %v798 = vpop.f32.mrb[0].mxu0
  %v799 = vadd.f32 %v726, %v798
  %v800 = vpop.f32.mrb[0].mxu0
  %v801 = vadd.f32 %v728, %v800
  %v802 = vpop.f32.mrb[0].mxu0
  %v803 = vadd.f32 %v730, %v802
  %v804 = vpop.f32.mrb[0].mxu0
  %v805 = vadd.f32 %v732, %v804
  %806 = vmatprep.mubr.bf16.mxu0 %v249
  %807 = vmatmul.mubr.bf16.gmra.mrb[0].mxu0 %v248
  %v808 = vpop.f32.mrb[0].mxu0
  %v809 = vadd.f32 %v736, %v808
  %v810 = vpop.f32.mrb[0].mxu0
  %v811 = vadd.f32 %v738, %v810
  %v812 = vpop.f32.mrb[0].mxu0
  %v813 = vadd.f32 %v740, %v812
  %v814 = vpop.f32.mrb[0].mxu0
  %v815 = vadd.f32 %v742, %v814
  %816 = vdwg.mxu0
  %817 = vmatprep.subr.bf16.mxu0 %v576
  %818 = vmatpush1.bf16.msra.mxu0 %v575
  %819 = vmatprep.subr.bf16.mxu0 %v578
  %820 = vmatpush1.bf16.msra.mxu0 %v577
  %821 = vmatprep.subr.bf16.mxu0 %v580
  %822 = vmatpush1.bf16.msra.mxu0 %v579
  %823 = vmatprep.subr.bf16.mxu0 %v582
  %824 = vmatpush1.bf16.msra.mxu0 %v581
  %825 = vmatprep.subr.bf16.mxu0 %v584
  %826 = vmatpush1.bf16.msra.mxu0 %v583
  %827 = vmatprep.subr.bf16.mxu0 %v586
  %828 = vmatpush1.bf16.msra.mxu0 %v585
  %829 = vmatprep.subr.bf16.mxu0 %v588
  %830 = vmatpush1.bf16.msra.mxu0 %v587
  %831 = vmatprep.subr.bf16.mxu0 %v590
  %832 = vmatpush1.bf16.msra.mxu0 %v589
  %833 = vmatprep.subr.bf16.mxu0 0
  %834 = vmatpush1.bf16.msra.mxu0 0
  %835 = vmatprep.subr.bf16.mxu0 0
  %836 = vmatpush1.bf16.msra.mxu0 0
  %837 = vmatprep.subr.bf16.mxu0 0
  %838 = vmatpush1.bf16.msra.mxu0 0
  %839 = vmatprep.subr.bf16.mxu0 0
  %840 = vmatpush1.bf16.msra.mxu0 0
  %841 = vmatprep.subr.bf16.mxu0 0
  %842 = vmatpush1.bf16.msra.mxu0 0
  %843 = vmatprep.subr.bf16.mxu0 0
  %844 = vmatpush1.bf16.msra.mxu0 0
  %845 = vmatprep.subr.bf16.mxu0 0
  %846 = vmatpush1.bf16.msra.mxu0 0
  %847 = vmatprep.subr.bf16.mxu0 0
  %848 = vmatpush1.bf16.msra.mxu0 0
  %849 = vmatprep.mubr.bf16.mxu0 0
  %850 = vmatmul.mubr.bf16.gmra.mrb[0].mxu0 %v235
  %v851 = vpop.f32.mrb[0].mxu0
  %v852 = vadd.f32 %v779, %v851
  %v853 = vpop.f32.mrb[0].mxu0
  %v854 = vadd.f32 %v781, %v853
  %v855 = vpop.f32.mrb[0].mxu0
  %v856 = vadd.f32 %v783, %v855
  %v857 = vpop.f32.mrb[0].mxu0
  %v858 = vadd.f32 %v785, %v857
  %859 = vmatprep.mubr.bf16.mxu0 0
  %860 = vmatmul.mubr.bf16.gmra.mrb[0].mxu0 %v240
  %v861 = vpop.f32.mrb[0].mxu0
  %v862 = vadd.f32 %v789, %v861
  %v863 = vpop.f32.mrb[0].mxu0
  %v864 = vadd.f32 %v791, %v863
  %v865 = vpop.f32.mrb[0].mxu0
  %v866 = vadd.f32 %v793, %v865
  %v867 = vpop.f32.mrb[0].mxu0
  %v868 = vadd.f32 %v795, %v867
  %869 = vmatprep.mubr.bf16.mxu0 0
  %870 = vmatmul.mubr.bf16.gmra.mrb[0].mxu0 %v245
  %v871 = vpop.f32.mrb[0].mxu0
  %v872 = vadd.f32 %v799, %v871
  %v873 = vpop.f32.mrb[0].mxu0
  %v874 = vadd.f32 %v801, %v873
  %v875 = vpop.f32.mrb[0].mxu0
  %v876 = vadd.f32 %v803, %v875
  %v877 = vpop.f32.mrb[0].mxu0
  %v878 = vadd.f32 %v805, %v877
  %879 = vmatprep.mubr.bf16.mxu0 0
  %880 = vmatmul.mubr.bf16.gmra.mrb[0].mxu0 %v250
  %v881 = vpop.f32.mrb[0].mxu0
  %v882 = vadd.f32 %v809, %v881
  %v883 = vpop.f32.mrb[0].mxu0
  %v884 = vadd.f32 %v811, %v883
  %v885 = vpop.f32.mrb[0].mxu0
  %v886 = vadd.f32 %v813, %v885
  %v887 = vpop.f32.mrb[0].mxu0
  %v888 = vadd.f32 %v815, %v887
  %889 = vdwg.mxu0
  %v890 = vmax.f32 %v852, 0.0
  %v891 = vmax.f32 %v854, 0.0
  %v892 = vmax.f32 %v856, 0.0
  %v893 = vmax.f32 %v858, 0.0
  %v894 = vmax.f32 %v862, 0.0
  %v895 = vmax.f32 %v864, 0.0
  %v896 = vmax.f32 %v866, 0.0
  %v897 = vmax.f32 %v868, 0.0
  %v898 = vmax.f32 %v872, 0.0
  %v899 = vmax.f32 %v874, 0.0
  %v900 = vmax.f32 %v876, 0.0
  %v901 = vmax.f32 %v878, 0.0
  %v902 = vmax.f32 %v882, 0.0
  %v903 = vmax.f32 %v884, 0.0
  %v904 = vmax.f32 %v886, 0.0
  %v905 = vmax.f32 %v888, 0.0
  %v906 = vpack.c.bf16 %v892, %v890
  %v907 = vpack.c.bf16 %v893, %v891
  %v908 = vpack.c.bf16 %v896, %v894
  %v909 = vpack.c.bf16 %v897, %v895
  %v910 = vpack.c.bf16 %v900, %v898
  %v911 = vpack.c.bf16 %v901, %v899
  %v912 = vpack.c.bf16 %v904, %v902
  %v913 = vpack.c.bf16 %v905, %v903
  %v922 = vunpack.c.l.b16 %v906
  %v923 = vunpack.c.l.b16 %v907
  %v924 = vunpack.c.h.b16 %v906
  %v925 = vunpack.c.h.b16 %v907
  %v926 = vunpack.c.l.b16 %v908
  %v927 = vunpack.c.l.b16 %v909
  %v928 = vunpack.c.h.b16 %v908
  %v929 = vunpack.c.h.b16 %v909
  %v930 = vunpack.c.l.b16 %v910
  %v931 = vunpack.c.l.b16 %v911
  %v932 = vunpack.c.h.b16 %v910
  %v933 = vunpack.c.h.b16 %v911
  %v934 = vunpack.c.l.b16 %v912
  %v935 = vunpack.c.l.b16 %v913
  %v936 = vunpack.c.h.b16 %v912
  %v937 = vunpack.c.h.b16 %v913
  %v938 = vpack.c.b16 %v923, %v922
  %v939 = vpack.c.b16 %v925, %v924
  %v940 = vpack.c.b16 %v927, %v926
  %v941 = vpack.c.b16 %v929, %v928
  %v942 = vpack.c.b16 %v931, %v930
  %v943 = vpack.c.b16 %v933, %v932
  %v944 = vpack.c.b16 %v935, %v934
  %v945 = vpack.c.b16 %v937, %v936
  %954 = vst [vmem:[%s3] sm:$0xff] %v938
  %955 = vst [vmem:[%s3 + $0x8] sm:$0xff] %v939
  %956 = vst [vmem:[%s3 + $0x10] sm:$0xff] %v940
  %957 = vst [vmem:[%s3 + $0x18] sm:$0xff] %v941
  %958 = vst [vmem:[%s3 + $0x20] sm:$0xff] %v942
  %959 = vst [vmem:[%s3 + $0x28] sm:$0xff] %v943
  %960 = vst [vmem:[%s3 + $0x30] sm:$0xff] %v944
  %961 = vst [vmem:[%s3 + $0x38] sm:$0xff] %v945
  // Predicated region
  $region14: #{dq_network_forward.6} parent=0 // pred_check
    _
  $region15: #{dq_network_forward.6} parent=0 // pred_check_branch
    %963 = sbr.rel (0) target = $region17
  $region16: #{dq_network_forward.6} parent=0 // pred_region
    _
  $region17: #{dq_network_forward.6} parent=0 // pred_fallthru
    _
  // Predicated region
  $region18: #{dq_network_forward.6} parent=0 // pred_check
    _
  $region19: #{dq_network_forward.6} parent=0 // pred_check_branch
    %965 = sbr.rel (0) target = $region21
  $region20: #{dq_network_forward.6} parent=0 // pred_region
    _
  $region21: #{dq_network_forward.6} parent=0 // pred_fallthru
    _

// kernel: dq_network_forward.7
$region0: #{dq_network_forward.7}
  #allocation0 [shape = 'u32[]', space=smem, size = 0x4, offset = 0x4, fixed_abs, tag = 'smem constant byte address 0x4 - core index']
  #allocation1 [shape = 'u32[144,128]{1,0:T(1,128)}', space=vmem, size = 0x12000, scoped, tag = 'internal scratch']
  #allocation2 [shape = 'f32[2,512]{1,0:T(2,128)}', space=vmem, size = 0x1000, scoped, tag = 'scratch operand']
  %s0 = inlined_call_operand.vmem [shape: bf16[2,3200], index: 0, kind: input, shape index: {}]
  %s1 = inlined_call_operand.vmem [shape: bf16[3200,512], index: 1, kind: input, shape index: {}]
  %s2 = inlined_call_operand.vmem [shape: f32[1,512], index: 2, kind: input, shape index: {}]
  %s3 = inlined_call_operand.vmem [shape: bf16[512,128], index: 3, kind: input, shape index: {}]
  %s4 = inlined_call_operand.vmem [shape: f32[1,128], index: 4, kind: input, shape index: {}]
  %s5 = inlined_call_operand.hbm [shape: f32[2,128], index: 5, kind: output, shape index: {}]
  %s6 = sld [smem:[#allocation0]]
  $region61: #{dq_network_forward.7} parent=0
    _
  %s8 = ssub.s32 1, %s6
  %s9 = scalar_select 0, %s8, %s6
  $region1: #{dq_network_forward.7} parent=0
    #allocation3 [shape = 'u8[1024]{0}', space=vmem, size = 0x400, scoped, tag = 'output window, operand 0, single buffered']
    #allocation4 [shape = 's32[2]{0}', space=sflag, size = 0x8, scoped, tag = 'scoped memory for dq_network_forward.7']
    %10 = vsyncpa [#allocation4], 0
    loop: start=0, step=1, limit=7
    $region2: #{dq_network_forward.7} parent=1 // loop_pre_header
      _
    $region3: #{dq_network_forward.7} parent=1 // loop_header
      %s12 = sphi 0, %s16
      %p13 = scmp.ge.s32.totalorder %s12, 7
      %s22 = sphi 0, %s24
      %s25 = sphi 0, %s22
      %s26 = sphi 0, %s25
      %s42 = sphi 0, %s26
      %s48 = sphi 0, %s50
      %s51 = sphi 0, %s48
      %s52 = sphi 0, %s51
      %s68 = sphi 0, %s52
      %s72 = sphi 0, %s72
      %s74 = sphi 0, %s72
      %s75 = sphi 0, %s74
      %s89 = sphi 0, %s75
      %s93 = sphi 0, %s93
      %s95 = sphi 0, %s93
      %s96 = sphi 0, %s95
      %s110 = sphi 0, %s96
      %s114 = sphi 0, %s114
      %s116 = sphi 0, %s114
      %s117 = sphi 0, %s116
      %s131 = sphi 0, %s117
      %s135 = sphi 0, %s135
      %s137 = sphi 0, %s135
      %s138 = sphi 0, %s137
      %s152 = sphi 0, %s138
    $region4: #{dq_network_forward.7} parent=1 // loop_header_branch
      %15 = sbr.rel (%p13) target = $region8
    $region5: #{dq_network_forward.7} parent=1 // loop_body
      %s17 = ssub.s32 %s12, 1
      %s18 = ssub.s32 %s12, 2
      %s19 = sadd.s32 %s12, 1
      %s20 = ssub.s32 %s12, %s19
      %p21 = scmp.eq.s32.totalorder %s20, 0
      %s23 = sadd.s32 %s22, 1
      %s24 = scalar_select %p21, %s22, %s23
      %p27 = pneg %p21
      %p28 = scmp.eq.s32.totalorder %s12, 4
      %p29 = por %p27, %p28
      %p30 = scmp.ne.s32.totalorder %s22, %s25
      %p31 = scmp.eq.s32.totalorder %s12, 0
      %p32 = por %p30, %p31
      %p33 = scmp.ne.s32.totalorder %s22, %s25
      %p34 = scmp.eq.s32.totalorder %s17, 4
      %p35 = por %p33, %p34
      %p36 = scmp.ne.s32.totalorder %s25, %s26
      %p37 = scmp.eq.s32.totalorder %s17, 0
      %p38 = por %p36, %p37
      %p39 = scmp.ne.s32.totalorder %s25, %s26
      %p40 = scmp.eq.s32.totalorder %s18, 4
      %p41 = por %p39, %p40
      %p43 = scmp.ne.s32.totalorder %s26, %s42
      %p44 = scmp.eq.s32.totalorder %s18, 0
      %p45 = por %p43, %p44
      %s46 = ssub.s32 %s12, %s19
      %p47 = scmp.eq.s32.totalorder %s46, 0
      %s49 = sadd.s32 %s48, 1
      %s50 = scalar_select %p47, %s48, %s49
      %p53 = pneg %p47
      %p54 = scmp.eq.s32.totalorder %s12, 4
      %p55 = por %p53, %p54
      %p56 = scmp.ne.s32.totalorder %s48, %s51
      %p57 = scmp.eq.s32.totalorder %s12, 0
      %p58 = por %p56, %p57
      %p59 = scmp.ne.s32.totalorder %s48, %s51
      %p60 = scmp.eq.s32.totalorder %s17, 4
      %p61 = por %p59, %p60
      %p62 = scmp.ne.s32.totalorder %s51, %s52
      %p63 = scmp.eq.s32.totalorder %s17, 0
      %p64 = por %p62, %p63
      %p65 = scmp.ne.s32.totalorder %s51, %s52
      %p66 = scmp.eq.s32.totalorder %s18, 4
      %p67 = por %p65, %p66
      %p69 = scmp.ne.s32.totalorder %s52, %s68
      %p70 = scmp.eq.s32.totalorder %s18, 0
      %p71 = por %p69, %p70
      %s73 = sadd.s32 %s72, 1
      %p76 = scmp.eq.s32.totalorder %s12, 4
      %p77 = scmp.ne.s32.totalorder %s72, %s74
      %p78 = scmp.eq.s32.totalorder %s12, 0
      %p79 = por %p77, %p78
      %p80 = scmp.ne.s32.totalorder %s72, %s74
      %p81 = scmp.eq.s32.totalorder %s17, 4
      %p82 = por %p80, %p81
      %p83 = scmp.ne.s32.totalorder %s74, %s75
      %p84 = scmp.eq.s32.totalorder %s17, 0
      %p85 = por %p83, %p84
      %p86 = scmp.ne.s32.totalorder %s74, %s75
      %p87 = scmp.eq.s32.totalorder %s18, 4
      %p88 = por %p86, %p87
      %p90 = scmp.ne.s32.totalorder %s75, %s89
      %p91 = scmp.eq.s32.totalorder %s18, 0
      %p92 = por %p90, %p91
      %s94 = sadd.s32 %s93, 1
      %p97 = scmp.eq.s32.totalorder %s12, 4
      %p98 = scmp.ne.s32.totalorder %s93, %s95
      %p99 = scmp.eq.s32.totalorder %s12, 0
      %p100 = por %p98, %p99
      %p101 = scmp.ne.s32.totalorder %s93, %s95
      %p102 = scmp.eq.s32.totalorder %s17, 4
      %p103 = por %p101, %p102
      %p104 = scmp.ne.s32.totalorder %s95, %s96
      %p105 = scmp.eq.s32.totalorder %s17, 0
      %p106 = por %p104, %p105
      %p107 = scmp.ne.s32.totalorder %s95, %s96
      %p108 = scmp.eq.s32.totalorder %s18, 4
      %p109 = por %p107, %p108
      %p111 = scmp.ne.s32.totalorder %s96, %s110
      %p112 = scmp.eq.s32.totalorder %s18, 0
      %p113 = por %p111, %p112
      %s115 = sadd.s32 %s114, 1
      %p118 = scmp.eq.s32.totalorder %s12, 4
      %p119 = scmp.ne.s32.totalorder %s114, %s116
      %p120 = scmp.eq.s32.totalorder %s12, 0
      %p121 = por %p119, %p120
      %p122 = scmp.ne.s32.totalorder %s114, %s116
      %p123 = scmp.eq.s32.totalorder %s17, 4
      %p124 = por %p122, %p123
      %p125 = scmp.ne.s32.totalorder %s116, %s117
      %p126 = scmp.eq.s32.totalorder %s17, 0
      %p127 = por %p125, %p126
      %p128 = scmp.ne.s32.totalorder %s116, %s117
      %p129 = scmp.eq.s32.totalorder %s18, 4
      %p130 = por %p128, %p129
      %p132 = scmp.ne.s32.totalorder %s117, %s131
      %p133 = scmp.eq.s32.totalorder %s18, 0
      %p134 = por %p132, %p133
      %s136 = sadd.s32 %s135, 1
      %p139 = scmp.eq.s32.totalorder %s12, 4
      %p140 = scmp.ne.s32.totalorder %s135, %s137
      %p141 = scmp.eq.s32.totalorder %s12, 0
      %p142 = por %p140, %p141
      %p143 = scmp.ne.s32.totalorder %s135, %s137
      %p144 = scmp.eq.s32.totalorder %s17, 4
      %p145 = por %p143, %p144
      %p146 = scmp.ne.s32.totalorder %s137, %s138
      %p147 = scmp.eq.s32.totalorder %s17, 0
      %p148 = por %p146, %p147
      %p149 = scmp.ne.s32.totalorder %s137, %s138
      %p150 = scmp.eq.s32.totalorder %s18, 4
      %p151 = por %p149, %p150
      %p153 = scmp.ne.s32.totalorder %s138, %s152
      %p154 = scmp.eq.s32.totalorder %s18, 0
      %p155 = por %p153, %p154
      %p156 = scmp.le.s32.totalorder 1, %s12
      %p157 = scmp.lt.s32.totalorder %s12, 6
      %p158 = pnand %p156, %p157
      %p159 = pneg %p158
      // Predicated region
      $region9: #{dq_network_forward.7} parent=5 // pred_check
        _
      $region10: #{dq_network_forward.7} parent=5 // pred_check_branch
        %161 = sbr.rel (%p158) target = $region12
      $region11: #{dq_network_forward.7} parent=5 // pred_region
        %s162 = ssub.s32 %s12, 1
        // Predicated region
        $region13: #{dq_network_forward.7} parent=11 // pred_check
          %p163 = pneg %p85
        $region14: #{dq_network_forward.7} parent=11 // pred_check_branch
          %165 = sbr.rel (%p163) target = $region16
        $region15: #{dq_network_forward.7} parent=11 // pred_region
          _
        $region16: #{dq_network_forward.7} parent=11 // pred_fallthru
          _
        // Predicated region
        $region17: #{dq_network_forward.7} parent=11 // pred_check
          %p166 = pneg %p106
        $region18: #{dq_network_forward.7} parent=11 // pred_check_branch
          %168 = sbr.rel (%p166) target = $region20
        $region19: #{dq_network_forward.7} parent=11 // pred_region
          _
        $region20: #{dq_network_forward.7} parent=11 // pred_fallthru
          _
        // Predicated region
        $region21: #{dq_network_forward.7} parent=11 // pred_check
          %p169 = pneg %p127
        $region22: #{dq_network_forward.7} parent=11 // pred_check_branch
          %171 = sbr.rel (%p169) target = $region24
        $region23: #{dq_network_forward.7} parent=11 // pred_region
          _
        $region24: #{dq_network_forward.7} parent=11 // pred_fallthru
          _
      $region12: #{dq_network_forward.7} parent=5 // pred_fallthru
        _
      %p172 = scmp.lt.s32.totalorder %s12, 5
      // Predicated region
      $region25: #{dq_network_forward.7} parent=5 // pred_check
        %p173 = pneg %p172
      $region26: #{dq_network_forward.7} parent=5 // pred_check_branch
        %175 = sbr.rel (%p173) target = $region28
      $region27: #{dq_network_forward.7} parent=5 // pred_region
        // Predicated region
        $region29: #{dq_network_forward.7} parent=27 // pred_check
          %p176 = pneg %p32
        $region30: #{dq_network_forward.7} parent=27 // pred_check_branch
          %178 = sbr.rel (%p176) target = $region32
        $region31: #{dq_network_forward.7} parent=27 // pred_region
          %s179 = smul.u32 5, %s12
          %p180 = scmp.lt.s32.totalorder %s179, 24
          %s181 = scalar_select %p180, %s179, 24
          %s182 = scalar_lea.vmem %s0, %s181
          %s183 = smul.u32 5, %s12
        $region32: #{dq_network_forward.7} parent=27 // pred_fallthru
          _
        // Predicated region
        $region33: #{dq_network_forward.7} parent=27 // pred_check
          %p184 = pneg %p58
        $region34: #{dq_network_forward.7} parent=27 // pred_check_branch
          %186 = sbr.rel (%p184) target = $region36
        $region35: #{dq_network_forward.7} parent=27 // pred_region
          %s187 = smul.u32 80, %s12
          %p188 = scmp.lt.s32.totalorder %s187, 399
          %s189 = scalar_select %p188, %s187, 399
          %s190 = smul.addr %s189, 4
          %s191 = smul.addr %s190, 4
          %s192 = scalar_lea.vmem %s1, %s191
          %s193 = smul.u32 80, %s12
        $region36: #{dq_network_forward.7} parent=27 // pred_fallthru
          _
      $region28: #{dq_network_forward.7} parent=5 // pred_fallthru
        _
      %p194 = scmp.le.s32.totalorder 1, %s12
      %p195 = scmp.lt.s32.totalorder %s12, 6
      %p196 = pnand %p194, %p195
      %p197 = pneg %p196
      // Predicated region
      $region37: #{dq_network_forward.7} parent=5 // pred_check
        _
      $region38: #{dq_network_forward.7} parent=5 // pred_check_branch
        %199 = sbr.rel (%p196) target = $region40
      $region39: #{dq_network_forward.7} parent=5 // pred_region
        %s200 = ssub.s32 %s12, 1
        %s201 = smul.u32 5, %s17
        %p202 = scmp.lt.s32.totalorder %s201, 24
        %s203 = scalar_select %p202, %s201, 24
        %s204 = scalar_lea.vmem %s0, %s203
        %p205 = pneg %p38
        %p206 = pneg %p35
        %s207 = smul.u32 80, %s17
        %p208 = scmp.lt.s32.totalorder %s207, 399
        %s209 = scalar_select %p208, %s207, 399
        %s210 = smul.addr %s209, 4
        %s211 = smul.addr %s210, 4
        %s212 = scalar_lea.vmem %s1, %s211
        %p213 = pneg %p64
        %p214 = pneg %p61
        %p215 = pneg %p85
        %p216 = pneg %p82
        %p217 = pneg %p106
        %p218 = pneg %p103
        %p219 = pneg %p127
        %p220 = pneg %p124
        %p221 = pneg %p148
        %p222 = pneg %p145
        %s223 = smul.u32 5, %s17
        %p224 = scmp.lt.s32.totalorder %s223, 24
        %s225 = scalar_select %p224, %s223, 24
        %s226 = scalar_lea.vmem %s0, %s225
        %s227 = smul.u32 5, %s17
        %s228 = smul.u32 80, %s17
        %p229 = scmp.lt.s32.totalorder %s228, 399
        %s230 = scalar_select %p229, %s228, 399
        %s231 = smul.addr %s230, 4
        %s232 = smul.addr %s231, 4
        %s233 = scalar_lea.vmem %s1, %s232
        %s234 = smul.u32 80, %s17
        %p236 = scmp.eq.s32.totalorder %s17, 0
        // Predicated region
        $region41: #{dq_network_forward.7} parent=39 // pred_check
          %p237 = pneg %p236
        $region42: #{dq_network_forward.7} parent=39 // pred_check_branch
          %239 = sbr.rel (%p237) target = $region44
        $region43: #{dq_network_forward.7} parent=39 // pred_region
          %240 = vst [vmem:[#allocation2] sm:$0xff] 0.0
        $region44: #{dq_network_forward.7} parent=39 // pred_fallthru
          _
        %v241 = vld [vmem:[#allocation2] sm:$0xff]
        %v242 = vld [vmem:[%s226] sm:$0x1f]
        %v243 = vld [vmem:[%s233] sm:$0xff]
        %v244 = vld [vmem:[%s233 + $0x8] sm:$0xff]
        %v245 = vld [vmem:[%s233 + $0x10] sm:$0xff]
        %v246 = vld [vmem:[%s233 + $0x18] sm:$0xff]
        %v247 = vld [vmem:[%s233 + $0x20] sm:$0xff]
        %v248 = vld [vmem:[%s233 + $0x28] sm:$0xff]
        %v249 = vld [vmem:[%s233 + $0x30] sm:$0xff]
        %v250 = vld [vmem:[%s233 + $0x38] sm:$0xff]
        %v251 = vld [vmem:[%s233 + $0x40] sm:$0xff]
        %v252 = vld [vmem:[%s233 + $0x48] sm:$0xff]
        %v253 = vld [vmem:[%s233 + $0x50] sm:$0xff]
        %v254 = vld [vmem:[%s233 + $0x58] sm:$0xff]
        %v255 = vld [vmem:[%s233 + $0x60] sm:$0xff]
        %v256 = vld [vmem:[%s233 + $0x68] sm:$0xff]
        %v257 = vld [vmem:[%s233 + $0x70] sm:$0xff]
        %v258 = vld [vmem:[%s233 + $0x78] sm:$0xff]
        %v259 = vld [vmem:[%s233 + $0x80] sm:$0xff]
        %v260 = vld [vmem:[%s233 + $0x88] sm:$0xff]
        %v261 = vld [vmem:[%s233 + $0x90] sm:$0xff]
        %v262 = vld [vmem:[%s233 + $0x98] sm:$0xff]
        %v263 = vld [vmem:[%s233 + $0xa0] sm:$0xff]
        %v264 = vld [vmem:[%s233 + $0xa8] sm:$0xff]
        %v265 = vld [vmem:[%s233 + $0xb0] sm:$0xff]
        %v266 = vld [vmem:[%s233 + $0xb8] sm:$0xff]
        %v267 = vld [vmem:[%s233 + $0xc0] sm:$0xff]
        %v268 = vld [vmem:[%s233 + $0xc8] sm:$0xff]
        %v269 = vld [vmem:[%s233 + $0xd0] sm:$0xff]
        %v270 = vld [vmem:[%s233 + $0xd8] sm:$0xff]
        %v271 = vld [vmem:[%s233 + $0xe0] sm:$0xff]
        %v272 = vld [vmem:[%s233 + $0xe8] sm:$0xff]
        %v273 = vld [vmem:[%s233 + $0xf0] sm:$0xff]
        %v274 = vld [vmem:[%s233 + $0xf8] sm:$0xff]
        %v275 = vld [vmem:[%s233 + $0x100] sm:$0xff]
        %v276 = vld [vmem:[%s233 + $0x108] sm:$0xff]
        %v277 = vld [vmem:[%s233 + $0x110] sm:$0xff]
        %v278 = vld [vmem:[%s233 + $0x118] sm:$0xff]
        %v279 = vld [vmem:[%s233 + $0x120] sm:$0xff]
        %v280 = vld [vmem:[%s233 + $0x128] sm:$0xff]
        %v281 = vld [vmem:[%s233 + $0x130] sm:$0xff]
        %v282 = vld [vmem:[%s233 + $0x138] sm:$0xff]
        %v283 = vld [vmem:[%s233 + $0x140] sm:$0xff]
        %v284 = vld [vmem:[%s233 + $0x148] sm:$0xff]
        %v285 = vld [vmem:[%s233 + $0x150] sm:$0xff]
        %v286 = vld [vmem:[%s233 + $0x158] sm:$0xff]
        %v287 = vld [vmem:[%s233 + $0x160] sm:$0xff]
        %v288 = vld [vmem:[%s233 + $0x168] sm:$0xff]
        %v289 = vld [vmem:[%s233 + $0x170] sm:$0xff]
        %v290 = vld [vmem:[%s233 + $0x178] sm:$0xff]
        %v291 = vld [vmem:[%s233 + $0x180] sm:$0xff]
        %v292 = vld [vmem:[%s233 + $0x188] sm:$0xff]
        %v293 = vld [vmem:[%s233 + $0x190] sm:$0xff]
        %v294 = vld [vmem:[%s233 + $0x198] sm:$0xff]
        %v295 = vld [vmem:[%s233 + $0x1a0] sm:$0xff]
        %v296 = vld [vmem:[%s233 + $0x1a8] sm:$0xff]
        %v297 = vld [vmem:[%s233 + $0x1b0] sm:$0xff]
        %v298 = vld [vmem:[%s233 + $0x1b8] sm:$0xff]
        %v299 = vld [vmem:[%s233 + $0x1c0] sm:$0xff]
        %v300 = vld [vmem:[%s233 + $0x1c8] sm:$0xff]
        %v301 = vld [vmem:[%s233 + $0x1d0] sm:$0xff]
        %v302 = vld [vmem:[%s233 + $0x1d8] sm:$0xff]
        %v303 = vld [vmem:[%s233 + $0x1e0] sm:$0xff]
        %v304 = vld [vmem:[%s233 + $0x1e8] sm:$0xff]
        %v305 = vld [vmem:[%s233 + $0x1f0] sm:$0xff]
        %v306 = vld [vmem:[%s233 + $0x1f8] sm:$0xff]
        %v307 = vld [vmem:[%s233 + $0x200] sm:$0xff]
        %v308 = vld [vmem:[%s233 + $0x208] sm:$0xff]
        %v309 = vld [vmem:[%s233 + $0x210] sm:$0xff]
        %v310 = vld [vmem:[%s233 + $0x218] sm:$0xff]
        %v311 = vld [vmem:[%s233 + $0x220] sm:$0xff]
        %v312 = vld [vmem:[%s233 + $0x228] sm:$0xff]
        %v313 = vld [vmem:[%s233 + $0x230] sm:$0xff]
        %v314 = vld [vmem:[%s233 + $0x238] sm:$0xff]
        %v315 = vld [vmem:[%s233 + $0x240] sm:$0xff]
        %v316 = vld [vmem:[%s233 + $0x248] sm:$0xff]
        %v317 = vld [vmem:[%s233 + $0x250] sm:$0xff]
        %v318 = vld [vmem:[%s233 + $0x258] sm:$0xff]
        %v319 = vld [vmem:[%s233 + $0x260] sm:$0xff]
        %v320 = vld [vmem:[%s233 + $0x268] sm:$0xff]
        %v321 = vld [vmem:[%s233 + $0x270] sm:$0xff]
        %v322 = vld [vmem:[%s233 + $0x278] sm:$0xff]
        %v323 = vld [vmem:[%s233 + $0x280] sm:$0xff]
        %v324 = vld [vmem:[%s233 + $0x288] sm:$0xff]
        %v325 = vld [vmem:[%s233 + $0x290] sm:$0xff]
        %v326 = vld [vmem:[%s233 + $0x298] sm:$0xff]
        %v327 = vld [vmem:[%s233 + $0x2a0] sm:$0xff]
        %v328 = vld [vmem:[%s233 + $0x2a8] sm:$0xff]
        %v329 = vld [vmem:[%s233 + $0x2b0] sm:$0xff]
        %v330 = vld [vmem:[%s233 + $0x2b8] sm:$0xff]
        %v331 = vld [vmem:[%s233 + $0x2c0] sm:$0xff]
        %v332 = vld [vmem:[%s233 + $0x2c8] sm:$0xff]
        %v333 = vld [vmem:[%s233 + $0x2d0] sm:$0xff]
        %v334 = vld [vmem:[%s233 + $0x2d8] sm:$0xff]
        %v335 = vld [vmem:[%s233 + $0x2e0] sm:$0xff]
        %v336 = vld [vmem:[%s233 + $0x2e8] sm:$0xff]
        %v337 = vld [vmem:[%s233 + $0x2f0] sm:$0xff]
        %v338 = vld [vmem:[%s233 + $0x2f8] sm:$0xff]
        %v339 = vld [vmem:[%s233 + $0x300] sm:$0xff]
        %v340 = vld [vmem:[%s233 + $0x308] sm:$0xff]
        %v341 = vld [vmem:[%s233 + $0x310] sm:$0xff]
        %v342 = vld [vmem:[%s233 + $0x318] sm:$0xff]
        %v343 = vld [vmem:[%s233 + $0x320] sm:$0xff]
        %v344 = vld [vmem:[%s233 + $0x328] sm:$0xff]
        %v345 = vld [vmem:[%s233 + $0x330] sm:$0xff]
        %v346 = vld [vmem:[%s233 + $0x338] sm:$0xff]
        %v347 = vld [vmem:[%s233 + $0x340] sm:$0xff]
        %v348 = vld [vmem:[%s233 + $0x348] sm:$0xff]
        %v349 = vld [vmem:[%s233 + $0x350] sm:$0xff]
        %v350 = vld [vmem:[%s233 + $0x358] sm:$0xff]
        %v351 = vld [vmem:[%s233 + $0x360] sm:$0xff]
        %v352 = vld [vmem:[%s233 + $0x368] sm:$0xff]
        %v353 = vld [vmem:[%s233 + $0x370] sm:$0xff]
        %v354 = vld [vmem:[%s233 + $0x378] sm:$0xff]
        %v355 = vld [vmem:[%s233 + $0x380] sm:$0xff]
        %v356 = vld [vmem:[%s233 + $0x388] sm:$0xff]
        %v357 = vld [vmem:[%s233 + $0x390] sm:$0xff]
        %v358 = vld [vmem:[%s233 + $0x398] sm:$0xff]
        %v359 = vld [vmem:[%s233 + $0x3a0] sm:$0xff]
        %v360 = vld [vmem:[%s233 + $0x3a8] sm:$0xff]
        %v361 = vld [vmem:[%s233 + $0x3b0] sm:$0xff]
        %v362 = vld [vmem:[%s233 + $0x3b8] sm:$0xff]
        %v363 = vld [vmem:[%s233 + $0x3c0] sm:$0xff]
        %v364 = vld [vmem:[%s233 + $0x3c8] sm:$0xff]
        %v365 = vld [vmem:[%s233 + $0x3d0] sm:$0xff]
        %v366 = vld [vmem:[%s233 + $0x3d8] sm:$0xff]
        %v367 = vld [vmem:[%s233 + $0x3e0] sm:$0xff]
        %v368 = vld [vmem:[%s233 + $0x3e8] sm:$0xff]
        %v369 = vld [vmem:[%s233 + $0x3f0] sm:$0xff]
        %v370 = vld [vmem:[%s233 + $0x3f8] sm:$0xff]
        %v371 = vld [vmem:[%s233 + $0x400] sm:$0xff]
        %v372 = vld [vmem:[%s233 + $0x408] sm:$0xff]
        %v373 = vld [vmem:[%s233 + $0x410] sm:$0xff]
        %v374 = vld [vmem:[%s233 + $0x418] sm:$0xff]
        %v375 = vld [vmem:[%s233 + $0x420] sm:$0xff]
        %v376 = vld [vmem:[%s233 + $0x428] sm:$0xff]
        %v377 = vld [vmem:[%s233 + $0x430] sm:$0xff]
        %v378 = vld [vmem:[%s233 + $0x438] sm:$0xff]
        %v379 = vld [vmem:[%s233 + $0x440] sm:$0xff]
        %v380 = vld [vmem:[%s233 + $0x448] sm:$0xff]
        %v381 = vld [vmem:[%s233 + $0x450] sm:$0xff]
        %v382 = vld [vmem:[%s233 + $0x458] sm:$0xff]
        %v383 = vld [vmem:[%s233 + $0x460] sm:$0xff]
        %v384 = vld [vmem:[%s233 + $0x468] sm:$0xff]
        %v385 = vld [vmem:[%s233 + $0x470] sm:$0xff]
        %v386 = vld [vmem:[%s233 + $0x478] sm:$0xff]
        %v387 = vld [vmem:[%s233 + $0x480] sm:$0xff]
        %v388 = vld [vmem:[%s233 + $0x488] sm:$0xff]
        %v389 = vld [vmem:[%s233 + $0x490] sm:$0xff]
        %v390 = vld [vmem:[%s233 + $0x498] sm:$0xff]
        %v391 = vld [vmem:[%s233 + $0x4a0] sm:$0xff]
        %v392 = vld [vmem:[%s233 + $0x4a8] sm:$0xff]
        %v393 = vld [vmem:[%s233 + $0x4b0] sm:$0xff]
        %v394 = vld [vmem:[%s233 + $0x4b8] sm:$0xff]
        %v395 = vld [vmem:[%s233 + $0x4c0] sm:$0xff]
        %v396 = vld [vmem:[%s233 + $0x4c8] sm:$0xff]
        %v397 = vld [vmem:[%s233 + $0x4d0] sm:$0xff]
        %v398 = vld [vmem:[%s233 + $0x4d8] sm:$0xff]
        %v399 = vld [vmem:[%s233 + $0x4e0] sm:$0xff]
        %v400 = vld [vmem:[%s233 + $0x4e8] sm:$0xff]
        %v401 = vld [vmem:[%s233 + $0x4f0] sm:$0xff]
        %v402 = vld [vmem:[%s233 + $0x4f8] sm:$0xff]
        %v404 = vcombine.high %v242, %v242
        %v406 = vunpack.c.l.s4 1966171168
        %v407 = vunpack.c.0.s8 %v406
        %v408 = vlaneseq
        %v409 = vshrl.u32 %v408, 7
        %v410 = vsub.s32 %v407, %v409
        %v411 = vrot.slane %v242, %v410
        %v413 = vunpack.c.l.s4 1966171168
        %v414 = vunpack.c.0.s8 %v413
        %v415 = vlaneseq
        %v416 = vshrl.u32 %v415, 7
        %v417 = vsub.s32 %v414, %v416
        %v418 = vrot.slane %v404, %v417
        %v419 = vcombine.high %v411, %v411
        %v421 = vunpack.c.l.s4 1966171168
        %v422 = vunpack.c.0.s8 %v421
        %v423 = vlaneseq
        %v424 = vshrl.u32 %v423, 7
        %v425 = vsub.s32 %v422, %v424
        %v426 = vrot.slane %v411, %v425
        %v428 = vunpack.c.l.s4 1966171168
        %v429 = vunpack.c.0.s8 %v428
        %v430 = vlaneseq
        %v431 = vshrl.u32 %v430, 7
        %v432 = vsub.s32 %v429, %v431
        %v433 = vrot.slane %v418, %v432
        %v435 = vunpack.c.l.s4 1966171168
        %v436 = vunpack.c.0.s8 %v435
        %v437 = vlaneseq
        %v438 = vshrl.u32 %v437, 7
        %v439 = vsub.s32 %v436, %v438
        %v440 = vrot.slane %v419, %v439
        %v441 = vcombine.high %v426, %v426
        %v442 = vcombine.high %v440, %v440
        %v608 = vunpack.c.l.b16 %v243
        %v609 = vunpack.c.h.b16 %v243
        %v610 = vunpack.c.l.b16 %v244
        %v611 = vunpack.c.h.b16 %v244
        %v612 = vunpack.c.l.b16 %v245
        %v613 = vunpack.c.h.b16 %v245
        %v614 = vunpack.c.l.b16 %v246
        %v615 = vunpack.c.h.b16 %v246
        %v616 = vunpack.c.l.b16 %v247
        %v617 = vunpack.c.h.b16 %v247
        %v618 = vunpack.c.l.b16 %v248
        %v619 = vunpack.c.h.b16 %v248
        %v620 = vunpack.c.l.b16 %v249
        %v621 = vunpack.c.h.b16 %v249
        %v622 = vunpack.c.l.b16 %v250
        %v623 = vunpack.c.h.b16 %v250
        %v624 = vunpack.c.l.b16 %v251
        %v625 = vunpack.c.h.b16 %v251
        %v626 = vunpack.c.l.b16 %v252
        %v627 = vunpack.c.h.b16 %v252
        %v628 = vunpack.c.l.b16 %v253
        %v629 = vunpack.c.h.b16 %v253
        %v630 = vunpack.c.l.b16 %v254
        %v631 = vunpack.c.h.b16 %v254
        %v632 = vunpack.c.l.b16 %v255
        %v633 = vunpack.c.h.b16 %v255
        %v634 = vunpack.c.l.b16 %v256
        %v635 = vunpack.c.h.b16 %v256
        %v636 = vunpack.c.l.b16 %v257
        %v637 = vunpack.c.h.b16 %v257
        %v638 = vunpack.c.l.b16 %v258
        %v639 = vunpack.c.h.b16 %v258
        %v640 = vunpack.c.l.b16 %v259
        %v641 = vunpack.c.h.b16 %v259
        %v642 = vunpack.c.l.b16 %v260
        %v643 = vunpack.c.h.b16 %v260
        %v644 = vunpack.c.l.b16 %v261
        %v645 = vunpack.c.h.b16 %v261
        %v646 = vunpack.c.l.b16 %v262
        %v647 = vunpack.c.h.b16 %v262
        %v648 = vunpack.c.l.b16 %v263
        %v649 = vunpack.c.h.b16 %v263
        %v650 = vunpack.c.l.b16 %v264
        %v651 = vunpack.c.h.b16 %v264
        %v652 = vunpack.c.l.b16 %v265
        %v653 = vunpack.c.h.b16 %v265
        %v654 = vunpack.c.l.b16 %v266
        %v655 = vunpack.c.h.b16 %v266
        %v656 = vunpack.c.l.b16 %v267
        %v657 = vunpack.c.h.b16 %v267
        %v658 = vunpack.c.l.b16 %v268
        %v659 = vunpack.c.h.b16 %v268
        %v660 = vunpack.c.l.b16 %v269
        %v661 = vunpack.c.h.b16 %v269
        %v662 = vunpack.c.l.b16 %v270
        %v663 = vunpack.c.h.b16 %v270
        %v664 = vunpack.c.l.b16 %v271
        %v665 = vunpack.c.h.b16 %v271
        %v666 = vunpack.c.l.b16 %v272
        %v667 = vunpack.c.h.b16 %v272
        %v668 = vunpack.c.l.b16 %v273
        %v669 = vunpack.c.h.b16 %v273
        %v670 = vunpack.c.l.b16 %v274
        %v671 = vunpack.c.h.b16 %v274
        %v672 = vunpack.c.l.b16 %v275
        %v673 = vunpack.c.h.b16 %v275
        %v674 = vunpack.c.l.b16 %v276
        %v675 = vunpack.c.h.b16 %v276
        %v676 = vunpack.c.l.b16 %v277
        %v677 = vunpack.c.h.b16 %v277
        %v678 = vunpack.c.l.b16 %v278
        %v679 = vunpack.c.h.b16 %v278
        %v680 = vunpack.c.l.b16 %v279
        %v681 = vunpack.c.h.b16 %v279
        %v682 = vunpack.c.l.b16 %v280
        %v683 = vunpack.c.h.b16 %v280
        %v684 = vunpack.c.l.b16 %v281
        %v685 = vunpack.c.h.b16 %v281
        %v686 = vunpack.c.l.b16 %v282
        %v687 = vunpack.c.h.b16 %v282
        %v688 = vunpack.c.l.b16 %v283
        %v689 = vunpack.c.h.b16 %v283
        %v690 = vunpack.c.l.b16 %v284
        %v691 = vunpack.c.h.b16 %v284
        %v692 = vunpack.c.l.b16 %v285
        %v693 = vunpack.c.h.b16 %v285
        %v694 = vunpack.c.l.b16 %v286
        %v695 = vunpack.c.h.b16 %v286
        %v696 = vunpack.c.l.b16 %v287
        %v697 = vunpack.c.h.b16 %v287
        %v698 = vunpack.c.l.b16 %v288
        %v699 = vunpack.c.h.b16 %v288
        %v700 = vunpack.c.l.b16 %v289
        %v701 = vunpack.c.h.b16 %v289
        %v702 = vunpack.c.l.b16 %v290
        %v703 = vunpack.c.h.b16 %v290
        %v704 = vunpack.c.l.b16 %v291
        %v705 = vunpack.c.h.b16 %v291
        %v706 = vunpack.c.l.b16 %v292
        %v707 = vunpack.c.h.b16 %v292
        %v708 = vunpack.c.l.b16 %v293
        %v709 = vunpack.c.h.b16 %v293
        %v710 = vunpack.c.l.b16 %v294
        %v711 = vunpack.c.h.b16 %v294
        %v712 = vunpack.c.l.b16 %v295
        %v713 = vunpack.c.h.b16 %v295
        %v714 = vunpack.c.l.b16 %v296
        %v715 = vunpack.c.h.b16 %v296
        %v716 = vunpack.c.l.b16 %v297
        %v717 = vunpack.c.h.b16 %v297
        %v718 = vunpack.c.l.b16 %v298
        %v719 = vunpack.c.h.b16 %v298
        %v720 = vunpack.c.l.b16 %v299
        %v721 = vunpack.c.h.b16 %v299
        %v722 = vunpack.c.l.b16 %v300
        %v723 = vunpack.c.h.b16 %v300
        %v724 = vunpack.c.l.b16 %v301
        %v725 = vunpack.c.h.b16 %v301
        %v726 = vunpack.c.l.b16 %v302
        %v727 = vunpack.c.h.b16 %v302
        %v728 = vunpack.c.l.b16 %v303
        %v729 = vunpack.c.h.b16 %v303
        %v730 = vunpack.c.l.b16 %v304
        %v731 = vunpack.c.h.b16 %v304
        %v732 = vunpack.c.l.b16 %v305
        %v733 = vunpack.c.h.b16 %v305
        %v734 = vunpack.c.l.b16 %v306
        %v735 = vunpack.c.h.b16 %v306
        %v736 = vunpack.c.l.b16 %v307
        %v737 = vunpack.c.h.b16 %v307
        %v738 = vunpack.c.l.b16 %v308
        %v739 = vunpack.c.h.b16 %v308
        %v740 = vunpack.c.l.b16 %v309
        %v741 = vunpack.c.h.b16 %v309
        %v742 = vunpack.c.l.b16 %v310
        %v743 = vunpack.c.h.b16 %v310
        %v744 = vunpack.c.l.b16 %v311
        %v745 = vunpack.c.h.b16 %v311
        %v746 = vunpack.c.l.b16 %v312
        %v747 = vunpack.c.h.b16 %v312
        %v748 = vunpack.c.l.b16 %v313
        %v749 = vunpack.c.h.b16 %v313
        %v750 = vunpack.c.l.b16 %v314
        %v751 = vunpack.c.h.b16 %v314
        %v752 = vunpack.c.l.b16 %v315
        %v753 = vunpack.c.h.b16 %v315
        %v754 = vunpack.c.l.b16 %v316
        %v755 = vunpack.c.h.b16 %v316
        %v756 = vunpack.c.l.b16 %v317
        %v757 = vunpack.c.h.b16 %v317
        %v758 = vunpack.c.l.b16 %v318
        %v759 = vunpack.c.h.b16 %v318
        %v760 = vunpack.c.l.b16 %v319
        %v761 = vunpack.c.h.b16 %v319
        %v762 = vunpack.c.l.b16 %v320
        %v763 = vunpack.c.h.b16 %v320
        %v764 = vunpack.c.l.b16 %v321
        %v765 = vunpack.c.h.b16 %v321
        %v766 = vunpack.c.l.b16 %v322
        %v767 = vunpack.c.h.b16 %v322
        %v768 = vunpack.c.l.b16 %v323
        %v769 = vunpack.c.h.b16 %v323
        %v770 = vunpack.c.l.b16 %v324
        %v771 = vunpack.c.h.b16 %v324
        %v772 = vunpack.c.l.b16 %v325
        %v773 = vunpack.c.h.b16 %v325
        %v774 = vunpack.c.l.b16 %v326
        %v775 = vunpack.c.h.b16 %v326
        %v776 = vunpack.c.l.b16 %v327
        %v777 = vunpack.c.h.b16 %v327
        %v778 = vunpack.c.l.b16 %v328
        %v779 = vunpack.c.h.b16 %v328
        %v780 = vunpack.c.l.b16 %v329
        %v781 = vunpack.c.h.b16 %v329
        %v782 = vunpack.c.l.b16 %v330
        %v783 = vunpack.c.h.b16 %v330
        %v784 = vunpack.c.l.b16 %v331
        %v785 = vunpack.c.h.b16 %v331
        %v786 = vunpack.c.l.b16 %v332
        %v787 = vunpack.c.h.b16 %v332
        %v788 = vunpack.c.l.b16 %v333
        %v789 = vunpack.c.h.b16 %v333
        %v790 = vunpack.c.l.b16 %v334
        %v791 = vunpack.c.h.b16 %v334
        %v792 = vunpack.c.l.b16 %v335
        %v793 = vunpack.c.h.b16 %v335
        %v794 = vunpack.c.l.b16 %v336
        %v795 = vunpack.c.h.b16 %v336
        %v796 = vunpack.c.l.b16 %v337
        %v797 = vunpack.c.h.b16 %v337
        %v798 = vunpack.c.l.b16 %v338
        %v799 = vunpack.c.h.b16 %v338
        %v800 = vunpack.c.l.b16 %v339
        %v801 = vunpack.c.h.b16 %v339
        %v802 = vunpack.c.l.b16 %v340
        %v803 = vunpack.c.h.b16 %v340
        %v804 = vunpack.c.l.b16 %v341
        %v805 = vunpack.c.h.b16 %v341
        %v806 = vunpack.c.l.b16 %v342
        %v807 = vunpack.c.h.b16 %v342
        %v808 = vunpack.c.l.b16 %v343
        %v809 = vunpack.c.h.b16 %v343
        %v810 = vunpack.c.l.b16 %v344
        %v811 = vunpack.c.h.b16 %v344
        %v812 = vunpack.c.l.b16 %v345
        %v813 = vunpack.c.h.b16 %v345
        %v814 = vunpack.c.l.b16 %v346
        %v815 = vunpack.c.h.b16 %v346
        %v816 = vunpack.c.l.b16 %v347
        %v817 = vunpack.c.h.b16 %v347
        %v818 = vunpack.c.l.b16 %v348
        %v819 = vunpack.c.h.b16 %v348
        %v820 = vunpack.c.l.b16 %v349
        %v821 = vunpack.c.h.b16 %v349
        %v822 = vunpack.c.l.b16 %v350
        %v823 = vunpack.c.h.b16 %v350
        %v824 = vunpack.c.l.b16 %v351
        %v825 = vunpack.c.h.b16 %v351
        %v826 = vunpack.c.l.b16 %v352
        %v827 = vunpack.c.h.b16 %v352
        %v828 = vunpack.c.l.b16 %v353
        %v829 = vunpack.c.h.b16 %v353
        %v830 = vunpack.c.l.b16 %v354
        %v831 = vunpack.c.h.b16 %v354
        %v832 = vunpack.c.l.b16 %v355
        %v833 = vunpack.c.h.b16 %v355
        %v834 = vunpack.c.l.b16 %v356
        %v835 = vunpack.c.h.b16 %v356
        %v836 = vunpack.c.l.b16 %v357
        %v837 = vunpack.c.h.b16 %v357
        %v838 = vunpack.c.l.b16 %v358
        %v839 = vunpack.c.h.b16 %v358
        %v840 = vunpack.c.l.b16 %v359
        %v841 = vunpack.c.h.b16 %v359
        %v842 = vunpack.c.l.b16 %v360
        %v843 = vunpack.c.h.b16 %v360
        %v844 = vunpack.c.l.b16 %v361
        %v845 = vunpack.c.h.b16 %v361
        %v846 = vunpack.c.l.b16 %v362
        %v847 = vunpack.c.h.b16 %v362
        %v848 = vunpack.c.l.b16 %v363
        %v849 = vunpack.c.h.b16 %v363
        %v850 = vunpack.c.l.b16 %v364
        %v851 = vunpack.c.h.b16 %v364
        %v852 = vunpack.c.l.b16 %v365
        %v853 = vunpack.c.h.b16 %v365
        %v854 = vunpack.c.l.b16 %v366
        %v855 = vunpack.c.h.b16 %v366
        %v856 = vunpack.c.l.b16 %v367
        %v857 = vunpack.c.h.b16 %v367
        %v858 = vunpack.c.l.b16 %v368
        %v859 = vunpack.c.h.b16 %v368
        %v860 = vunpack.c.l.b16 %v369
        %v861 = vunpack.c.h.b16 %v369
        %v862 = vunpack.c.l.b16 %v370
        %v863 = vunpack.c.h.b16 %v370
        %v864 = vunpack.c.l.b16 %v371
        %v865 = vunpack.c.h.b16 %v371
        %v866 = vunpack.c.l.b16 %v372
        %v867 = vunpack.c.h.b16 %v372
        %v868 = vunpack.c.l.b16 %v373
        %v869 = vunpack.c.h.b16 %v373
        %v870 = vunpack.c.l.b16 %v374
        %v871 = vunpack.c.h.b16 %v374
        %v872 = vunpack.c.l.b16 %v375
        %v873 = vunpack.c.h.b16 %v375
        %v874 = vunpack.c.l.b16 %v376
        %v875 = vunpack.c.h.b16 %v376
        %v876 = vunpack.c.l.b16 %v377
        %v877 = vunpack.c.h.b16 %v377
        %v878 = vunpack.c.l.b16 %v378
        %v879 = vunpack.c.h.b16 %v378
        %v880 = vunpack.c.l.b16 %v379
        %v881 = vunpack.c.h.b16 %v379
        %v882 = vunpack.c.l.b16 %v380
        %v883 = vunpack.c.h.b16 %v380
        %v884 = vunpack.c.l.b16 %v381
        %v885 = vunpack.c.h.b16 %v381
        %v886 = vunpack.c.l.b16 %v382
        %v887 = vunpack.c.h.b16 %v382
        %v888 = vunpack.c.l.b16 %v383
        %v889 = vunpack.c.h.b16 %v383
        %v890 = vunpack.c.l.b16 %v384
        %v891 = vunpack.c.h.b16 %v384
        %v892 = vunpack.c.l.b16 %v385
        %v893 = vunpack.c.h.b16 %v385
        %v894 = vunpack.c.l.b16 %v386
        %v895 = vunpack.c.h.b16 %v386
        %v896 = vunpack.c.l.b16 %v387
        %v897 = vunpack.c.h.b16 %v387
        %v898 = vunpack.c.l.b16 %v388
        %v899 = vunpack.c.h.b16 %v388
        %v900 = vunpack.c.l.b16 %v389
        %v901 = vunpack.c.h.b16 %v389
        %v902 = vunpack.c.l.b16 %v390
        %v903 = vunpack.c.h.b16 %v390
        %v904 = vunpack.c.l.b16 %v391
        %v905 = vunpack.c.h.b16 %v391
        %v906 = vunpack.c.l.b16 %v392
        %v907 = vunpack.c.h.b16 %v392
        %v908 = vunpack.c.l.b16 %v393
        %v909 = vunpack.c.h.b16 %v393
        %v910 = vunpack.c.l.b16 %v394
        %v911 = vunpack.c.h.b16 %v394
        %v912 = vunpack.c.l.b16 %v395
        %v913 = vunpack.c.h.b16 %v395
        %v914 = vunpack.c.l.b16 %v396
        %v915 = vunpack.c.h.b16 %v396
        %v916 = vunpack.c.l.b16 %v397
        %v917 = vunpack.c.h.b16 %v397
        %v918 = vunpack.c.l.b16 %v398
        %v919 = vunpack.c.h.b16 %v398
        %v920 = vunpack.c.l.b16 %v399
        %v921 = vunpack.c.h.b16 %v399
        %v922 = vunpack.c.l.b16 %v400
        %v923 = vunpack.c.h.b16 %v400
        %v924 = vunpack.c.l.b16 %v401
        %v925 = vunpack.c.h.b16 %v401
        %v926 = vunpack.c.l.b16 %v402
        %v927 = vunpack.c.h.b16 %v402
        %v928 = vpack.c.b16 %v612, %v608
        %v929 = vpack.c.b16 %v613, %v609
        %v930 = vpack.c.b16 %v614, %v610
        %v931 = vpack.c.b16 %v615, %v611
        %v932 = vpack.c.b16 %v620, %v616
        %v933 = vpack.c.b16 %v621, %v617
        %v934 = vpack.c.b16 %v622, %v618
        %v935 = vpack.c.b16 %v623, %v619
        %v936 = vpack.c.b16 %v628, %v624
        %v937 = vpack.c.b16 %v629, %v625
        %v938 = vpack.c.b16 %v630, %v626
        %v939 = vpack.c.b16 %v631, %v627
        %v940 = vpack.c.b16 %v636, %v632
        %v941 = vpack.c.b16 %v637, %v633
        %v942 = vpack.c.b16 %v638, %v634
        %v943 = vpack.c.b16 %v639, %v635
        %v944 = vpack.c.b16 %v644, %v640
        %v945 = vpack.c.b16 %v645, %v641
        %v946 = vpack.c.b16 %v646, %v642
        %v947 = vpack.c.b16 %v647, %v643
        %v948 = vpack.c.b16 %v652, %v648
        %v949 = vpack.c.b16 %v653, %v649
        %v950 = vpack.c.b16 %v654, %v650
        %v951 = vpack.c.b16 %v655, %v651
        %v952 = vpack.c.b16 %v660, %v656
        %v953 = vpack.c.b16 %v661, %v657
        %v954 = vpack.c.b16 %v662, %v658
        %v955 = vpack.c.b16 %v663, %v659
        %v956 = vpack.c.b16 %v668, %v664
        %v957 = vpack.c.b16 %v669, %v665
        %v958 = vpack.c.b16 %v670, %v666
        %v959 = vpack.c.b16 %v671, %v667
        %v960 = vpack.c.b16 %v676, %v672
        %v961 = vpack.c.b16 %v677, %v673
        %v962 = vpack.c.b16 %v678, %v674
        %v963 = vpack.c.b16 %v679, %v675
        %v964 = vpack.c.b16 %v684, %v680
        %v965 = vpack.c.b16 %v685, %v681
        %v966 = vpack.c.b16 %v686, %v682
        %v967 = vpack.c.b16 %v687, %v683
        %v968 = vpack.c.b16 %v692, %v688
        %v969 = vpack.c.b16 %v693, %v689
        %v970 = vpack.c.b16 %v694, %v690
        %v971 = vpack.c.b16 %v695, %v691
        %v972 = vpack.c.b16 %v700, %v696
        %v973 = vpack.c.b16 %v701, %v697
        %v974 = vpack.c.b16 %v702, %v698
        %v975 = vpack.c.b16 %v703, %v699
        %v976 = vpack.c.b16 %v708, %v704
        %v977 = vpack.c.b16 %v709, %v705
        %v978 = vpack.c.b16 %v710, %v706
        %v979 = vpack.c.b16 %v711, %v707
        %v980 = vpack.c.b16 %v716, %v712
        %v981 = vpack.c.b16 %v717, %v713
        %v982 = vpack.c.b16 %v718, %v714
        %v983 = vpack.c.b16 %v719, %v715
        %v984 = vpack.c.b16 %v724, %v720
        %v985 = vpack.c.b16 %v725, %v721
        %v986 = vpack.c.b16 %v726, %v722
        %v987 = vpack.c.b16 %v727, %v723
        %v988 = vpack.c.b16 %v732, %v728
        %v989 = vpack.c.b16 %v733, %v729
        %v990 = vpack.c.b16 %v734, %v730
        %v991 = vpack.c.b16 %v735, %v731
        %v992 = vpack.c.b16 %v740, %v736
        %v993 = vpack.c.b16 %v741, %v737
        %v994 = vpack.c.b16 %v742, %v738
        %v995 = vpack.c.b16 %v743, %v739
        %v996 = vpack.c.b16 %v748, %v744
        %v997 = vpack.c.b16 %v749, %v745
        %v998 = vpack.c.b16 %v750, %v746
        %v999 = vpack.c.b16 %v751, %v747
        %v1000 = vpack.c.b16 %v756, %v752
        %v1001 = vpack.c.b16 %v757, %v753
        %v1002 = vpack.c.b16 %v758, %v754
        %v1003 = vpack.c.b16 %v759, %v755
        %v1004 = vpack.c.b16 %v764, %v760
        %v1005 = vpack.c.b16 %v765, %v761
        %v1006 = vpack.c.b16 %v766, %v762
        %v1007 = vpack.c.b16 %v767, %v763
        %v1008 = vpack.c.b16 %v772, %v768
        %v1009 = vpack.c.b16 %v773, %v769
        %v1010 = vpack.c.b16 %v774, %v770
        %v1011 = vpack.c.b16 %v775, %v771
        %v1012 = vpack.c.b16 %v780, %v776
        %v1013 = vpack.c.b16 %v781, %v777
        %v1014 = vpack.c.b16 %v782, %v778
        %v1015 = vpack.c.b16 %v783, %v779
        %v1016 = vpack.c.b16 %v788, %v784
        %v1017 = vpack.c.b16 %v789, %v785
        %v1018 = vpack.c.b16 %v790, %v786
        %v1019 = vpack.c.b16 %v791, %v787
        %v1020 = vpack.c.b16 %v796, %v792
        %v1021 = vpack.c.b16 %v797, %v793
        %v1022 = vpack.c.b16 %v798, %v794
        %v1023 = vpack.c.b16 %v799, %v795
        %v1024 = vpack.c.b16 %v804, %v800
        %v1025 = vpack.c.b16 %v805, %v801
        %v1026 = vpack.c.b16 %v806, %v802
        %v1027 = vpack.c.b16 %v807, %v803
        %v1028 = vpack.c.b16 %v812, %v808
        %v1029 = vpack.c.b16 %v813, %v809
        %v1030 = vpack.c.b16 %v814, %v810
        %v1031 = vpack.c.b16 %v815, %v811
        %v1032 = vpack.c.b16 %v820, %v816
        %v1033 = vpack.c.b16 %v821, %v817
        %v1034 = vpack.c.b16 %v822, %v818
        %v1035 = vpack.c.b16 %v823, %v819
        %v1036 = vpack.c.b16 %v828, %v824
        %v1037 = vpack.c.b16 %v829, %v825
        %v1038 = vpack.c.b16 %v830, %v826
        %v1039 = vpack.c.b16 %v831, %v827
        %v1040 = vpack.c.b16 %v836, %v832
        %v1041 = vpack.c.b16 %v837, %v833
        %v1042 = vpack.c.b16 %v838, %v834
        %v1043 = vpack.c.b16 %v839, %v835
        %v1044 = vpack.c.b16 %v844, %v840
        %v1045 = vpack.c.b16 %v845, %v841
        %v1046 = vpack.c.b16 %v846, %v842
        %v1047 = vpack.c.b16 %v847, %v843
        %v1048 = vpack.c.b16 %v852, %v848
        %v1049 = vpack.c.b16 %v853, %v849
        %v1050 = vpack.c.b16 %v854, %v850
        %v1051 = vpack.c.b16 %v855, %v851
        %v1052 = vpack.c.b16 %v860, %v856
        %v1053 = vpack.c.b16 %v861, %v857
        %v1054 = vpack.c.b16 %v862, %v858
        %v1055 = vpack.c.b16 %v863, %v859
        %v1056 = vpack.c.b16 %v868, %v864
        %v1057 = vpack.c.b16 %v869, %v865
        %v1058 = vpack.c.b16 %v870, %v866
        %v1059 = vpack.c.b16 %v871, %v867
        %v1060 = vpack.c.b16 %v876, %v872
        %v1061 = vpack.c.b16 %v877, %v873
        %v1062 = vpack.c.b16 %v878, %v874
        %v1063 = vpack.c.b16 %v879, %v875
        %v1064 = vpack.c.b16 %v884, %v880
        %v1065 = vpack.c.b16 %v885, %v881
        %v1066 = vpack.c.b16 %v886, %v882
        %v1067 = vpack.c.b16 %v887, %v883
        %v1068 = vpack.c.b16 %v892, %v888
        %v1069 = vpack.c.b16 %v893, %v889
        %v1070 = vpack.c.b16 %v894, %v890
        %v1071 = vpack.c.b16 %v895, %v891
        %v1072 = vpack.c.b16 %v900, %v896
        %v1073 = vpack.c.b16 %v901, %v897
        %v1074 = vpack.c.b16 %v902, %v898
        %v1075 = vpack.c.b16 %v903, %v899
        %v1076 = vpack.c.b16 %v908, %v904
        %v1077 = vpack.c.b16 %v909, %v905
        %v1078 = vpack.c.b16 %v910, %v906
        %v1079 = vpack.c.b16 %v911, %v907
        %v1080 = vpack.c.b16 %v916, %v912
        %v1081 = vpack.c.b16 %v917, %v913
        %v1082 = vpack.c.b16 %v918, %v914
        %v1083 = vpack.c.b16 %v919, %v915
        %v1084 = vpack.c.b16 %v924, %v920
        %v1085 = vpack.c.b16 %v925, %v921
        %v1086 = vpack.c.b16 %v926, %v922
        %v1087 = vpack.c.b16 %v927, %v923
        %1248 = vmatprep.subr.bf16.mxu0 %v929
        %1249 = vmatpush1.bf16.msra.mxu0 %v928
        %1250 = vmatprep.subr.bf16.mxu0 %v933
        %1251 = vmatpush1.bf16.msra.mxu0 %v932
        %1252 = vmatprep.subr.bf16.mxu0 %v937
        %1253 = vmatpush1.bf16.msra.mxu0 %v936
        %1254 = vmatprep.subr.bf16.mxu0 %v941
        %1255 = vmatpush1.bf16.msra.mxu0 %v940
        %1256 = vmatprep.subr.bf16.mxu0 %v945
        %1257 = vmatpush1.bf16.msra.mxu0 %v944
        %1258 = vmatprep.subr.bf16.mxu0 %v949
        %1259 = vmatpush1.bf16.msra.mxu0 %v948
        %1260 = vmatprep.subr.bf16.mxu0 %v953
        %1261 = vmatpush1.bf16.msra.mxu0 %v952
        %1262 = vmatprep.subr.bf16.mxu0 %v957
        %1263 = vmatpush1.bf16.msra.mxu0 %v956
        %1264 = vmatprep.subr.bf16.mxu0 %v961
        %1265 = vmatpush1.bf16.msra.mxu0 %v960
        %1266 = vmatprep.subr.bf16.mxu0 %v965
        %1267 = vmatpush1.bf16.msra.mxu0 %v964
        %1268 = vmatprep.subr.bf16.mxu0 %v969
        %1269 = vmatpush1.bf16.msra.mxu0 %v968
        %1270 = vmatprep.subr.bf16.mxu0 %v973
        %1271 = vmatpush1.bf16.msra.mxu0 %v972
        %1272 = vmatprep.subr.bf16.mxu0 %v977
        %1273 = vmatpush1.bf16.msra.mxu0 %v976
        %1274 = vmatprep.subr.bf16.mxu0 %v981
        %1275 = vmatpush1.bf16.msra.mxu0 %v980
        %1276 = vmatprep.subr.bf16.mxu0 %v985
        %1277 = vmatpush1.bf16.msra.mxu0 %v984
        %1278 = vmatprep.subr.bf16.mxu0 %v989
        %1279 = vmatpush1.bf16.msra.mxu0 %v988
        %1280 = vmatprep.mubr.bf16.mxu0 %v440
        %1281 = vmatmul.mubr.bf16.gmra.mrb[0].mxu0 %v426
        %v1282 = vpop.f32.mrb[0].mxu0
        %v1283 = vadd.f32 0.0, %v1282
        %v1284 = vpop.f32.mrb[0].mxu0
        %v1285 = vadd.f32 0.0, %v1284
        %v1286 = vpop.f32.mrb[0].mxu0
        %v1287 = vpop.f32.mrb[0].mxu0
        %1288 = vdwg.mxu0
        %1289 = vmatprep.subr.bf16.mxu0 %v993
        %1290 = vmatpush1.bf16.msra.mxu0 %v992
        %1291 = vmatprep.subr.bf16.mxu0 %v997
        %1292 = vmatpush1.bf16.msra.mxu0 %v996
        %1293 = vmatprep.subr.bf16.mxu0 %v1001
        %1294 = vmatpush1.bf16.msra.mxu0 %v1000
        %1295 = vmatprep.subr.bf16.mxu0 %v1005
        %1296 = vmatpush1.bf16.msra.mxu0 %v1004
        %1297 = vmatprep.subr.bf16.mxu0 %v1009
        %1298 = vmatpush1.bf16.msra.mxu0 %v1008
        %1299 = vmatprep.subr.bf16.mxu0 %v1013
        %1300 = vmatpush1.bf16.msra.mxu0 %v1012
        %1301 = vmatprep.subr.bf16.mxu0 %v1017
        %1302 = vmatpush1.bf16.msra.mxu0 %v1016
        %1303 = vmatprep.subr.bf16.mxu0 %v1021
        %1304 = vmatpush1.bf16.msra.mxu0 %v1020
        %1305 = vmatprep.subr.bf16.mxu0 %v1025
        %1306 = vmatpush1.bf16.msra.mxu0 %v1024
        %1307 = vmatprep.subr.bf16.mxu0 %v1029
        %1308 = vmatpush1.bf16.msra.mxu0 %v1028
        %1309 = vmatprep.subr.bf16.mxu0 %v1033
        %1310 = vmatpush1.bf16.msra.mxu0 %v1032
        %1311 = vmatprep.subr.bf16.mxu0 %v1037
        %1312 = vmatpush1.bf16.msra.mxu0 %v1036
        %1313 = vmatprep.subr.bf16.mxu0 %v1041
        %1314 = vmatpush1.bf16.msra.mxu0 %v1040
        %1315 = vmatprep.subr.bf16.mxu0 %v1045
        %1316 = vmatpush1.bf16.msra.mxu0 %v1044
        %1317 = vmatprep.subr.bf16.mxu0 %v1049
        %1318 = vmatpush1.bf16.msra.mxu0 %v1048
        %1319 = vmatprep.subr.bf16.mxu0 %v1053
        %1320 = vmatpush1.bf16.msra.mxu0 %v1052
        %1321 = vmatprep.mubr.bf16.mxu0 %v442
        %1322 = vmatmul.mubr.bf16.gmra.mrb[0].mxu0 %v441
        %v1323 = vpop.f32.mrb[0].mxu0
        %v1324 = vadd.f32 %v1283, %v1323
        %v1325 = vpop.f32.mrb[0].mxu0
        %v1326 = vadd.f32 %v1285, %v1325
        %v1327 = vpop.f32.mrb[0].mxu0
        %v1328 = vpop.f32.mrb[0].mxu0
        %1329 = vdwg.mxu0
        %1330 = vmatprep.subr.bf16.mxu0 %v1057
        %1331 = vmatpush1.bf16.msra.mxu0 %v1056
        %1332 = vmatprep.subr.bf16.mxu0 %v1061
        %1333 = vmatpush1.bf16.msra.mxu0 %v1060
        %1334 = vmatprep.subr.bf16.mxu0 %v1065
        %1335 = vmatpush1.bf16.msra.mxu0 %v1064
        %1336 = vmatprep.subr.bf16.mxu0 %v1069
        %1337 = vmatpush1.bf16.msra.mxu0 %v1068
        %1338 = vmatprep.subr.bf16.mxu0 %v1073
        %1339 = vmatpush1.bf16.msra.mxu0 %v1072
        %1340 = vmatprep.subr.bf16.mxu0 %v1077
        %1341 = vmatpush1.bf16.msra.mxu0 %v1076
        %1342 = vmatprep.subr.bf16.mxu0 %v1081
        %1343 = vmatpush1.bf16.msra.mxu0 %v1080
        %1344 = vmatprep.subr.bf16.mxu0 %v1085
        %1345 = vmatpush1.bf16.msra.mxu0 %v1084
        %1346 = vmatprep.subr.bf16.mxu0 0
        %1347 = vmatpush1.bf16.msra.mxu0 0
        %1348 = vmatprep.subr.bf16.mxu0 0
        %1349 = vmatpush1.bf16.msra.mxu0 0
        %1350 = vmatprep.subr.bf16.mxu0 0
        %1351 = vmatpush1.bf16.msra.mxu0 0
        %1352 = vmatprep.subr.bf16.mxu0 0
        %1353 = vmatpush1.bf16.msra.mxu0 0
        %1354 = vmatprep.subr.bf16.mxu0 0
        %1355 = vmatpush1.bf16.msra.mxu0 0
        %1356 = vmatprep.subr.bf16.mxu0 0
        %1357 = vmatpush1.bf16.msra.mxu0 0
        %1358 = vmatprep.subr.bf16.mxu0 0
        %1359 = vmatpush1.bf16.msra.mxu0 0
        %1360 = vmatprep.subr.bf16.mxu0 0
        %1361 = vmatpush1.bf16.msra.mxu0 0
        %1362 = vmatprep.mubr.bf16.mxu0 0
        %1363 = vmatmul.mubr.bf16.gmra.mrb[0].mxu0 %v433
        %v1364 = vpop.f32.mrb[0].mxu0
        %v1365 = vadd.f32 %v1324, %v1364
        %v1366 = vpop.f32.mrb[0].mxu0
        %v1367 = vadd.f32 %v1326, %v1366
        %v1368 = vpop.f32.mrb[0].mxu0
        %v1369 = vpop.f32.mrb[0].mxu0
        %1370 = vdwg.mxu0
        %1371 = vmatprep.subr.bf16.mxu0 %v931
        %1372 = vmatpush1.bf16.msra.mxu0 %v930
        %1373 = vmatprep.subr.bf16.mxu0 %v935
        %1374 = vmatpush1.bf16.msra.mxu0 %v934
        %1375 = vmatprep.subr.bf16.mxu0 %v939
        %1376 = vmatpush1.bf16.msra.mxu0 %v938
        %1377 = vmatprep.subr.bf16.mxu0 %v943
        %1378 = vmatpush1.bf16.msra.mxu0 %v942
        %1379 = vmatprep.subr.bf16.mxu0 %v947
        %1380 = vmatpush1.bf16.msra.mxu0 %v946
        %1381 = vmatprep.subr.bf16.mxu0 %v951
        %1382 = vmatpush1.bf16.msra.mxu0 %v950
        %1383 = vmatprep.subr.bf16.mxu0 %v955
        %1384 = vmatpush1.bf16.msra.mxu0 %v954
        %1385 = vmatprep.subr.bf16.mxu0 %v959
        %1386 = vmatpush1.bf16.msra.mxu0 %v958
        %1387 = vmatprep.subr.bf16.mxu0 %v963
        %1388 = vmatpush1.bf16.msra.mxu0 %v962
        %1389 = vmatprep.subr.bf16.mxu0 %v967
        %1390 = vmatpush1.bf16.msra.mxu0 %v966
        %1391 = vmatprep.subr.bf16.mxu0 %v971
        %1392 = vmatpush1.bf16.msra.mxu0 %v970
        %1393 = vmatprep.subr.bf16.mxu0 %v975
        %1394 = vmatpush1.bf16.msra.mxu0 %v974
        %1395 = vmatprep.subr.bf16.mxu0 %v979
        %1396 = vmatpush1.bf16.msra.mxu0 %v978
        %1397 = vmatprep.subr.bf16.mxu0 %v983
        %1398 = vmatpush1.bf16.msra.mxu0 %v982
        %1399 = vmatprep.subr.bf16.mxu0 %v987
        %1400 = vmatpush1.bf16.msra.mxu0 %v986
        %1401 = vmatprep.subr.bf16.mxu0 %v991
        %1402 = vmatpush1.bf16.msra.mxu0 %v990
        %1403 = vmatprep.mubr.bf16.mxu0 %v440
        %1404 = vmatmul.mubr.bf16.gmra.mrb[0].mxu0 %v426
        %v1405 = vpop.f32.mrb[0].mxu0
        %v1406 = vadd.f32 0.0, %v1405
        %v1407 = vpop.f32.mrb[0].mxu0
        %v1408 = vadd.f32 0.0, %v1407
        %v1409 = vpop.f32.mrb[0].mxu0
        %v1410 = vpop.f32.mrb[0].mxu0
        %1411 = vdwg.mxu0
        %1412 = vmatprep.subr.bf16.mxu0 %v995
        %1413 = vmatpush1.bf16.msra.mxu0 %v994
        %1414 = vmatprep.subr.bf16.mxu0 %v999
        %1415 = vmatpush1.bf16.msra.mxu0 %v998
        %1416 = vmatprep.subr.bf16.mxu0 %v1003
        %1417 = vmatpush1.bf16.msra.mxu0 %v1002
        %1418 = vmatprep.subr.bf16.mxu0 %v1007
        %1419 = vmatpush1.bf16.msra.mxu0 %v1006
        %1420 = vmatprep.subr.bf16.mxu0 %v1011
        %1421 = vmatpush1.bf16.msra.mxu0 %v1010
        %1422 = vmatprep.subr.bf16.mxu0 %v1015
        %1423 = vmatpush1.bf16.msra.mxu0 %v1014
        %1424 = vmatprep.subr.bf16.mxu0 %v1019
        %1425 = vmatpush1.bf16.msra.mxu0 %v1018
        %1426 = vmatprep.subr.bf16.mxu0 %v1023
        %1427 = vmatpush1.bf16.msra.mxu0 %v1022
        %1428 = vmatprep.subr.bf16.mxu0 %v1027
        %1429 = vmatpush1.bf16.msra.mxu0 %v1026
        %1430 = vmatprep.subr.bf16.mxu0 %v1031
        %1431 = vmatpush1.bf16.msra.mxu0 %v1030
        %1432 = vmatprep.subr.bf16.mxu0 %v1035
        %1433 = vmatpush1.bf16.msra.mxu0 %v1034
        %1434 = vmatprep.subr.bf16.mxu0 %v1039
        %1435 = vmatpush1.bf16.msra.mxu0 %v1038
        %1436 = vmatprep.subr.bf16.mxu0 %v1043
        %1437 = vmatpush1.bf16.msra.mxu0 %v1042
        %1438 = vmatprep.subr.bf16.mxu0 %v1047
        %1439 = vmatpush1.bf16.msra.mxu0 %v1046
        %1440 = vmatprep.subr.bf16.mxu0 %v1051
        %1441 = vmatpush1.bf16.msra.mxu0 %v1050
        %1442 = vmatprep.subr.bf16.mxu0 %v1055
        %1443 = vmatpush1.bf16.msra.mxu0 %v1054
        %1444 = vmatprep.mubr.bf16.mxu0 %v442
        %1445 = vmatmul.mubr.bf16.gmra.mrb[0].mxu0 %v441
        %v1446 = vpop.f32.mrb[0].mxu0
        %v1447 = vadd.f32 %v1406, %v1446
        %v1448 = vpop.f32.mrb[0].mxu0
        %v1449 = vadd.f32 %v1408, %v1448
        %v1450 = vpop.f32.mrb[0].mxu0
        %v1451 = vpop.f32.mrb[0].mxu0
        %1452 = vdwg.mxu0
        %1453 = vmatprep.subr.bf16.mxu0 %v1059
        %1454 = vmatpush1.bf16.msra.mxu0 %v1058
        %1455 = vmatprep.subr.bf16.mxu0 %v1063
        %1456 = vmatpush1.bf16.msra.mxu0 %v1062
        %1457 = vmatprep.subr.bf16.mxu0 %v1067
        %1458 = vmatpush1.bf16.msra.mxu0 %v1066
        %1459 = vmatprep.subr.bf16.mxu0 %v1071
        %1460 = vmatpush1.bf16.msra.mxu0 %v1070
        %1461 = vmatprep.subr.bf16.mxu0 %v1075
        %1462 = vmatpush1.bf16.msra.mxu0 %v1074
        %1463 = vmatprep.subr.bf16.mxu0 %v1079
        %1464 = vmatpush1.bf16.msra.mxu0 %v1078
        %1465 = vmatprep.subr.bf16.mxu0 %v1083
        %1466 = vmatpush1.bf16.msra.mxu0 %v1082
        %1467 = vmatprep.subr.bf16.mxu0 %v1087
        %1468 = vmatpush1.bf16.msra.mxu0 %v1086
        %1469 = vmatprep.subr.bf16.mxu0 0
        %1470 = vmatpush1.bf16.msra.mxu0 0
        %1471 = vmatprep.subr.bf16.mxu0 0
        %1472 = vmatpush1.bf16.msra.mxu0 0
        %1473 = vmatprep.subr.bf16.mxu0 0
        %1474 = vmatpush1.bf16.msra.mxu0 0
        %1475 = vmatprep.subr.bf16.mxu0 0
        %1476 = vmatpush1.bf16.msra.mxu0 0
        %1477 = vmatprep.subr.bf16.mxu0 0
        %1478 = vmatpush1.bf16.msra.mxu0 0
        %1479 = vmatprep.subr.bf16.mxu0 0
        %1480 = vmatpush1.bf16.msra.mxu0 0
        %1481 = vmatprep.subr.bf16.mxu0 0
        %1482 = vmatpush1.bf16.msra.mxu0 0
        %1483 = vmatprep.subr.bf16.mxu0 0
        %1484 = vmatpush1.bf16.msra.mxu0 0
        %1485 = vmatprep.mubr.bf16.mxu0 0
        %1486 = vmatmul.mubr.bf16.gmra.mrb[0].mxu0 %v433
        %v1487 = vpop.f32.mrb[0].mxu0
        %v1488 = vadd.f32 %v1447, %v1487
        %v1489 = vpop.f32.mrb[0].mxu0
        %v1490 = vadd.f32 %v1449, %v1489
        %v1491 = vpop.f32.mrb[0].mxu0
        %v1492 = vpop.f32.mrb[0].mxu0
        %1493 = vdwg.mxu0
        %v1498 = vcombine.low %v1365, %v1367
        %v1499 = vcombine.low %v1488, %v1490
        %v1501 = vunpack.c.l.s4 1983009808
        %v1502 = vunpack.c.0.s8 %v1501
        %v1503 = vlaneseq
        %v1504 = vshrl.u32 %v1503, 7
        %v1505 = vsub.s32 %v1502, %v1504
        %v1506 = vrot.slane %v1498, %v1505
        %v1508 = vunpack.c.l.s4 1983009808
        %v1509 = vunpack.c.0.s8 %v1508
        %v1510 = vlaneseq
        %v1511 = vshrl.u32 %v1510, 7
        %v1512 = vsub.s32 %v1509, %v1511
        %v1513 = vrot.slane %v1499, %v1512
        %v1514 = vcombine.low %v1506, %v1513
        %v1516 = vadd.f32 %v241, %v1514
        %1517 = vst [vmem:[#allocation2] sm:$0xff] %v1516
        %p1518 = scmp.eq.s32.totalorder %s17, 4
        // Predicated region
        $region45: #{dq_network_forward.7} parent=39 // pred_check
          %p1519 = pneg %p1518
        $region46: #{dq_network_forward.7} parent=39 // pred_check_branch
          %1521 = sbr.rel (%p1519) target = $region48
        $region47: #{dq_network_forward.7} parent=39 // pred_region
          %v1522 = vld [vmem:[#allocation2] sm:$0xff]
          %v1523 = vld [vmem:[%s2] sm:$0xf]
          %v1525 = vlaneseq
          %v1526 = vshrl.u32 %v1525, 7
          %v1527 = vsub.s32 0, %v1526
          %v1528 = vrot.slane %v1523, %v1527
          %v1529 = vlaneseq
          %v1530 = vshrl.u32 %v1529, 7
          %v1531 = vsub.s32 1, %v1530
          %v1532 = vrot.slane %v1523, %v1531
          %v1533 = vlaneseq
          %v1534 = vshrl.u32 %v1533, 7
          %v1535 = vsub.s32 2, %v1534
          %v1536 = vrot.slane %v1523, %v1535
          %v1537 = vlaneseq
          %v1538 = vshrl.u32 %v1537, 7
          %v1539 = vsub.s32 3, %v1538
          %v1540 = vrot.slane %v1523, %v1539
          %v1541 = vcombine.low %v1528, %v1532
          %v1542 = vcombine.low %v1536, %v1540
          %v1544 = vunpack.c.l.s4 1983009808
          %v1545 = vunpack.c.0.s8 %v1544
          %v1546 = vlaneseq
          %v1547 = vshrl.u32 %v1546, 7
          %v1548 = vsub.s32 %v1545, %v1547
          %v1549 = vrot.slane %v1541, %v1548
          %v1551 = vunpack.c.l.s4 1983009808
          %v1552 = vunpack.c.0.s8 %v1551
          %v1553 = vlaneseq
          %v1554 = vshrl.u32 %v1553, 7
          %v1555 = vsub.s32 %v1552, %v1554
          %v1556 = vrot.slane %v1542, %v1555
          %v1557 = vcombine.low %v1549, %v1556
          %v1559 = vadd.f32 %v1522, %v1557
          %v1560 = vmax.f32 %v1559, 0.0
          %v1562 = vcombine.high %v1560, %v1560
          %v1564 = vunpack.c.l.s4 1983009808
          %v1565 = vunpack.c.0.s8 %v1564
          %v1566 = vlaneseq
          %v1567 = vshrl.u32 %v1566, 7
          %v1568 = vsub.s32 %v1565, %v1567
          %v1569 = vrot.slane %v1560, %v1568
          %v1571 = vunpack.c.l.s4 1983009808
          %v1572 = vunpack.c.0.s8 %v1571
          %v1573 = vlaneseq
          %v1574 = vshrl.u32 %v1573, 7
          %v1575 = vsub.s32 %v1572, %v1574
          %v1576 = vrot.slane %v1562, %v1575
          %v1577 = vcombine.high %v1569, %v1569
          %v1578 = vcombine.high %v1576, %v1576
          %v1583 = vpack.c.bf16 %v1569, %v1569
          %v1584 = vpack.c.bf16 %v1577, %v1577
          %v1585 = vpack.c.bf16 %v1576, %v1576
          %v1586 = vpack.c.bf16 %v1578, %v1578
          %v1587 = vld [vmem:[%s3] sm:$0xf]
          %v1588 = vld [vmem:[%s3 + $0x4] sm:$0xf]
          %v1589 = vld [vmem:[%s3 + $0x8] sm:$0xf]
          %v1590 = vld [vmem:[%s3 + $0xc] sm:$0xf]
          %v1591 = vld [vmem:[%s3 + $0x10] sm:$0xf]
          %v1592 = vld [vmem:[%s3 + $0x14] sm:$0xf]
          %v1593 = vld [vmem:[%s3 + $0x18] sm:$0xf]
          %v1594 = vld [vmem:[%s3 + $0x1c] sm:$0xf]
          %v1595 = vld [vmem:[%s3 + $0x20] sm:$0xf]
          %v1596 = vld [vmem:[%s3 + $0x24] sm:$0xf]
          %v1597 = vld [vmem:[%s3 + $0x28] sm:$0xf]
          %v1598 = vld [vmem:[%s3 + $0x2c] sm:$0xf]
          %v1599 = vld [vmem:[%s3 + $0x30] sm:$0xf]
          %v1600 = vld [vmem:[%s3 + $0x34] sm:$0xf]
          %v1601 = vld [vmem:[%s3 + $0x38] sm:$0xf]
          %v1602 = vld [vmem:[%s3 + $0x3c] sm:$0xf]
          %v1603 = vld [vmem:[%s3 + $0x40] sm:$0xf]
          %v1604 = vld [vmem:[%s3 + $0x44] sm:$0xf]
          %v1605 = vld [vmem:[%s3 + $0x48] sm:$0xf]
          %v1606 = vld [vmem:[%s3 + $0x4c] sm:$0xf]
          %v1607 = vld [vmem:[%s3 + $0x50] sm:$0xf]
          %v1608 = vld [vmem:[%s3 + $0x54] sm:$0xf]
          %v1609 = vld [vmem:[%s3 + $0x58] sm:$0xf]
          %v1610 = vld [vmem:[%s3 + $0x5c] sm:$0xf]
          %v1611 = vld [vmem:[%s3 + $0x60] sm:$0xf]
          %v1612 = vld [vmem:[%s3 + $0x64] sm:$0xf]
          %v1613 = vld [vmem:[%s3 + $0x68] sm:$0xf]
          %v1614 = vld [vmem:[%s3 + $0x6c] sm:$0xf]
          %v1615 = vld [vmem:[%s3 + $0x70] sm:$0xf]
          %v1616 = vld [vmem:[%s3 + $0x74] sm:$0xf]
          %v1617 = vld [vmem:[%s3 + $0x78] sm:$0xf]
          %v1618 = vld [vmem:[%s3 + $0x7c] sm:$0xf]
          %v1619 = vld [vmem:[%s3 + $0x80] sm:$0xf]
          %v1620 = vld [vmem:[%s3 + $0x84] sm:$0xf]
          %v1621 = vld [vmem:[%s3 + $0x88] sm:$0xf]
          %v1622 = vld [vmem:[%s3 + $0x8c] sm:$0xf]
          %v1623 = vld [vmem:[%s3 + $0x90] sm:$0xf]
          %v1624 = vld [vmem:[%s3 + $0x94] sm:$0xf]
          %v1625 = vld [vmem:[%s3 + $0x98] sm:$0xf]
          %v1626 = vld [vmem:[%s3 + $0x9c] sm:$0xf]
          %v1627 = vld [vmem:[%s3 + $0xa0] sm:$0xf]
          %v1628 = vld [vmem:[%s3 + $0xa4] sm:$0xf]
          %v1629 = vld [vmem:[%s3 + $0xa8] sm:$0xf]
          %v1630 = vld [vmem:[%s3 + $0xac] sm:$0xf]
          %v1631 = vld [vmem:[%s3 + $0xb0] sm:$0xf]
          %v1632 = vld [vmem:[%s3 + $0xb4] sm:$0xf]
          %v1633 = vld [vmem:[%s3 + $0xb8] sm:$0xf]
          %v1634 = vld [vmem:[%s3 + $0xbc] sm:$0xf]
          %v1635 = vld [vmem:[%s3 + $0xc0] sm:$0xf]
          %v1636 = vld [vmem:[%s3 + $0xc4] sm:$0xf]
          %v1637 = vld [vmem:[%s3 + $0xc8] sm:$0xf]
          %v1638 = vld [vmem:[%s3 + $0xcc] sm:$0xf]
          %v1639 = vld [vmem:[%s3 + $0xd0] sm:$0xf]
          %v1640 = vld [vmem:[%s3 + $0xd4] sm:$0xf]
          %v1641 = vld [vmem:[%s3 + $0xd8] sm:$0xf]
          %v1642 = vld [vmem:[%s3 + $0xdc] sm:$0xf]
          %v1643 = vld [vmem:[%s3 + $0xe0] sm:$0xf]
          %v1644 = vld [vmem:[%s3 + $0xe4] sm:$0xf]
          %v1645 = vld [vmem:[%s3 + $0xe8] sm:$0xf]
          %v1646 = vld [vmem:[%s3 + $0xec] sm:$0xf]
          %v1647 = vld [vmem:[%s3 + $0xf0] sm:$0xf]
          %v1648 = vld [vmem:[%s3 + $0xf4] sm:$0xf]
          %v1649 = vld [vmem:[%s3 + $0xf8] sm:$0xf]
          %v1650 = vld [vmem:[%s3 + $0xfc] sm:$0xf]
          %v1651 = vld [vmem:[%s4] sm:$0x1]
          %v1653 = vlaneseq
          %v1654 = vshrl.u32 %v1653, 7
          %v1655 = vsub.s32 0, %v1654
          %v1656 = vrot.slane %v1651, %v1655
          %v1722 = vunpack.c.l.b16 %v1587
          %v1723 = vunpack.c.l.b16 %v1588
          %v1724 = vunpack.c.l.b16 %v1589
          %v1725 = vunpack.c.l.b16 %v1590
          %v1726 = vunpack.c.l.b16 %v1591
          %v1727 = vunpack.c.l.b16 %v1592
          %v1728 = vunpack.c.l.b16 %v1593
          %v1729 = vunpack.c.l.b16 %v1594
          %v1730 = vunpack.c.l.b16 %v1595
          %v1731 = vunpack.c.l.b16 %v1596
          %v1732 = vunpack.c.l.b16 %v1597
          %v1733 = vunpack.c.l.b16 %v1598
          %v1734 = vunpack.c.l.b16 %v1599
          %v1735 = vunpack.c.l.b16 %v1600
          %v1736 = vunpack.c.l.b16 %v1601
          %v1737 = vunpack.c.l.b16 %v1602
          %v1738 = vunpack.c.l.b16 %v1603
          %v1739 = vunpack.c.l.b16 %v1604
          %v1740 = vunpack.c.l.b16 %v1605
          %v1741 = vunpack.c.l.b16 %v1606
          %v1742 = vunpack.c.l.b16 %v1607
          %v1743 = vunpack.c.l.b16 %v1608
          %v1744 = vunpack.c.l.b16 %v1609
          %v1745 = vunpack.c.l.b16 %v1610
          %v1746 = vunpack.c.l.b16 %v1611
          %v1747 = vunpack.c.l.b16 %v1612
          %v1748 = vunpack.c.l.b16 %v1613
          %v1749 = vunpack.c.l.b16 %v1614
          %v1750 = vunpack.c.l.b16 %v1615
          %v1751 = vunpack.c.l.b16 %v1616
          %v1752 = vunpack.c.l.b16 %v1617
          %v1753 = vunpack.c.l.b16 %v1618
          %v1754 = vunpack.c.l.b16 %v1619
          %v1755 = vunpack.c.l.b16 %v1620
          %v1756 = vunpack.c.l.b16 %v1621
          %v1757 = vunpack.c.l.b16 %v1622
          %v1758 = vunpack.c.l.b16 %v1623
          %v1759 = vunpack.c.l.b16 %v1624
          %v1760 = vunpack.c.l.b16 %v1625
          %v1761 = vunpack.c.l.b16 %v1626
          %v1762 = vunpack.c.l.b16 %v1627
          %v1763 = vunpack.c.l.b16 %v1628
          %v1764 = vunpack.c.l.b16 %v1629
          %v1765 = vunpack.c.l.b16 %v1630
          %v1766 = vunpack.c.l.b16 %v1631
          %v1767 = vunpack.c.l.b16 %v1632
          %v1768 = vunpack.c.l.b16 %v1633
          %v1769 = vunpack.c.l.b16 %v1634
          %v1770 = vunpack.c.l.b16 %v1635
          %v1771 = vunpack.c.l.b16 %v1636
          %v1772 = vunpack.c.l.b16 %v1637
          %v1773 = vunpack.c.l.b16 %v1638
          %v1774 = vunpack.c.l.b16 %v1639
          %v1775 = vunpack.c.l.b16 %v1640
          %v1776 = vunpack.c.l.b16 %v1641
          %v1777 = vunpack.c.l.b16 %v1642
          %v1778 = vunpack.c.l.b16 %v1643
          %v1779 = vunpack.c.l.b16 %v1644
          %v1780 = vunpack.c.l.b16 %v1645
          %v1781 = vunpack.c.l.b16 %v1646
          %v1782 = vunpack.c.l.b16 %v1647
          %v1783 = vunpack.c.l.b16 %v1648
          %v1784 = vunpack.c.l.b16 %v1649
          %v1785 = vunpack.c.l.b16 %v1650
          %v1786 = vpack.c.b16 %v1723, %v1722
          %v1787 = vpack.c.b16 %v1725, %v1724
          %v1788 = vpack.c.b16 %v1727, %v1726
          %v1789 = vpack.c.b16 %v1729, %v1728
          %v1790 = vpack.c.b16 %v1731, %v1730
          %v1791 = vpack.c.b16 %v1733, %v1732
          %v1792 = vpack.c.b16 %v1735, %v1734
          %v1793 = vpack.c.b16 %v1737, %v1736
          %v1794 = vpack.c.b16 %v1739, %v1738
          %v1795 = vpack.c.b16 %v1741, %v1740
          %v1796 = vpack.c.b16 %v1743, %v1742
          %v1797 = vpack.c.b16 %v1745, %v1744
          %v1798 = vpack.c.b16 %v1747, %v1746
          %v1799 = vpack.c.b16 %v1749, %v1748
          %v1800 = vpack.c.b16 %v1751, %v1750
          %v1801 = vpack.c.b16 %v1753, %v1752
          %v1802 = vpack.c.b16 %v1755, %v1754
          %v1803 = vpack.c.b16 %v1757, %v1756
          %v1804 = vpack.c.b16 %v1759, %v1758
          %v1805 = vpack.c.b16 %v1761, %v1760
          %v1806 = vpack.c.b16 %v1763, %v1762
          %v1807 = vpack.c.b16 %v1765, %v1764
          %v1808 = vpack.c.b16 %v1767, %v1766
          %v1809 = vpack.c.b16 %v1769, %v1768
          %v1810 = vpack.c.b16 %v1771, %v1770
          %v1811 = vpack.c.b16 %v1773, %v1772
          %v1812 = vpack.c.b16 %v1775, %v1774
          %v1813 = vpack.c.b16 %v1777, %v1776
          %v1814 = vpack.c.b16 %v1779, %v1778
          %v1815 = vpack.c.b16 %v1781, %v1780
          %v1816 = vpack.c.b16 %v1783, %v1782
          %v1817 = vpack.c.b16 %v1785, %v1784
          %1850 = vmatprep.subr.bf16.mxu0 0
          %1851 = vmatpush1.bf16.msra.mxu0 %v1786
          %1852 = vmatprep.subr.bf16.mxu0 0
          %1853 = vmatpush1.bf16.msra.mxu0 %v1787
          %1854 = vmatprep.subr.bf16.mxu0 0
          %1855 = vmatpush1.bf16.msra.mxu0 %v1788
          %1856 = vmatprep.subr.bf16.mxu0 0
          %1857 = vmatpush1.bf16.msra.mxu0 %v1789
          %1858 = vmatprep.subr.bf16.mxu0 0
          %1859 = vmatpush1.bf16.msra.mxu0 %v1790
          %1860 = vmatprep.subr.bf16.mxu0 0
          %1861 = vmatpush1.bf16.msra.mxu0 %v1791
          %1862 = vmatprep.subr.bf16.mxu0 0
          %1863 = vmatpush1.bf16.msra.mxu0 %v1792
          %1864 = vmatprep.subr.bf16.mxu0 0
          %1865 = vmatpush1.bf16.msra.mxu0 %v1793
          %1866 = vmatprep.subr.bf16.mxu0 0
          %1867 = vmatpush1.bf16.msra.mxu0 %v1794
          %1868 = vmatprep.subr.bf16.mxu0 0
          %1869 = vmatpush1.bf16.msra.mxu0 %v1795
          %1870 = vmatprep.subr.bf16.mxu0 0
          %1871 = vmatpush1.bf16.msra.mxu0 %v1796
          %1872 = vmatprep.subr.bf16.mxu0 0
          %1873 = vmatpush1.bf16.msra.mxu0 %v1797
          %1874 = vmatprep.subr.bf16.mxu0 0
          %1875 = vmatpush1.bf16.msra.mxu0 %v1798
          %1876 = vmatprep.subr.bf16.mxu0 0
          %1877 = vmatpush1.bf16.msra.mxu0 %v1799
          %1878 = vmatprep.subr.bf16.mxu0 0
          %1879 = vmatpush1.bf16.msra.mxu0 %v1800
          %1880 = vmatprep.subr.bf16.mxu0 0
          %1881 = vmatpush1.bf16.msra.mxu0 %v1801
          %1882 = vmatprep.mubr.bf16.mxu0 %v1584
          %1883 = vmatmul.mubr.bf16.gmra.mrb[0].mxu0 %v1583
          %v1884 = vpop.f32.mrb[0].mxu0
          %v1885 = vadd.f32 %v1656, %v1884
          %v1886 = vpop.f32.mrb[0].mxu0
          %v1887 = vpop.f32.mrb[0].mxu0
          %v1888 = vpop.f32.mrb[0].mxu0
          %1889 = vdwg.mxu0
          %1890 = vmatprep.subr.bf16.mxu0 0
          %1891 = vmatpush1.bf16.msra.mxu0 %v1802
          %1892 = vmatprep.subr.bf16.mxu0 0
          %1893 = vmatpush1.bf16.msra.mxu0 %v1803
          %1894 = vmatprep.subr.bf16.mxu0 0
          %1895 = vmatpush1.bf16.msra.mxu0 %v1804
          %1896 = vmatprep.subr.bf16.mxu0 0
          %1897 = vmatpush1.bf16.msra.mxu0 %v1805
          %1898 = vmatprep.subr.bf16.mxu0 0
          %1899 = vmatpush1.bf16.msra.mxu0 %v1806
          %1900 = vmatprep.subr.bf16.mxu0 0
          %1901 = vmatpush1.bf16.msra.mxu0 %v1807
          %1902 = vmatprep.subr.bf16.mxu0 0
          %1903 = vmatpush1.bf16.msra.mxu0 %v1808
          %1904 = vmatprep.subr.bf16.mxu0 0
          %1905 = vmatpush1.bf16.msra.mxu0 %v1809
          %1906 = vmatprep.subr.bf16.mxu0 0
          %1907 = vmatpush1.bf16.msra.mxu0 %v1810
          %1908 = vmatprep.subr.bf16.mxu0 0
          %1909 = vmatpush1.bf16.msra.mxu0 %v1811
          %1910 = vmatprep.subr.bf16.mxu0 0
          %1911 = vmatpush1.bf16.msra.mxu0 %v1812
          %1912 = vmatprep.subr.bf16.mxu0 0
          %1913 = vmatpush1.bf16.msra.mxu0 %v1813
          %1914 = vmatprep.subr.bf16.mxu0 0
          %1915 = vmatpush1.bf16.msra.mxu0 %v1814
          %1916 = vmatprep.subr.bf16.mxu0 0
          %1917 = vmatpush1.bf16.msra.mxu0 %v1815
          %1918 = vmatprep.subr.bf16.mxu0 0
          %1919 = vmatpush1.bf16.msra.mxu0 %v1816
          %1920 = vmatprep.subr.bf16.mxu0 0
          %1921 = vmatpush1.bf16.msra.mxu0 %v1817
          %1922 = vmatprep.mubr.bf16.mxu0 %v1586
          %1923 = vmatmul.mubr.bf16.gmra.mrb[0].mxu0 %v1585
          %v1924 = vpop.f32.mrb[0].mxu0
          %v1925 = vadd.f32 %v1885, %v1924
          %v1926 = vpop.f32.mrb[0].mxu0
          %v1927 = vpop.f32.mrb[0].mxu0
          %v1928 = vpop.f32.mrb[0].mxu0
          %1929 = vdwg.mxu0
          %1930 = vst [vmem:[#allocation3] sm:$0x3] %v1925
        $region48: #{dq_network_forward.7} parent=39 // pred_fallthru
          _
        // Predicated region
        $region49: #{dq_network_forward.7} parent=39 // pred_check
          %p1931 = pneg %p145
        $region50: #{dq_network_forward.7} parent=39 // pred_check_branch
          %1933 = sbr.rel (%p1931) target = $region52
        $region51: #{dq_network_forward.7} parent=39 // pred_region
          %s1935 = ssub.s32 32, 32
          %1936 = vsyncadd [#allocation4], %s1935
          %s1938 = sshll.u32 [#allocation3], 4
          %s1939 = int_to_ptr.vmem [resolvable:$true] %s1938
          %1941 = dma.vmem_to_hbm [thread:$0]  %s1939, 32, %s5, [#allocation4]
        $region52: #{dq_network_forward.7} parent=39 // pred_fallthru
          _
        // Predicated region
        $region53: #{dq_network_forward.7} parent=39 // pred_check
          %p1942 = pneg %p145
        $region54: #{dq_network_forward.7} parent=39 // pred_check_branch
          %1944 = sbr.rel (%p1942) target = $region56
        $region55: #{dq_network_forward.7} parent=39 // pred_region
          %1945 = dma.done [#allocation4], 32
        $region56: #{dq_network_forward.7} parent=39 // pred_fallthru
          _
      $region40: #{dq_network_forward.7} parent=5 // pred_fallthru
        _
      %p1946 = scmp.le.s32.totalorder 2, %s12
      // Predicated region
      $region57: #{dq_network_forward.7} parent=5 // pred_check
        %p1947 = pneg %p1946
      $region58: #{dq_network_forward.7} parent=5 // pred_check_branch
        %1949 = sbr.rel (%p1947) target = $region60
      $region59: #{dq_network_forward.7} parent=5 // pred_region
        %s1950 = ssub.s32 %s12, 2
      $region60: #{dq_network_forward.7} parent=5 // pred_fallthru
        _
    $region6: #{dq_network_forward.7} parent=1 // loop_footer
      %s16 = sadd.s32 1, %s12
    $region7: #{dq_network_forward.7} parent=1 // loop_footer_branch
      %11 = sbr.rel target = $region3
    $region8: #{dq_network_forward.7} parent=1 // loop_exit
      _
    %1951 = vsyncpa [#allocation4], 1
    %s1952 = scalar_lea.sflag [#allocation4], 1
    %1953 = vsyncpa %s1952, 1

</llo_original>
